<compile_context>
chip_gen: v6e
topology: v6e:2x2x1
jax: 0.10.0
libtpu: 0.0.40
codegen_flags: <defaults>
</compile_context>

<pallas_src>
import functools
import math

import jax
import jax.numpy as jnp
from jax.experimental import pallas as pl
from jax.experimental.pallas import tpu as pltpu


# ----------------------------------------------------------------------------
# Fused encoder kernel (one grid step == one batch element)
# ----------------------------------------------------------------------------
def _layernorm(z, g, b):
    # f32 LayerNorm over the hidden (lane) dim, eps matches DistilBERT.
    mu = jnp.mean(z, axis=-1, keepdims=True)
    d = z - mu
    var = jnp.mean(d * d, axis=-1, keepdims=True)
    return d * jax.lax.rsqrt(var + 1e-12) * g + b


def _encoder_kernel(
    x_ref,        # (1, S, H)  f32  word+pos embeddings for this batch element
    mask_ref,     # (1, 1, S)  f32  additive key mask (0 / -1e9)
    emb_g_ref,    # (1, H)     f32
    emb_b_ref,    # (1, H)     f32
    wq_ref,       # (L*nh, H, dh)  bf16
    bq_ref,       # (L*nh, 1, dh)  f32
    wk_ref,       # (L*nh, H, dh)  bf16
    bk_ref,       # (L*nh, 1, dh)  f32
    wv_ref,       # (L*nh, H, dh)  bf16
    bv_ref,       # (L*nh, 1, dh)  f32
    wo_ref,       # (L*nh, dh, H)  bf16   (per-head rows of Wo)
    bo_ref,       # (L, 1, H)      f32
    ln1_g_ref,    # (L, 1, H)      f32
    ln1_b_ref,    # (L, 1, H)      f32
    w1_ref,       # (L, H, F)      bf16
    b1_ref,       # (L, 1, F)      f32
    w2_ref,       # (L, F, H)      bf16
    b2_ref,       # (L, 1, H)      f32
    ln2_g_ref,    # (L, 1, H)      f32
    ln2_b_ref,    # (L, 1, H)      f32
    wc_ref,       # (1, H)         f32   (classifier weight, transposed)
    bc_ref,       # (1, 1)         f32
    out_ref,      # (1, 1, 1)      f32   logit for this batch element
    *,
    n_layers,
    n_heads,
    d_head,
):
    bf16 = jnp.bfloat16
    scale = 1.0 / math.sqrt(d_head)

    # --- embedding LayerNorm ---
    x = _layernorm(x_ref[0], emb_g_ref[...], emb_b_ref[...])      # (S, H) f32
    mask = mask_ref[0]                                            # (1, S) f32

    for l in range(n_layers):
        # ---------------- multi-head self-attention ----------------
        xb = x.astype(bf16)
        attn = jnp.zeros_like(x)                                  # (S, H) f32
        for h in range(n_heads):
            i = l * n_heads + h
            q = jnp.dot(xb, wq_ref[i], preferred_element_type=jnp.float32) + bq_ref[i]
            k = jnp.dot(xb, wk_ref[i], preferred_element_type=jnp.float32) + bk_ref[i]
            v = jnp.dot(xb, wv_ref[i], preferred_element_type=jnp.float32) + bv_ref[i]
            # scores: contract q dim1 with k dim1 (q @ k^T without a transpose op)
            s = jax.lax.dot_general(
                q.astype(bf16), k.astype(bf16),
                (((1,), (1,)), ((), ())),
                preferred_element_type=jnp.float32,
            ) * scale + mask                                      # (S, S) f32
            s = s - jnp.max(s, axis=-1, keepdims=True)
            p = jnp.exp(s)
            p = p * pl.reciprocal(jnp.sum(p, axis=-1, keepdims=True), approx=True)
            ctx = jnp.dot(p.astype(bf16), v.astype(bf16),
                          preferred_element_type=jnp.float32)     # (S, dh)
            # per-head slice of the output projection; summing over heads
            # reconstructs ctx_full @ Wo with no lane concat/transpose.
            attn = attn + jnp.dot(ctx.astype(bf16), wo_ref[i],
                                  preferred_element_type=jnp.float32)
        attn = attn + bo_ref[l]
        x = _layernorm(x + attn, ln1_g_ref[l], ln1_b_ref[l])

        # ---------------- feed-forward ----------------
        xb = x.astype(bf16)
        hid = jnp.dot(xb, w1_ref[l], preferred_element_type=jnp.float32) + b1_ref[l]
        # tanh-approx GELU (f32 elementwise)
        # TODO(synk): HF DistilBERT uses exact erf GELU; tanh approximation used here.
        c = 0.7978845608028654
        hid = 0.5 * hid * (1.0 + jnp.tanh(c * (hid + 0.044715 * hid * hid * hid)))
        ffn = jnp.dot(hid.astype(bf16), w2_ref[l],
                      preferred_element_type=jnp.float32) + b2_ref[l]
        x = _layernorm(x + ffn, ln2_g_ref[l], ln2_b_ref[l])

    # ---------------- classifier head on the CLS token ----------------
    cls = x[0:1, :]                                               # (1, H)
    out_ref[0] = jnp.sum(cls * wc_ref[...], axis=-1, keepdims=True) + bc_ref[...]


# ----------------------------------------------------------------------------
# Forward pass (mirrors SentimentClassifier.forward) — ONE pallas_call
# ----------------------------------------------------------------------------
def sentiment_classifier_forward(params, input_ids, attention_mask):
    B, S = input_ids.shape
    H = params["word_emb"].shape[1]
    nh = params["n_heads"]
    L = params["n_layers"]
    dh = H // nh

    # Embedding gather is glue (plain JAX); everything else runs in the kernel.
    emb = params["word_emb"][input_ids] + params["pos_emb"][:S][None, :, :]   # (B,S,H) f32
    mask_add = ((1.0 - attention_mask.astype(jnp.float32)) * -1e9)[:, None, :]  # (B,1,S)

    weight_keys = (
        "emb_ln_g", "emb_ln_b",
        "wq", "bq", "wk", "bk", "wv", "bv",
        "wo", "bo", "ln1_g", "ln1_b",
        "w1", "b1", "w2", "b2", "ln2_g", "ln2_b",
        "wc", "bc",
    )
    weight_args = [params[k] for k in weight_keys]

    def rep(a):  # full-array block, resident across the batch grid axis
        return pl.BlockSpec(a.shape, lambda b, _nd=a.ndim: (0,) * _nd)

    kernel = functools.partial(
        _encoder_kernel, n_layers=L, n_heads=nh, d_head=dh
    )

    logits = pl.pallas_call(
        kernel,
        out_shape=jax.ShapeDtypeStruct((B, 1, 1), jnp.float32),
        grid=(B,),
        in_specs=[
            pl.BlockSpec((1, S, H), lambda b: (b, 0, 0)),   # embeddings
            pl.BlockSpec((1, 1, S), lambda b: (b, 0, 0)),   # additive mask
        ] + [rep(a) for a in weight_args],
        out_specs=pl.BlockSpec((1, 1, 1), lambda b: (b, 0, 0)),
        compiler_params=pltpu.CompilerParams(
            dimension_semantics=("parallel",)               # v7x: 2 TCs split batch
        ),
    )(emb, mask_add, *weight_args)

    return logits[:, 0, 0]                                   # (B,)


# ----------------------------------------------------------------------------
# Parameter construction (deterministic, synthetic weights)
# ----------------------------------------------------------------------------
def init_params(key, *, vocab, max_pos, hidden, n_heads, n_layers, ffn):
    dh = hidden // n_heads

    def normal(k, shape):
        return 0.02 * jax.random.normal(k, shape, dtype=jnp.float32)

    keys = jax.random.split(key, 2 + 6 * n_layers + 1)
    ki = iter(keys)

    word_emb = normal(next(ki), (vocab, hidden))
    pos_emb = normal(next(ki), (max_pos, hidden))

    wq, wk, wv, wo, w1, w2 = [], [], [], [], [], []
    for _ in range(n_layers):
        Wq = normal(next(ki), (hidden, hidden))
        Wk = normal(next(ki), (hidden, hidden))
        Wv = normal(next(ki), (hidden, hidden))
        Wo = normal(next(ki), (hidden, hidden))
        W1 = normal(next(ki), (hidden, ffn))
        W2 = normal(next(ki), (ffn, hidden))
        # per-head layouts: Q/K/V columns -> (nh, H, dh); Wo rows -> (nh, dh, H)
        wq.append(Wq.reshape(hidden, n_heads, dh).transpose(1, 0, 2))
        wk.append(Wk.reshape(hidden, n_heads, dh).transpose(1, 0, 2))
        wv.append(Wv.reshape(hidden, n_heads, dh).transpose(1, 0, 2))
        wo.append(Wo.reshape(n_heads, dh, hidden))
        w1.append(W1)
        w2.append(W2)
    Wc = normal(next(ki), (hidden, 1))

    L, nh, H, F = n_layers, n_heads, hidden, ffn
    bf16 = jnp.bfloat16
    params = {
        "word_emb": word_emb,
        "pos_emb": pos_emb,
        "emb_ln_g": jnp.ones((1, H), jnp.float32),
        "emb_ln_b": jnp.zeros((1, H), jnp.float32),
        "wq": jnp.stack(wq).reshape(L * nh, H, dh).astype(bf16),
        "bq": jnp.zeros((L * nh, 1, dh), jnp.float32),
        "wk": jnp.stack(wk).reshape(L * nh, H, dh).astype(bf16),
        "bk": jnp.zeros((L * nh, 1, dh), jnp.float32),
        "wv": jnp.stack(wv).reshape(L * nh, H, dh).astype(bf16),
        "bv": jnp.zeros((L * nh, 1, dh), jnp.float32),
        "wo": jnp.stack(wo).reshape(L * nh, dh, H).astype(bf16),
        "bo": jnp.zeros((L, 1, H), jnp.float32),
        "ln1_g": jnp.ones((L, 1, H), jnp.float32),
        "ln1_b": jnp.zeros((L, 1, H), jnp.float32),
        "w1": jnp.stack(w1).astype(bf16),            # (L, H, F)
        "b1": jnp.zeros((L, 1, F), jnp.float32),
        "w2": jnp.stack(w2).astype(bf16),            # (L, F, H)
        "b2": jnp.zeros((L, 1, H), jnp.float32),
        "ln2_g": jnp.ones((L, 1, H), jnp.float32),
        "ln2_b": jnp.zeros((L, 1, H), jnp.float32),
        "wc": Wc.T,                                  # (1, H) f32
        "bc": jnp.zeros((1, 1), jnp.float32),
        "n_heads": n_heads,
        "n_layers": n_layers,
    }
    return params


# ----------------------------------------------------------------------------
if __name__ == "__main__":
    B, S = 2, 8
    VOCAB, MAX_POS = 50, 16
    HIDDEN, N_HEADS, N_LAYERS, FFN = 32, 4, 2, 64

    key = jax.random.PRNGKey(0)
    k_params, k_ids = jax.random.split(key)

    params = init_params(
        k_params,
        vocab=VOCAB,
        max_pos=MAX_POS,
        hidden=HIDDEN,
        n_heads=N_HEADS,
        n_layers=N_LAYERS,
        ffn=FFN,
    )

    input_ids = jax.random.randint(k_ids, (B, S), 0, VOCAB, dtype=jnp.int32)
    attention_mask = jnp.array(
        [[1, 1, 1, 1, 1, 1, 0, 0],
         [1, 1, 1, 1, 1, 1, 1, 1]], dtype=jnp.int32
    )

    out = sentiment_classifier_forward(params, input_ids, attention_mask)
    jax.block_until_ready(out)
    assert out.shape == (B,)
    print("KERNEL_OK")
</pallas_src>

<mosaic_0001>
module attributes {stable_mosaic.version = 11 : i64} {
  func.func @_encoder_kernel(%arg0: i32, %arg1: memref<1x8x32xf32, #tpu.memory_space<vmem>>, %arg2: memref<1x1x8xf32, #tpu.memory_space<vmem>>, %arg3: memref<1x32xf32, #tpu.memory_space<vmem>>, %arg4: memref<1x32xf32, #tpu.memory_space<vmem>>, %arg5: memref<8x32x8xbf16, #tpu.memory_space<vmem>>, %arg6: memref<8x1x8xf32, #tpu.memory_space<vmem>>, %arg7: memref<8x32x8xbf16, #tpu.memory_space<vmem>>, %arg8: memref<8x1x8xf32, #tpu.memory_space<vmem>>, %arg9: memref<8x32x8xbf16, #tpu.memory_space<vmem>>, %arg10: memref<8x1x8xf32, #tpu.memory_space<vmem>>, %arg11: memref<8x8x32xbf16, #tpu.memory_space<vmem>>, %arg12: memref<2x1x32xf32, #tpu.memory_space<vmem>>, %arg13: memref<2x1x32xf32, #tpu.memory_space<vmem>>, %arg14: memref<2x1x32xf32, #tpu.memory_space<vmem>>, %arg15: memref<2x32x64xbf16, #tpu.memory_space<vmem>>, %arg16: memref<2x1x64xf32, #tpu.memory_space<vmem>>, %arg17: memref<2x64x32xbf16, #tpu.memory_space<vmem>>, %arg18: memref<2x1x32xf32, #tpu.memory_space<vmem>>, %arg19: memref<2x1x32xf32, #tpu.memory_space<vmem>>, %arg20: memref<2x1x32xf32, #tpu.memory_space<vmem>>, %arg21: memref<1x32xf32, #tpu.memory_space<vmem>>, %arg22: memref<1x1xf32, #tpu.memory_space<vmem>>, %arg23: memref<1x1x1xf32, #tpu.memory_space<vmem>>) attributes {dimension_semantics = [#tpu.dimension_semantics<parallel>], iteration_bounds = array<i64: 2>, scalar_prefetch = 0 : i64, scratch_operands = 0 : i64, tpu.core_type = #tpu.core_type<tc>, window_params = [{transform_indices = @transform_0, window_bounds = array<i64: 1, 8, 32>}, {transform_indices = @transform_1, window_bounds = array<i64: 1, 1, 8>}, {pipeline_mode = #tpu.pipeline_mode<synchronous>, transform_indices = @transform_2, window_bounds = array<i64: 1, 32>}, {pipeline_mode = #tpu.pipeline_mode<synchronous>, transform_indices = @transform_3, window_bounds = array<i64: 1, 32>}, {pipeline_mode = #tpu.pipeline_mode<synchronous>, transform_indices = @transform_4, window_bounds = array<i64: 8, 32, 8>}, {pipeline_mode = #tpu.pipeline_mode<synchronous>, transform_indices = @transform_5, window_bounds = array<i64: 8, 1, 8>}, {pipeline_mode = #tpu.pipeline_mode<synchronous>, transform_indices = @transform_6, window_bounds = array<i64: 8, 32, 8>}, {pipeline_mode = #tpu.pipeline_mode<synchronous>, transform_indices = @transform_7, window_bounds = array<i64: 8, 1, 8>}, {pipeline_mode = #tpu.pipeline_mode<synchronous>, transform_indices = @transform_8, window_bounds = array<i64: 8, 32, 8>}, {pipeline_mode = #tpu.pipeline_mode<synchronous>, transform_indices = @transform_9, window_bounds = array<i64: 8, 1, 8>}, {pipeline_mode = #tpu.pipeline_mode<synchronous>, transform_indices = @transform_10, window_bounds = array<i64: 8, 8, 32>}, {pipeline_mode = #tpu.pipeline_mode<synchronous>, transform_indices = @transform_11, window_bounds = array<i64: 2, 1, 32>}, {pipeline_mode = #tpu.pipeline_mode<synchronous>, transform_indices = @transform_12, window_bounds = array<i64: 2, 1, 32>}, {pipeline_mode = #tpu.pipeline_mode<synchronous>, transform_indices = @transform_13, window_bounds = array<i64: 2, 1, 32>}, {pipeline_mode = #tpu.pipeline_mode<synchronous>, transform_indices = @transform_14, window_bounds = array<i64: 2, 32, 64>}, {pipeline_mode = #tpu.pipeline_mode<synchronous>, transform_indices = @transform_15, window_bounds = array<i64: 2, 1, 64>}, {pipeline_mode = #tpu.pipeline_mode<synchronous>, transform_indices = @transform_16, window_bounds = array<i64: 2, 64, 32>}, {pipeline_mode = #tpu.pipeline_mode<synchronous>, transform_indices = @transform_17, window_bounds = array<i64: 2, 1, 32>}, {pipeline_mode = #tpu.pipeline_mode<synchronous>, transform_indices = @transform_18, window_bounds = array<i64: 2, 1, 32>}, {pipeline_mode = #tpu.pipeline_mode<synchronous>, transform_indices = @transform_19, window_bounds = array<i64: 2, 1, 32>}, {pipeline_mode = #tpu.pipeline_mode<synchronous>, transform_indices = @transform_20, window_bounds = array<i64: 1, 32>}, {pipeline_mode = #tpu.pipeline_mode<synchronous>, transform_indices = @transform_21, window_bounds = array<i64: 1, 1>}, {transform_indices = @transform_22, window_bounds = array<i64: 1, 1, 1>}]} {
    %c0 = arith.constant 0 : index
    %c0_0 = arith.constant 0 : index
    %c0_1 = arith.constant 0 : index
    %0 = vector.load %arg1[%c0, %c0_0, %c0_1] : memref<1x8x32xf32, #tpu.memory_space<vmem>>, vector<1x8x32xf32>
    %1 = vector.shape_cast %0 : vector<1x8x32xf32> to vector<8x32xf32>
    %c0_2 = arith.constant 0 : index
    %c0_3 = arith.constant 0 : index
    %2 = vector.load %arg3[%c0_2, %c0_3] : memref<1x32xf32, #tpu.memory_space<vmem>>, vector<1x32xf32>
    %c0_4 = arith.constant 0 : index
    %c0_5 = arith.constant 0 : index
    %3 = vector.load %arg4[%c0_4, %c0_5] : memref<1x32xf32, #tpu.memory_space<vmem>>, vector<1x32xf32>
    %cst = arith.constant dense<0.000000e+00> : vector<8xf32>
    %4 = vector.multi_reduction <add>, %1, %cst [1] : vector<8x32xf32> to vector<8xf32>
    %5 = vector.shape_cast %4 : vector<8xf32> to vector<8x1xf32>
    %cst_6 = arith.constant 3.200000e+01 : f32
    %6 = vector.broadcast %cst_6 : f32 to vector<8x1xf32>
    %7 = arith.divf %5, %6 : vector<8x1xf32>
    %8 = vector.broadcast %7 : vector<8x1xf32> to vector<8x32xf32>
    %9 = arith.subf %1, %8 : vector<8x32xf32>
    %10 = arith.mulf %9, %9 : vector<8x32xf32>
    %cst_7 = arith.constant dense<0.000000e+00> : vector<8xf32>
    %11 = vector.multi_reduction <add>, %10, %cst_7 [1] : vector<8x32xf32> to vector<8xf32>
    %12 = vector.shape_cast %11 : vector<8xf32> to vector<8x1xf32>
    %cst_8 = arith.constant 3.200000e+01 : f32
    %13 = vector.broadcast %cst_8 : f32 to vector<8x1xf32>
    %14 = arith.divf %12, %13 : vector<8x1xf32>
    %cst_9 = arith.constant 9.99999996E-13 : f32
    %15 = vector.broadcast %cst_9 : f32 to vector<8x1xf32>
    %16 = arith.addf %14, %15 : vector<8x1xf32>
    %17 = math.rsqrt %16 : vector<8x1xf32>
    %18 = vector.broadcast %17 : vector<8x1xf32> to vector<8x32xf32>
    %19 = arith.mulf %9, %18 : vector<8x32xf32>
    %20 = vector.broadcast %2 : vector<1x32xf32> to vector<8x32xf32>
    %21 = arith.mulf %19, %20 : vector<8x32xf32>
    %22 = vector.broadcast %3 : vector<1x32xf32> to vector<8x32xf32>
    %23 = arith.addf %21, %22 : vector<8x32xf32>
    %c0_10 = arith.constant 0 : index
    %c0_11 = arith.constant 0 : index
    %c0_12 = arith.constant 0 : index
    %24 = vector.load %arg2[%c0_10, %c0_11, %c0_12] : memref<1x1x8xf32, #tpu.memory_space<vmem>>, vector<1x1x8xf32>
    %25 = vector.shape_cast %24 : vector<1x1x8xf32> to vector<1x8xf32>
    %26 = arith.truncf %23 : vector<8x32xf32> to vector<8x32xbf16>
    %cst_13 = arith.constant 0.000000e+00 : f32
    %27 = vector.broadcast %cst_13 : f32 to vector<8x32xf32>
    %c0_14 = arith.constant 0 : index
    %c0_15 = arith.constant 0 : index
    %c0_16 = arith.constant 0 : index
    %28 = vector.load %arg5[%c0_14, %c0_15, %c0_16] : memref<8x32x8xbf16, #tpu.memory_space<vmem>>, vector<1x32x8xbf16>
    %29 = vector.shape_cast %28 : vector<1x32x8xbf16> to vector<32x8xbf16>
    %cst_17 = arith.constant dense<0.000000e+00> : vector<8x8xf32>
    %30 = tpu.matmul %26, %29, %cst_17 {dimension_numbers = #tpu.dot_dimension_numbers<[1], [0], [0], [1], [0, 0, 1, 1], [], []>} : vector<8x32xbf16>, vector<32x8xbf16>, vector<8x8xf32> -> vector<8x8xf32>
    %c0_18 = arith.constant 0 : index
    %c0_19 = arith.constant 0 : index
    %c0_20 = arith.constant 0 : index
    %31 = vector.load %arg6[%c0_18, %c0_19, %c0_20] : memref<8x1x8xf32, #tpu.memory_space<vmem>>, vector<1x1x8xf32>
    %32 = vector.shape_cast %31 : vector<1x1x8xf32> to vector<1x8xf32>
    %33 = vector.broadcast %32 : vector<1x8xf32> to vector<8x8xf32>
    %34 = arith.addf %30, %33 : vector<8x8xf32>
    %c0_21 = arith.constant 0 : index
    %c0_22 = arith.constant 0 : index
    %c0_23 = arith.constant 0 : index
    %35 = vector.load %arg7[%c0_21, %c0_22, %c0_23] : memref<8x32x8xbf16, #tpu.memory_space<vmem>>, vector<1x32x8xbf16>
    %36 = vector.shape_cast %35 : vector<1x32x8xbf16> to vector<32x8xbf16>
    %cst_24 = arith.constant dense<0.000000e+00> : vector<8x8xf32>
    %37 = tpu.matmul %26, %36, %cst_24 {dimension_numbers = #tpu.dot_dimension_numbers<[1], [0], [0], [1], [0, 0, 1, 1], [], []>} : vector<8x32xbf16>, vector<32x8xbf16>, vector<8x8xf32> -> vector<8x8xf32>
    %c0_25 = arith.constant 0 : index
    %c0_26 = arith.constant 0 : index
    %c0_27 = arith.constant 0 : index
    %38 = vector.load %arg8[%c0_25, %c0_26, %c0_27] : memref<8x1x8xf32, #tpu.memory_space<vmem>>, vector<1x1x8xf32>
    %39 = vector.shape_cast %38 : vector<1x1x8xf32> to vector<1x8xf32>
    %40 = vector.broadcast %39 : vector<1x8xf32> to vector<8x8xf32>
    %41 = arith.addf %37, %40 : vector<8x8xf32>
    %c0_28 = arith.constant 0 : index
    %c0_29 = arith.constant 0 : index
    %c0_30 = arith.constant 0 : index
    %42 = vector.load %arg9[%c0_28, %c0_29, %c0_30] : memref<8x32x8xbf16, #tpu.memory_space<vmem>>, vector<1x32x8xbf16>
    %43 = vector.shape_cast %42 : vector<1x32x8xbf16> to vector<32x8xbf16>
    %cst_31 = arith.constant dense<0.000000e+00> : vector<8x8xf32>
    %44 = tpu.matmul %26, %43, %cst_31 {dimension_numbers = #tpu.dot_dimension_numbers<[1], [0], [0], [1], [0, 0, 1, 1], [], []>} : vector<8x32xbf16>, vector<32x8xbf16>, vector<8x8xf32> -> vector<8x8xf32>
    %c0_32 = arith.constant 0 : index
    %c0_33 = arith.constant 0 : index
    %c0_34 = arith.constant 0 : index
    %45 = vector.load %arg10[%c0_32, %c0_33, %c0_34] : memref<8x1x8xf32, #tpu.memory_space<vmem>>, vector<1x1x8xf32>
    %46 = vector.shape_cast %45 : vector<1x1x8xf32> to vector<1x8xf32>
    %47 = vector.broadcast %46 : vector<1x8xf32> to vector<8x8xf32>
    %48 = arith.addf %44, %47 : vector<8x8xf32>
    %49 = arith.truncf %34 : vector<8x8xf32> to vector<8x8xbf16>
    %50 = arith.truncf %41 : vector<8x8xf32> to vector<8x8xbf16>
    %cst_35 = arith.constant dense<0.000000e+00> : vector<8x8xf32>
    %51 = tpu.matmul %49, %50, %cst_35 {dimension_numbers = #tpu.dot_dimension_numbers<[1], [1], [0], [0], [0, 0, 1, 0], [], []>} : vector<8x8xbf16>, vector<8x8xbf16>, vector<8x8xf32> -> vector<8x8xf32>
    %cst_36 = arith.constant 0.353553385 : f32
    %52 = vector.broadcast %cst_36 : f32 to vector<8x8xf32>
    %53 = arith.mulf %51, %52 : vector<8x8xf32>
    %54 = vector.broadcast %25 : vector<1x8xf32> to vector<8x8xf32>
    %55 = arith.addf %53, %54 : vector<8x8xf32>
    %cst_37 = arith.constant dense<0xFF800000> : vector<8xf32>
    %56 = vector.multi_reduction <maximumf>, %55, %cst_37 [1] : vector<8x8xf32> to vector<8xf32>
    %57 = vector.shape_cast %56 : vector<8xf32> to vector<8x1xf32>
    %58 = vector.broadcast %57 : vector<8x1xf32> to vector<8x8xf32>
    %59 = arith.subf %55, %58 : vector<8x8xf32>
    %60 = math.exp %59 : vector<8x8xf32>
    %cst_38 = arith.constant dense<0.000000e+00> : vector<8xf32>
    %61 = vector.multi_reduction <add>, %60, %cst_38 [1] : vector<8x8xf32> to vector<8xf32>
    %62 = vector.shape_cast %61 : vector<8xf32> to vector<8x1xf32>
    %63 = tpu.reciprocal %62 {approx = true} : vector<8x1xf32> -> vector<8x1xf32>
    %64 = vector.broadcast %63 : vector<8x1xf32> to vector<8x8xf32>
    %65 = arith.mulf %60, %64 : vector<8x8xf32>
    %66 = arith.truncf %65 : vector<8x8xf32> to vector<8x8xbf16>
    %67 = arith.truncf %48 : vector<8x8xf32> to vector<8x8xbf16>
    %cst_39 = arith.constant dense<0.000000e+00> : vector<8x8xf32>
    %68 = tpu.matmul %66, %67, %cst_39 {dimension_numbers = #tpu.dot_dimension_numbers<[1], [0], [0], [1], [0, 0, 1, 1], [], []>} : vector<8x8xbf16>, vector<8x8xbf16>, vector<8x8xf32> -> vector<8x8xf32>
    %69 = arith.truncf %68 : vector<8x8xf32> to vector<8x8xbf16>
    %c0_40 = arith.constant 0 : index
    %c0_41 = arith.constant 0 : index
    %c0_42 = arith.constant 0 : index
    %70 = vector.load %arg11[%c0_40, %c0_41, %c0_42] : memref<8x8x32xbf16, #tpu.memory_space<vmem>>, vector<1x8x32xbf16>
    %71 = vector.shape_cast %70 : vector<1x8x32xbf16> to vector<8x32xbf16>
    %cst_43 = arith.constant dense<0.000000e+00> : vector<8x32xf32>
    %72 = tpu.matmul %69, %71, %cst_43 {dimension_numbers = #tpu.dot_dimension_numbers<[1], [0], [0], [1], [0, 0, 1, 1], [], []>} : vector<8x8xbf16>, vector<8x32xbf16>, vector<8x32xf32> -> vector<8x32xf32>
    %73 = arith.addf %27, %72 : vector<8x32xf32>
    %c1 = arith.constant 1 : index
    %c0_44 = arith.constant 0 : index
    %c0_45 = arith.constant 0 : index
    %74 = vector.load %arg5[%c1, %c0_44, %c0_45] : memref<8x32x8xbf16, #tpu.memory_space<vmem>>, vector<1x32x8xbf16>
    %75 = vector.shape_cast %74 : vector<1x32x8xbf16> to vector<32x8xbf16>
    %cst_46 = arith.constant dense<0.000000e+00> : vector<8x8xf32>
    %76 = tpu.matmul %26, %75, %cst_46 {dimension_numbers = #tpu.dot_dimension_numbers<[1], [0], [0], [1], [0, 0, 1, 1], [], []>} : vector<8x32xbf16>, vector<32x8xbf16>, vector<8x8xf32> -> vector<8x8xf32>
    %c1_47 = arith.constant 1 : index
    %c0_48 = arith.constant 0 : index
    %c0_49 = arith.constant 0 : index
    %77 = vector.load %arg6[%c1_47, %c0_48, %c0_49] : memref<8x1x8xf32, #tpu.memory_space<vmem>>, vector<1x1x8xf32>
    %78 = vector.shape_cast %77 : vector<1x1x8xf32> to vector<1x8xf32>
    %79 = vector.broadcast %78 : vector<1x8xf32> to vector<8x8xf32>
    %80 = arith.addf %76, %79 : vector<8x8xf32>
    %c1_50 = arith.constant 1 : index
    %c0_51 = arith.constant 0 : index
    %c0_52 = arith.constant 0 : index
    %81 = vector.load %arg7[%c1_50, %c0_51, %c0_52] : memref<8x32x8xbf16, #tpu.memory_space<vmem>>, vector<1x32x8xbf16>
    %82 = vector.shape_cast %81 : vector<1x32x8xbf16> to vector<32x8xbf16>
    %cst_53 = arith.constant dense<0.000000e+00> : vector<8x8xf32>
    %83 = tpu.matmul %26, %82, %cst_53 {dimension_numbers = #tpu.dot_dimension_numbers<[1], [0], [0], [1], [0, 0, 1, 1], [], []>} : vector<8x32xbf16>, vector<32x8xbf16>, vector<8x8xf32> -> vector<8x8xf32>
    %c1_54 = arith.constant 1 : index
    %c0_55 = arith.constant 0 : index
    %c0_56 = arith.constant 0 : index
    %84 = vector.load %arg8[%c1_54, %c0_55, %c0_56] : memref<8x1x8xf32, #tpu.memory_space<vmem>>, vector<1x1x8xf32>
    %85 = vector.shape_cast %84 : vector<1x1x8xf32> to vector<1x8xf32>
    %86 = vector.broadcast %85 : vector<1x8xf32> to vector<8x8xf32>
    %87 = arith.addf %83, %86 : vector<8x8xf32>
    %c1_57 = arith.constant 1 : index
    %c0_58 = arith.constant 0 : index
    %c0_59 = arith.constant 0 : index
    %88 = vector.load %arg9[%c1_57, %c0_58, %c0_59] : memref<8x32x8xbf16, #tpu.memory_space<vmem>>, vector<1x32x8xbf16>
    %89 = vector.shape_cast %88 : vector<1x32x8xbf16> to vector<32x8xbf16>
    %cst_60 = arith.constant dense<0.000000e+00> : vector<8x8xf32>
    %90 = tpu.matmul %26, %89, %cst_60 {dimension_numbers = #tpu.dot_dimension_numbers<[1], [0], [0], [1], [0, 0, 1, 1], [], []>} : vector<8x32xbf16>, vector<32x8xbf16>, vector<8x8xf32> -> vector<8x8xf32>
    %c1_61 = arith.constant 1 : index
    %c0_62 = arith.constant 0 : index
    %c0_63 = arith.constant 0 : index
    %91 = vector.load %arg10[%c1_61, %c0_62, %c0_63] : memref<8x1x8xf32, #tpu.memory_space<vmem>>, vector<1x1x8xf32>
    %92 = vector.shape_cast %91 : vector<1x1x8xf32> to vector<1x8xf32>
    %93 = vector.broadcast %92 : vector<1x8xf32> to vector<8x8xf32>
    %94 = arith.addf %90, %93 : vector<8x8xf32>
    %95 = arith.truncf %80 : vector<8x8xf32> to vector<8x8xbf16>
    %96 = arith.truncf %87 : vector<8x8xf32> to vector<8x8xbf16>
    %cst_64 = arith.constant dense<0.000000e+00> : vector<8x8xf32>
    %97 = tpu.matmul %95, %96, %cst_64 {dimension_numbers = #tpu.dot_dimension_numbers<[1], [1], [0], [0], [0, 0, 1, 0], [], []>} : vector<8x8xbf16>, vector<8x8xbf16>, vector<8x8xf32> -> vector<8x8xf32>
    %cst_65 = arith.constant 0.353553385 : f32
    %98 = vector.broadcast %cst_65 : f32 to vector<8x8xf32>
    %99 = arith.mulf %97, %98 : vector<8x8xf32>
    %100 = vector.broadcast %25 : vector<1x8xf32> to vector<8x8xf32>
    %101 = arith.addf %99, %100 : vector<8x8xf32>
    %cst_66 = arith.constant dense<0xFF800000> : vector<8xf32>
    %102 = vector.multi_reduction <maximumf>, %101, %cst_66 [1] : vector<8x8xf32> to vector<8xf32>
    %103 = vector.shape_cast %102 : vector<8xf32> to vector<8x1xf32>
    %104 = vector.broadcast %103 : vector<8x1xf32> to vector<8x8xf32>
    %105 = arith.subf %101, %104 : vector<8x8xf32>
    %106 = math.exp %105 : vector<8x8xf32>
    %cst_67 = arith.constant dense<0.000000e+00> : vector<8xf32>
    %107 = vector.multi_reduction <add>, %106, %cst_67 [1] : vector<8x8xf32> to vector<8xf32>
    %108 = vector.shape_cast %107 : vector<8xf32> to vector<8x1xf32>
    %109 = tpu.reciprocal %108 {approx = true} : vector<8x1xf32> -> vector<8x1xf32>
    %110 = vector.broadcast %109 : vector<8x1xf32> to vector<8x8xf32>
    %111 = arith.mulf %106, %110 : vector<8x8xf32>
    %112 = arith.truncf %111 : vector<8x8xf32> to vector<8x8xbf16>
    %113 = arith.truncf %94 : vector<8x8xf32> to vector<8x8xbf16>
    %cst_68 = arith.constant dense<0.000000e+00> : vector<8x8xf32>
    %114 = tpu.matmul %112, %113, %cst_68 {dimension_numbers = #tpu.dot_dimension_numbers<[1], [0], [0], [1], [0, 0, 1, 1], [], []>} : vector<8x8xbf16>, vector<8x8xbf16>, vector<8x8xf32> -> vector<8x8xf32>
    %115 = arith.truncf %114 : vector<8x8xf32> to vector<8x8xbf16>
    %c1_69 = arith.constant 1 : index
    %c0_70 = arith.constant 0 : index
    %c0_71 = arith.constant 0 : index
    %116 = vector.load %arg11[%c1_69, %c0_70, %c0_71] : memref<8x8x32xbf16, #tpu.memory_space<vmem>>, vector<1x8x32xbf16>
    %117 = vector.shape_cast %116 : vector<1x8x32xbf16> to vector<8x32xbf16>
    %cst_72 = arith.constant dense<0.000000e+00> : vector<8x32xf32>
    %118 = tpu.matmul %115, %117, %cst_72 {dimension_numbers = #tpu.dot_dimension_numbers<[1], [0], [0], [1], [0, 0, 1, 1], [], []>} : vector<8x8xbf16>, vector<8x32xbf16>, vector<8x32xf32> -> vector<8x32xf32>
    %119 = arith.addf %73, %118 : vector<8x32xf32>
    %c2 = arith.constant 2 : index
    %c0_73 = arith.constant 0 : index
    %c0_74 = arith.constant 0 : index
    %120 = vector.load %arg5[%c2, %c0_73, %c0_74] : memref<8x32x8xbf16, #tpu.memory_space<vmem>>, vector<1x32x8xbf16>
    %121 = vector.shape_cast %120 : vector<1x32x8xbf16> to vector<32x8xbf16>
    %cst_75 = arith.constant dense<0.000000e+00> : vector<8x8xf32>
    %122 = tpu.matmul %26, %121, %cst_75 {dimension_numbers = #tpu.dot_dimension_numbers<[1], [0], [0], [1], [0, 0, 1, 1], [], []>} : vector<8x32xbf16>, vector<32x8xbf16>, vector<8x8xf32> -> vector<8x8xf32>
    %c2_76 = arith.constant 2 : index
    %c0_77 = arith.constant 0 : index
    %c0_78 = arith.constant 0 : index
    %123 = vector.load %arg6[%c2_76, %c0_77, %c0_78] : memref<8x1x8xf32, #tpu.memory_space<vmem>>, vector<1x1x8xf32>
    %124 = vector.shape_cast %123 : vector<1x1x8xf32> to vector<1x8xf32>
    %125 = vector.broadcast %124 : vector<1x8xf32> to vector<8x8xf32>
    %126 = arith.addf %122, %125 : vector<8x8xf32>
    %c2_79 = arith.constant 2 : index
    %c0_80 = arith.constant 0 : index
    %c0_81 = arith.constant 0 : index
    %127 = vector.load %arg7[%c2_79, %c0_80, %c0_81] : memref<8x32x8xbf16, #tpu.memory_space<vmem>>, vector<1x32x8xbf16>
    %128 = vector.shape_cast %127 : vector<1x32x8xbf16> to vector<32x8xbf16>
    %cst_82 = arith.constant dense<0.000000e+00> : vector<8x8xf32>
    %129 = tpu.matmul %26, %128, %cst_82 {dimension_numbers = #tpu.dot_dimension_numbers<[1], [0], [0], [1], [0, 0, 1, 1], [], []>} : vector<8x32xbf16>, vector<32x8xbf16>, vector<8x8xf32> -> vector<8x8xf32>
    %c2_83 = arith.constant 2 : index
    %c0_84 = arith.constant 0 : index
    %c0_85 = arith.constant 0 : index
    %130 = vector.load %arg8[%c2_83, %c0_84, %c0_85] : memref<8x1x8xf32, #tpu.memory_space<vmem>>, vector<1x1x8xf32>
    %131 = vector.shape_cast %130 : vector<1x1x8xf32> to vector<1x8xf32>
    %132 = vector.broadcast %131 : vector<1x8xf32> to vector<8x8xf32>
    %133 = arith.addf %129, %132 : vector<8x8xf32>
    %c2_86 = arith.constant 2 : index
    %c0_87 = arith.constant 0 : index
    %c0_88 = arith.constant 0 : index
    %134 = vector.load %arg9[%c2_86, %c0_87, %c0_88] : memref<8x32x8xbf16, #tpu.memory_space<vmem>>, vector<1x32x8xbf16>
    %135 = vector.shape_cast %134 : vector<1x32x8xbf16> to vector<32x8xbf16>
    %cst_89 = arith.constant dense<0.000000e+00> : vector<8x8xf32>
    %136 = tpu.matmul %26, %135, %cst_89 {dimension_numbers = #tpu.dot_dimension_numbers<[1], [0], [0], [1], [0, 0, 1, 1], [], []>} : vector<8x32xbf16>, vector<32x8xbf16>, vector<8x8xf32> -> vector<8x8xf32>
    %c2_90 = arith.constant 2 : index
    %c0_91 = arith.constant 0 : index
    %c0_92 = arith.constant 0 : index
    %137 = vector.load %arg10[%c2_90, %c0_91, %c0_92] : memref<8x1x8xf32, #tpu.memory_space<vmem>>, vector<1x1x8xf32>
    %138 = vector.shape_cast %137 : vector<1x1x8xf32> to vector<1x8xf32>
    %139 = vector.broadcast %138 : vector<1x8xf32> to vector<8x8xf32>
    %140 = arith.addf %136, %139 : vector<8x8xf32>
    %141 = arith.truncf %126 : vector<8x8xf32> to vector<8x8xbf16>
    %142 = arith.truncf %133 : vector<8x8xf32> to vector<8x8xbf16>
    %cst_93 = arith.constant dense<0.000000e+00> : vector<8x8xf32>
    %143 = tpu.matmul %141, %142, %cst_93 {dimension_numbers = #tpu.dot_dimension_numbers<[1], [1], [0], [0], [0, 0, 1, 0], [], []>} : vector<8x8xbf16>, vector<8x8xbf16>, vector<8x8xf32> -> vector<8x8xf32>
    %cst_94 = arith.constant 0.353553385 : f32
    %144 = vector.broadcast %cst_94 : f32 to vector<8x8xf32>
    %145 = arith.mulf %143, %144 : vector<8x8xf32>
    %146 = vector.broadcast %25 : vector<1x8xf32> to vector<8x8xf32>
    %147 = arith.addf %145, %146 : vector<8x8xf32>
    %cst_95 = arith.constant dense<0xFF800000> : vector<8xf32>
    %148 = vector.multi_reduction <maximumf>, %147, %cst_95 [1] : vector<8x8xf32> to vector<8xf32>
    %149 = vector.shape_cast %148 : vector<8xf32> to vector<8x1xf32>
    %150 = vector.broadcast %149 : vector<8x1xf32> to vector<8x8xf32>
    %151 = arith.subf %147, %150 : vector<8x8xf32>
    %152 = math.exp %151 : vector<8x8xf32>
    %cst_96 = arith.constant dense<0.000000e+00> : vector<8xf32>
    %153 = vector.multi_reduction <add>, %152, %cst_96 [1] : vector<8x8xf32> to vector<8xf32>
    %154 = vector.shape_cast %153 : vector<8xf32> to vector<8x1xf32>
    %155 = tpu.reciprocal %154 {approx = true} : vector<8x1xf32> -> vector<8x1xf32>
    %156 = vector.broadcast %155 : vector<8x1xf32> to vector<8x8xf32>
    %157 = arith.mulf %152, %156 : vector<8x8xf32>
    %158 = arith.truncf %157 : vector<8x8xf32> to vector<8x8xbf16>
    %159 = arith.truncf %140 : vector<8x8xf32> to vector<8x8xbf16>
    %cst_97 = arith.constant dense<0.000000e+00> : vector<8x8xf32>
    %160 = tpu.matmul %158, %159, %cst_97 {dimension_numbers = #tpu.dot_dimension_numbers<[1], [0], [0], [1], [0, 0, 1, 1], [], []>} : vector<8x8xbf16>, vector<8x8xbf16>, vector<8x8xf32> -> vector<8x8xf32>
    %161 = arith.truncf %160 : vector<8x8xf32> to vector<8x8xbf16>
    %c2_98 = arith.constant 2 : index
    %c0_99 = arith.constant 0 : index
    %c0_100 = arith.constant 0 : index
    %162 = vector.load %arg11[%c2_98, %c0_99, %c0_100] : memref<8x8x32xbf16, #tpu.memory_space<vmem>>, vector<1x8x32xbf16>
    %163 = vector.shape_cast %162 : vector<1x8x32xbf16> to vector<8x32xbf16>
    %cst_101 = arith.constant dense<0.000000e+00> : vector<8x32xf32>
    %164 = tpu.matmul %161, %163, %cst_101 {dimension_numbers = #tpu.dot_dimension_numbers<[1], [0], [0], [1], [0, 0, 1, 1], [], []>} : vector<8x8xbf16>, vector<8x32xbf16>, vector<8x32xf32> -> vector<8x32xf32>
    %165 = arith.addf %119, %164 : vector<8x32xf32>
    %c3 = arith.constant 3 : index
    %c0_102 = arith.constant 0 : index
    %c0_103 = arith.constant 0 : index
    %166 = vector.load %arg5[%c3, %c0_102, %c0_103] : memref<8x32x8xbf16, #tpu.memory_space<vmem>>, vector<1x32x8xbf16>
    %167 = vector.shape_cast %166 : vector<1x32x8xbf16> to vector<32x8xbf16>
    %cst_104 = arith.constant dense<0.000000e+00> : vector<8x8xf32>
    %168 = tpu.matmul %26, %167, %cst_104 {dimension_numbers = #tpu.dot_dimension_numbers<[1], [0], [0], [1], [0, 0, 1, 1], [], []>} : vector<8x32xbf16>, vector<32x8xbf16>, vector<8x8xf32> -> vector<8x8xf32>
    %c3_105 = arith.constant 3 : index
    %c0_106 = arith.constant 0 : index
    %c0_107 = arith.constant 0 : index
    %169 = vector.load %arg6[%c3_105, %c0_106, %c0_107] : memref<8x1x8xf32, #tpu.memory_space<vmem>>, vector<1x1x8xf32>
    %170 = vector.shape_cast %169 : vector<1x1x8xf32> to vector<1x8xf32>
    %171 = vector.broadcast %170 : vector<1x8xf32> to vector<8x8xf32>
    %172 = arith.addf %168, %171 : vector<8x8xf32>
    %c3_108 = arith.constant 3 : index
    %c0_109 = arith.constant 0 : index
    %c0_110 = arith.constant 0 : index
    %173 = vector.load %arg7[%c3_108, %c0_109, %c0_110] : memref<8x32x8xbf16, #tpu.memory_space<vmem>>, vector<1x32x8xbf16>
    %174 = vector.shape_cast %173 : vector<1x32x8xbf16> to vector<32x8xbf16>
    %cst_111 = arith.constant dense<0.000000e+00> : vector<8x8xf32>
    %175 = tpu.matmul %26, %174, %cst_111 {dimension_numbers = #tpu.dot_dimension_numbers<[1], [0], [0], [1], [0, 0, 1, 1], [], []>} : vector<8x32xbf16>, vector<32x8xbf16>, vector<8x8xf32> -> vector<8x8xf32>
    %c3_112 = arith.constant 3 : index
    %c0_113 = arith.constant 0 : index
    %c0_114 = arith.constant 0 : index
    %176 = vector.load %arg8[%c3_112, %c0_113, %c0_114] : memref<8x1x8xf32, #tpu.memory_space<vmem>>, vector<1x1x8xf32>
    %177 = vector.shape_cast %176 : vector<1x1x8xf32> to vector<1x8xf32>
    %178 = vector.broadcast %177 : vector<1x8xf32> to vector<8x8xf32>
    %179 = arith.addf %175, %178 : vector<8x8xf32>
    %c3_115 = arith.constant 3 : index
    %c0_116 = arith.constant 0 : index
    %c0_117 = arith.constant 0 : index
    %180 = vector.load %arg9[%c3_115, %c0_116, %c0_117] : memref<8x32x8xbf16, #tpu.memory_space<vmem>>, vector<1x32x8xbf16>
    %181 = vector.shape_cast %180 : vector<1x32x8xbf16> to vector<32x8xbf16>
    %cst_118 = arith.constant dense<0.000000e+00> : vector<8x8xf32>
    %182 = tpu.matmul %26, %181, %cst_118 {dimension_numbers = #tpu.dot_dimension_numbers<[1], [0], [0], [1], [0, 0, 1, 1], [], []>} : vector<8x32xbf16>, vector<32x8xbf16>, vector<8x8xf32> -> vector<8x8xf32>
    %c3_119 = arith.constant 3 : index
    %c0_120 = arith.constant 0 : index
    %c0_121 = arith.constant 0 : index
    %183 = vector.load %arg10[%c3_119, %c0_120, %c0_121] : memref<8x1x8xf32, #tpu.memory_space<vmem>>, vector<1x1x8xf32>
    %184 = vector.shape_cast %183 : vector<1x1x8xf32> to vector<1x8xf32>
    %185 = vector.broadcast %184 : vector<1x8xf32> to vector<8x8xf32>
    %186 = arith.addf %182, %185 : vector<8x8xf32>
    %187 = arith.truncf %172 : vector<8x8xf32> to vector<8x8xbf16>
    %188 = arith.truncf %179 : vector<8x8xf32> to vector<8x8xbf16>
    %cst_122 = arith.constant dense<0.000000e+00> : vector<8x8xf32>
    %189 = tpu.matmul %187, %188, %cst_122 {dimension_numbers = #tpu.dot_dimension_numbers<[1], [1], [0], [0], [0, 0, 1, 0], [], []>} : vector<8x8xbf16>, vector<8x8xbf16>, vector<8x8xf32> -> vector<8x8xf32>
    %cst_123 = arith.constant 0.353553385 : f32
    %190 = vector.broadcast %cst_123 : f32 to vector<8x8xf32>
    %191 = arith.mulf %189, %190 : vector<8x8xf32>
    %192 = vector.broadcast %25 : vector<1x8xf32> to vector<8x8xf32>
    %193 = arith.addf %191, %192 : vector<8x8xf32>
    %cst_124 = arith.constant dense<0xFF800000> : vector<8xf32>
    %194 = vector.multi_reduction <maximumf>, %193, %cst_124 [1] : vector<8x8xf32> to vector<8xf32>
    %195 = vector.shape_cast %194 : vector<8xf32> to vector<8x1xf32>
    %196 = vector.broadcast %195 : vector<8x1xf32> to vector<8x8xf32>
    %197 = arith.subf %193, %196 : vector<8x8xf32>
    %198 = math.exp %197 : vector<8x8xf32>
    %cst_125 = arith.constant dense<0.000000e+00> : vector<8xf32>
    %199 = vector.multi_reduction <add>, %198, %cst_125 [1] : vector<8x8xf32> to vector<8xf32>
    %200 = vector.shape_cast %199 : vector<8xf32> to vector<8x1xf32>
    %201 = tpu.reciprocal %200 {approx = true} : vector<8x1xf32> -> vector<8x1xf32>
    %202 = vector.broadcast %201 : vector<8x1xf32> to vector<8x8xf32>
    %203 = arith.mulf %198, %202 : vector<8x8xf32>
    %204 = arith.truncf %203 : vector<8x8xf32> to vector<8x8xbf16>
    %205 = arith.truncf %186 : vector<8x8xf32> to vector<8x8xbf16>
    %cst_126 = arith.constant dense<0.000000e+00> : vector<8x8xf32>
    %206 = tpu.matmul %204, %205, %cst_126 {dimension_numbers = #tpu.dot_dimension_numbers<[1], [0], [0], [1], [0, 0, 1, 1], [], []>} : vector<8x8xbf16>, vector<8x8xbf16>, vector<8x8xf32> -> vector<8x8xf32>
    %207 = arith.truncf %206 : vector<8x8xf32> to vector<8x8xbf16>
    %c3_127 = arith.constant 3 : index
    %c0_128 = arith.constant 0 : index
    %c0_129 = arith.constant 0 : index
    %208 = vector.load %arg11[%c3_127, %c0_128, %c0_129] : memref<8x8x32xbf16, #tpu.memory_space<vmem>>, vector<1x8x32xbf16>
    %209 = vector.shape_cast %208 : vector<1x8x32xbf16> to vector<8x32xbf16>
    %cst_130 = arith.constant dense<0.000000e+00> : vector<8x32xf32>
    %210 = tpu.matmul %207, %209, %cst_130 {dimension_numbers = #tpu.dot_dimension_numbers<[1], [0], [0], [1], [0, 0, 1, 1], [], []>} : vector<8x8xbf16>, vector<8x32xbf16>, vector<8x32xf32> -> vector<8x32xf32>
    %211 = arith.addf %165, %210 : vector<8x32xf32>
    %c0_131 = arith.constant 0 : index
    %c0_132 = arith.constant 0 : index
    %c0_133 = arith.constant 0 : index
    %212 = vector.load %arg12[%c0_131, %c0_132, %c0_133] : memref<2x1x32xf32, #tpu.memory_space<vmem>>, vector<1x1x32xf32>
    %213 = vector.shape_cast %212 : vector<1x1x32xf32> to vector<1x32xf32>
    %214 = vector.broadcast %213 : vector<1x32xf32> to vector<8x32xf32>
    %215 = arith.addf %211, %214 : vector<8x32xf32>
    %216 = arith.addf %23, %215 : vector<8x32xf32>
    %c0_134 = arith.constant 0 : index
    %c0_135 = arith.constant 0 : index
    %c0_136 = arith.constant 0 : index
    %217 = vector.load %arg13[%c0_134, %c0_135, %c0_136] : memref<2x1x32xf32, #tpu.memory_space<vmem>>, vector<1x1x32xf32>
    %218 = vector.shape_cast %217 : vector<1x1x32xf32> to vector<1x32xf32>
    %c0_137 = arith.constant 0 : index
    %c0_138 = arith.constant 0 : index
    %c0_139 = arith.constant 0 : index
    %219 = vector.load %arg14[%c0_137, %c0_138, %c0_139] : memref<2x1x32xf32, #tpu.memory_space<vmem>>, vector<1x1x32xf32>
    %220 = vector.shape_cast %219 : vector<1x1x32xf32> to vector<1x32xf32>
    %cst_140 = arith.constant dense<0.000000e+00> : vector<8xf32>
    %221 = vector.multi_reduction <add>, %216, %cst_140 [1] : vector<8x32xf32> to vector<8xf32>
    %222 = vector.shape_cast %221 : vector<8xf32> to vector<8x1xf32>
    %cst_141 = arith.constant 3.200000e+01 : f32
    %223 = vector.broadcast %cst_141 : f32 to vector<8x1xf32>
    %224 = arith.divf %222, %223 : vector<8x1xf32>
    %225 = vector.broadcast %224 : vector<8x1xf32> to vector<8x32xf32>
    %226 = arith.subf %216, %225 : vector<8x32xf32>
    %227 = arith.mulf %226, %226 : vector<8x32xf32>
    %cst_142 = arith.constant dense<0.000000e+00> : vector<8xf32>
    %228 = vector.multi_reduction <add>, %227, %cst_142 [1] : vector<8x32xf32> to vector<8xf32>
    %229 = vector.shape_cast %228 : vector<8xf32> to vector<8x1xf32>
    %cst_143 = arith.constant 3.200000e+01 : f32
    %230 = vector.broadcast %cst_143 : f32 to vector<8x1xf32>
    %231 = arith.divf %229, %230 : vector<8x1xf32>
    %cst_144 = arith.constant 9.99999996E-13 : f32
    %232 = vector.broadcast %cst_144 : f32 to vector<8x1xf32>
    %233 = arith.addf %231, %232 : vector<8x1xf32>
    %234 = math.rsqrt %233 : vector<8x1xf32>
    %235 = vector.broadcast %234 : vector<8x1xf32> to vector<8x32xf32>
    %236 = arith.mulf %226, %235 : vector<8x32xf32>
    %237 = vector.broadcast %218 : vector<1x32xf32> to vector<8x32xf32>
    %238 = arith.mulf %236, %237 : vector<8x32xf32>
    %239 = vector.broadcast %220 : vector<1x32xf32> to vector<8x32xf32>
    %240 = arith.addf %238, %239 : vector<8x32xf32>
    %241 = arith.truncf %240 : vector<8x32xf32> to vector<8x32xbf16>
    %c0_145 = arith.constant 0 : index
    %c0_146 = arith.constant 0 : index
    %c0_147 = arith.constant 0 : index
    %242 = vector.load %arg15[%c0_145, %c0_146, %c0_147] : memref<2x32x64xbf16, #tpu.memory_space<vmem>>, vector<1x32x64xbf16>
    %243 = vector.shape_cast %242 : vector<1x32x64xbf16> to vector<32x64xbf16>
    %cst_148 = arith.constant dense<0.000000e+00> : vector<8x64xf32>
    %244 = tpu.matmul %241, %243, %cst_148 {dimension_numbers = #tpu.dot_dimension_numbers<[1], [0], [0], [1], [0, 0, 1, 1], [], []>} : vector<8x32xbf16>, vector<32x64xbf16>, vector<8x64xf32> -> vector<8x64xf32>
    %c0_149 = arith.constant 0 : index
    %c0_150 = arith.constant 0 : index
    %c0_151 = arith.constant 0 : index
    %245 = vector.load %arg16[%c0_149, %c0_150, %c0_151] : memref<2x1x64xf32, #tpu.memory_space<vmem>>, vector<1x1x64xf32>
    %246 = vector.shape_cast %245 : vector<1x1x64xf32> to vector<1x64xf32>
    %247 = vector.broadcast %246 : vector<1x64xf32> to vector<8x64xf32>
    %248 = arith.addf %244, %247 : vector<8x64xf32>
    %cst_152 = arith.constant 5.000000e-01 : f32
    %249 = vector.broadcast %cst_152 : f32 to vector<8x64xf32>
    %250 = arith.mulf %249, %248 : vector<8x64xf32>
    %cst_153 = arith.constant 4.471500e-02 : f32
    %251 = vector.broadcast %cst_153 : f32 to vector<8x64xf32>
    %252 = arith.mulf %251, %248 : vector<8x64xf32>
    %253 = arith.mulf %252, %248 : vector<8x64xf32>
    %254 = arith.mulf %253, %248 : vector<8x64xf32>
    %255 = arith.addf %248, %254 : vector<8x64xf32>
    %cst_154 = arith.constant 0.797884583 : f32
    %256 = vector.broadcast %cst_154 : f32 to vector<8x64xf32>
    %257 = arith.mulf %256, %255 : vector<8x64xf32>
    %258 = math.tanh %257 : vector<8x64xf32>
    %cst_155 = arith.constant 1.000000e+00 : f32
    %259 = vector.broadcast %cst_155 : f32 to vector<8x64xf32>
    %260 = arith.addf %259, %258 : vector<8x64xf32>
    %261 = arith.mulf %250, %260 : vector<8x64xf32>
    %262 = arith.truncf %261 : vector<8x64xf32> to vector<8x64xbf16>
    %c0_156 = arith.constant 0 : index
    %c0_157 = arith.constant 0 : index
    %c0_158 = arith.constant 0 : index
    %263 = vector.load %arg17[%c0_156, %c0_157, %c0_158] : memref<2x64x32xbf16, #tpu.memory_space<vmem>>, vector<1x64x32xbf16>
    %264 = vector.shape_cast %263 : vector<1x64x32xbf16> to vector<64x32xbf16>
    %cst_159 = arith.constant dense<0.000000e+00> : vector<8x32xf32>
    %265 = tpu.matmul %262, %264, %cst_159 {dimension_numbers = #tpu.dot_dimension_numbers<[1], [0], [0], [1], [0, 0, 1, 1], [], []>} : vector<8x64xbf16>, vector<64x32xbf16>, vector<8x32xf32> -> vector<8x32xf32>
    %c0_160 = arith.constant 0 : index
    %c0_161 = arith.constant 0 : index
    %c0_162 = arith.constant 0 : index
    %266 = vector.load %arg18[%c0_160, %c0_161, %c0_162] : memref<2x1x32xf32, #tpu.memory_space<vmem>>, vector<1x1x32xf32>
    %267 = vector.shape_cast %266 : vector<1x1x32xf32> to vector<1x32xf32>
    %268 = vector.broadcast %267 : vector<1x32xf32> to vector<8x32xf32>
    %269 = arith.addf %265, %268 : vector<8x32xf32>
    %270 = arith.addf %240, %269 : vector<8x32xf32>
    %c0_163 = arith.constant 0 : index
    %c0_164 = arith.constant 0 : index
    %c0_165 = arith.constant 0 : index
    %271 = vector.load %arg19[%c0_163, %c0_164, %c0_165] : memref<2x1x32xf32, #tpu.memory_space<vmem>>, vector<1x1x32xf32>
    %272 = vector.shape_cast %271 : vector<1x1x32xf32> to vector<1x32xf32>
    %c0_166 = arith.constant 0 : index
    %c0_167 = arith.constant 0 : index
    %c0_168 = arith.constant 0 : index
    %273 = vector.load %arg20[%c0_166, %c0_167, %c0_168] : memref<2x1x32xf32, #tpu.memory_space<vmem>>, vector<1x1x32xf32>
    %274 = vector.shape_cast %273 : vector<1x1x32xf32> to vector<1x32xf32>
    %cst_169 = arith.constant dense<0.000000e+00> : vector<8xf32>
    %275 = vector.multi_reduction <add>, %270, %cst_169 [1] : vector<8x32xf32> to vector<8xf32>
    %276 = vector.shape_cast %275 : vector<8xf32> to vector<8x1xf32>
    %cst_170 = arith.constant 3.200000e+01 : f32
    %277 = vector.broadcast %cst_170 : f32 to vector<8x1xf32>
    %278 = arith.divf %276, %277 : vector<8x1xf32>
    %279 = vector.broadcast %278 : vector<8x1xf32> to vector<8x32xf32>
    %280 = arith.subf %270, %279 : vector<8x32xf32>
    %281 = arith.mulf %280, %280 : vector<8x32xf32>
    %cst_171 = arith.constant dense<0.000000e+00> : vector<8xf32>
    %282 = vector.multi_reduction <add>, %281, %cst_171 [1] : vector<8x32xf32> to vector<8xf32>
    %283 = vector.shape_cast %282 : vector<8xf32> to vector<8x1xf32>
    %cst_172 = arith.constant 3.200000e+01 : f32
    %284 = vector.broadcast %cst_172 : f32 to vector<8x1xf32>
    %285 = arith.divf %283, %284 : vector<8x1xf32>
    %cst_173 = arith.constant 9.99999996E-13 : f32
    %286 = vector.broadcast %cst_173 : f32 to vector<8x1xf32>
    %287 = arith.addf %285, %286 : vector<8x1xf32>
    %288 = math.rsqrt %287 : vector<8x1xf32>
    %289 = vector.broadcast %288 : vector<8x1xf32> to vector<8x32xf32>
    %290 = arith.mulf %280, %289 : vector<8x32xf32>
    %291 = vector.broadcast %272 : vector<1x32xf32> to vector<8x32xf32>
    %292 = arith.mulf %290, %291 : vector<8x32xf32>
    %293 = vector.broadcast %274 : vector<1x32xf32> to vector<8x32xf32>
    %294 = arith.addf %292, %293 : vector<8x32xf32>
    %295 = arith.truncf %294 : vector<8x32xf32> to vector<8x32xbf16>
    %cst_174 = arith.constant 0.000000e+00 : f32
    %296 = vector.broadcast %cst_174 : f32 to vector<8x32xf32>
    %c4 = arith.constant 4 : index
    %c0_175 = arith.constant 0 : index
    %c0_176 = arith.constant 0 : index
    %297 = vector.load %arg5[%c4, %c0_175, %c0_176] : memref<8x32x8xbf16, #tpu.memory_space<vmem>>, vector<1x32x8xbf16>
    %298 = vector.shape_cast %297 : vector<1x32x8xbf16> to vector<32x8xbf16>
    %cst_177 = arith.constant dense<0.000000e+00> : vector<8x8xf32>
    %299 = tpu.matmul %295, %298, %cst_177 {dimension_numbers = #tpu.dot_dimension_numbers<[1], [0], [0], [1], [0, 0, 1, 1], [], []>} : vector<8x32xbf16>, vector<32x8xbf16>, vector<8x8xf32> -> vector<8x8xf32>
    %c4_178 = arith.constant 4 : index
    %c0_179 = arith.constant 0 : index
    %c0_180 = arith.constant 0 : index
    %300 = vector.load %arg6[%c4_178, %c0_179, %c0_180] : memref<8x1x8xf32, #tpu.memory_space<vmem>>, vector<1x1x8xf32>
    %301 = vector.shape_cast %300 : vector<1x1x8xf32> to vector<1x8xf32>
    %302 = vector.broadcast %301 : vector<1x8xf32> to vector<8x8xf32>
    %303 = arith.addf %299, %302 : vector<8x8xf32>
    %c4_181 = arith.constant 4 : index
    %c0_182 = arith.constant 0 : index
    %c0_183 = arith.constant 0 : index
    %304 = vector.load %arg7[%c4_181, %c0_182, %c0_183] : memref<8x32x8xbf16, #tpu.memory_space<vmem>>, vector<1x32x8xbf16>
    %305 = vector.shape_cast %304 : vector<1x32x8xbf16> to vector<32x8xbf16>
    %cst_184 = arith.constant dense<0.000000e+00> : vector<8x8xf32>
    %306 = tpu.matmul %295, %305, %cst_184 {dimension_numbers = #tpu.dot_dimension_numbers<[1], [0], [0], [1], [0, 0, 1, 1], [], []>} : vector<8x32xbf16>, vector<32x8xbf16>, vector<8x8xf32> -> vector<8x8xf32>
    %c4_185 = arith.constant 4 : index
    %c0_186 = arith.constant 0 : index
    %c0_187 = arith.constant 0 : index
    %307 = vector.load %arg8[%c4_185, %c0_186, %c0_187] : memref<8x1x8xf32, #tpu.memory_space<vmem>>, vector<1x1x8xf32>
    %308 = vector.shape_cast %307 : vector<1x1x8xf32> to vector<1x8xf32>
    %309 = vector.broadcast %308 : vector<1x8xf32> to vector<8x8xf32>
    %310 = arith.addf %306, %309 : vector<8x8xf32>
    %c4_188 = arith.constant 4 : index
    %c0_189 = arith.constant 0 : index
    %c0_190 = arith.constant 0 : index
    %311 = vector.load %arg9[%c4_188, %c0_189, %c0_190] : memref<8x32x8xbf16, #tpu.memory_space<vmem>>, vector<1x32x8xbf16>
    %312 = vector.shape_cast %311 : vector<1x32x8xbf16> to vector<32x8xbf16>
    %cst_191 = arith.constant dense<0.000000e+00> : vector<8x8xf32>
    %313 = tpu.matmul %295, %312, %cst_191 {dimension_numbers = #tpu.dot_dimension_numbers<[1], [0], [0], [1], [0, 0, 1, 1], [], []>} : vector<8x32xbf16>, vector<32x8xbf16>, vector<8x8xf32> -> vector<8x8xf32>
    %c4_192 = arith.constant 4 : index
    %c0_193 = arith.constant 0 : index
    %c0_194 = arith.constant 0 : index
    %314 = vector.load %arg10[%c4_192, %c0_193, %c0_194] : memref<8x1x8xf32, #tpu.memory_space<vmem>>, vector<1x1x8xf32>
    %315 = vector.shape_cast %314 : vector<1x1x8xf32> to vector<1x8xf32>
    %316 = vector.broadcast %315 : vector<1x8xf32> to vector<8x8xf32>
    %317 = arith.addf %313, %316 : vector<8x8xf32>
    %318 = arith.truncf %303 : vector<8x8xf32> to vector<8x8xbf16>
    %319 = arith.truncf %310 : vector<8x8xf32> to vector<8x8xbf16>
    %cst_195 = arith.constant dense<0.000000e+00> : vector<8x8xf32>
    %320 = tpu.matmul %318, %319, %cst_195 {dimension_numbers = #tpu.dot_dimension_numbers<[1], [1], [0], [0], [0, 0, 1, 0], [], []>} : vector<8x8xbf16>, vector<8x8xbf16>, vector<8x8xf32> -> vector<8x8xf32>
    %cst_196 = arith.constant 0.353553385 : f32
    %321 = vector.broadcast %cst_196 : f32 to vector<8x8xf32>
    %322 = arith.mulf %320, %321 : vector<8x8xf32>
    %323 = vector.broadcast %25 : vector<1x8xf32> to vector<8x8xf32>
    %324 = arith.addf %322, %323 : vector<8x8xf32>
    %cst_197 = arith.constant dense<0xFF800000> : vector<8xf32>
    %325 = vector.multi_reduction <maximumf>, %324, %cst_197 [1] : vector<8x8xf32> to vector<8xf32>
    %326 = vector.shape_cast %325 : vector<8xf32> to vector<8x1xf32>
    %327 = vector.broadcast %326 : vector<8x1xf32> to vector<8x8xf32>
    %328 = arith.subf %324, %327 : vector<8x8xf32>
    %329 = math.exp %328 : vector<8x8xf32>
    %cst_198 = arith.constant dense<0.000000e+00> : vector<8xf32>
    %330 = vector.multi_reduction <add>, %329, %cst_198 [1] : vector<8x8xf32> to vector<8xf32>
    %331 = vector.shape_cast %330 : vector<8xf32> to vector<8x1xf32>
    %332 = tpu.reciprocal %331 {approx = true} : vector<8x1xf32> -> vector<8x1xf32>
    %333 = vector.broadcast %332 : vector<8x1xf32> to vector<8x8xf32>
    %334 = arith.mulf %329, %333 : vector<8x8xf32>
    %335 = arith.truncf %334 : vector<8x8xf32> to vector<8x8xbf16>
    %336 = arith.truncf %317 : vector<8x8xf32> to vector<8x8xbf16>
    %cst_199 = arith.constant dense<0.000000e+00> : vector<8x8xf32>
    %337 = tpu.matmul %335, %336, %cst_199 {dimension_numbers = #tpu.dot_dimension_numbers<[1], [0], [0], [1], [0, 0, 1, 1], [], []>} : vector<8x8xbf16>, vector<8x8xbf16>, vector<8x8xf32> -> vector<8x8xf32>
    %338 = arith.truncf %337 : vector<8x8xf32> to vector<8x8xbf16>
    %c4_200 = arith.constant 4 : index
    %c0_201 = arith.constant 0 : index
    %c0_202 = arith.constant 0 : index
    %339 = vector.load %arg11[%c4_200, %c0_201, %c0_202] : memref<8x8x32xbf16, #tpu.memory_space<vmem>>, vector<1x8x32xbf16>
    %340 = vector.shape_cast %339 : vector<1x8x32xbf16> to vector<8x32xbf16>
    %cst_203 = arith.constant dense<0.000000e+00> : vector<8x32xf32>
    %341 = tpu.matmul %338, %340, %cst_203 {dimension_numbers = #tpu.dot_dimension_numbers<[1], [0], [0], [1], [0, 0, 1, 1], [], []>} : vector<8x8xbf16>, vector<8x32xbf16>, vector<8x32xf32> -> vector<8x32xf32>
    %342 = arith.addf %296, %341 : vector<8x32xf32>
    %c5 = arith.constant 5 : index
    %c0_204 = arith.constant 0 : index
    %c0_205 = arith.constant 0 : index
    %343 = vector.load %arg5[%c5, %c0_204, %c0_205] : memref<8x32x8xbf16, #tpu.memory_space<vmem>>, vector<1x32x8xbf16>
    %344 = vector.shape_cast %343 : vector<1x32x8xbf16> to vector<32x8xbf16>
    %cst_206 = arith.constant dense<0.000000e+00> : vector<8x8xf32>
    %345 = tpu.matmul %295, %344, %cst_206 {dimension_numbers = #tpu.dot_dimension_numbers<[1], [0], [0], [1], [0, 0, 1, 1], [], []>} : vector<8x32xbf16>, vector<32x8xbf16>, vector<8x8xf32> -> vector<8x8xf32>
    %c5_207 = arith.constant 5 : index
    %c0_208 = arith.constant 0 : index
    %c0_209 = arith.constant 0 : index
    %346 = vector.load %arg6[%c5_207, %c0_208, %c0_209] : memref<8x1x8xf32, #tpu.memory_space<vmem>>, vector<1x1x8xf32>
    %347 = vector.shape_cast %346 : vector<1x1x8xf32> to vector<1x8xf32>
    %348 = vector.broadcast %347 : vector<1x8xf32> to vector<8x8xf32>
    %349 = arith.addf %345, %348 : vector<8x8xf32>
    %c5_210 = arith.constant 5 : index
    %c0_211 = arith.constant 0 : index
    %c0_212 = arith.constant 0 : index
    %350 = vector.load %arg7[%c5_210, %c0_211, %c0_212] : memref<8x32x8xbf16, #tpu.memory_space<vmem>>, vector<1x32x8xbf16>
    %351 = vector.shape_cast %350 : vector<1x32x8xbf16> to vector<32x8xbf16>
    %cst_213 = arith.constant dense<0.000000e+00> : vector<8x8xf32>
    %352 = tpu.matmul %295, %351, %cst_213 {dimension_numbers = #tpu.dot_dimension_numbers<[1], [0], [0], [1], [0, 0, 1, 1], [], []>} : vector<8x32xbf16>, vector<32x8xbf16>, vector<8x8xf32> -> vector<8x8xf32>
    %c5_214 = arith.constant 5 : index
    %c0_215 = arith.constant 0 : index
    %c0_216 = arith.constant 0 : index
    %353 = vector.load %arg8[%c5_214, %c0_215, %c0_216] : memref<8x1x8xf32, #tpu.memory_space<vmem>>, vector<1x1x8xf32>
    %354 = vector.shape_cast %353 : vector<1x1x8xf32> to vector<1x8xf32>
    %355 = vector.broadcast %354 : vector<1x8xf32> to vector<8x8xf32>
    %356 = arith.addf %352, %355 : vector<8x8xf32>
    %c5_217 = arith.constant 5 : index
    %c0_218 = arith.constant 0 : index
    %c0_219 = arith.constant 0 : index
    %357 = vector.load %arg9[%c5_217, %c0_218, %c0_219] : memref<8x32x8xbf16, #tpu.memory_space<vmem>>, vector<1x32x8xbf16>
    %358 = vector.shape_cast %357 : vector<1x32x8xbf16> to vector<32x8xbf16>
    %cst_220 = arith.constant dense<0.000000e+00> : vector<8x8xf32>
    %359 = tpu.matmul %295, %358, %cst_220 {dimension_numbers = #tpu.dot_dimension_numbers<[1], [0], [0], [1], [0, 0, 1, 1], [], []>} : vector<8x32xbf16>, vector<32x8xbf16>, vector<8x8xf32> -> vector<8x8xf32>
    %c5_221 = arith.constant 5 : index
    %c0_222 = arith.constant 0 : index
    %c0_223 = arith.constant 0 : index
    %360 = vector.load %arg10[%c5_221, %c0_222, %c0_223] : memref<8x1x8xf32, #tpu.memory_space<vmem>>, vector<1x1x8xf32>
    %361 = vector.shape_cast %360 : vector<1x1x8xf32> to vector<1x8xf32>
    %362 = vector.broadcast %361 : vector<1x8xf32> to vector<8x8xf32>
    %363 = arith.addf %359, %362 : vector<8x8xf32>
    %364 = arith.truncf %349 : vector<8x8xf32> to vector<8x8xbf16>
    %365 = arith.truncf %356 : vector<8x8xf32> to vector<8x8xbf16>
    %cst_224 = arith.constant dense<0.000000e+00> : vector<8x8xf32>
    %366 = tpu.matmul %364, %365, %cst_224 {dimension_numbers = #tpu.dot_dimension_numbers<[1], [1], [0], [0], [0, 0, 1, 0], [], []>} : vector<8x8xbf16>, vector<8x8xbf16>, vector<8x8xf32> -> vector<8x8xf32>
    %cst_225 = arith.constant 0.353553385 : f32
    %367 = vector.broadcast %cst_225 : f32 to vector<8x8xf32>
    %368 = arith.mulf %366, %367 : vector<8x8xf32>
    %369 = vector.broadcast %25 : vector<1x8xf32> to vector<8x8xf32>
    %370 = arith.addf %368, %369 : vector<8x8xf32>
    %cst_226 = arith.constant dense<0xFF800000> : vector<8xf32>
    %371 = vector.multi_reduction <maximumf>, %370, %cst_226 [1] : vector<8x8xf32> to vector<8xf32>
    %372 = vector.shape_cast %371 : vector<8xf32> to vector<8x1xf32>
    %373 = vector.broadcast %372 : vector<8x1xf32> to vector<8x8xf32>
    %374 = arith.subf %370, %373 : vector<8x8xf32>
    %375 = math.exp %374 : vector<8x8xf32>
    %cst_227 = arith.constant dense<0.000000e+00> : vector<8xf32>
    %376 = vector.multi_reduction <add>, %375, %cst_227 [1] : vector<8x8xf32> to vector<8xf32>
    %377 = vector.shape_cast %376 : vector<8xf32> to vector<8x1xf32>
    %378 = tpu.reciprocal %377 {approx = true} : vector<8x1xf32> -> vector<8x1xf32>
    %379 = vector.broadcast %378 : vector<8x1xf32> to vector<8x8xf32>
    %380 = arith.mulf %375, %379 : vector<8x8xf32>
    %381 = arith.truncf %380 : vector<8x8xf32> to vector<8x8xbf16>
    %382 = arith.truncf %363 : vector<8x8xf32> to vector<8x8xbf16>
    %cst_228 = arith.constant dense<0.000000e+00> : vector<8x8xf32>
    %383 = tpu.matmul %381, %382, %cst_228 {dimension_numbers = #tpu.dot_dimension_numbers<[1], [0], [0], [1], [0, 0, 1, 1], [], []>} : vector<8x8xbf16>, vector<8x8xbf16>, vector<8x8xf32> -> vector<8x8xf32>
    %384 = arith.truncf %383 : vector<8x8xf32> to vector<8x8xbf16>
    %c5_229 = arith.constant 5 : index
    %c0_230 = arith.constant 0 : index
    %c0_231 = arith.constant 0 : index
    %385 = vector.load %arg11[%c5_229, %c0_230, %c0_231] : memref<8x8x32xbf16, #tpu.memory_space<vmem>>, vector<1x8x32xbf16>
    %386 = vector.shape_cast %385 : vector<1x8x32xbf16> to vector<8x32xbf16>
    %cst_232 = arith.constant dense<0.000000e+00> : vector<8x32xf32>
    %387 = tpu.matmul %384, %386, %cst_232 {dimension_numbers = #tpu.dot_dimension_numbers<[1], [0], [0], [1], [0, 0, 1, 1], [], []>} : vector<8x8xbf16>, vector<8x32xbf16>, vector<8x32xf32> -> vector<8x32xf32>
    %388 = arith.addf %342, %387 : vector<8x32xf32>
    %c6 = arith.constant 6 : index
    %c0_233 = arith.constant 0 : index
    %c0_234 = arith.constant 0 : index
    %389 = vector.load %arg5[%c6, %c0_233, %c0_234] : memref<8x32x8xbf16, #tpu.memory_space<vmem>>, vector<1x32x8xbf16>
    %390 = vector.shape_cast %389 : vector<1x32x8xbf16> to vector<32x8xbf16>
    %cst_235 = arith.constant dense<0.000000e+00> : vector<8x8xf32>
    %391 = tpu.matmul %295, %390, %cst_235 {dimension_numbers = #tpu.dot_dimension_numbers<[1], [0], [0], [1], [0, 0, 1, 1], [], []>} : vector<8x32xbf16>, vector<32x8xbf16>, vector<8x8xf32> -> vector<8x8xf32>
    %c6_236 = arith.constant 6 : index
    %c0_237 = arith.constant 0 : index
    %c0_238 = arith.constant 0 : index
    %392 = vector.load %arg6[%c6_236, %c0_237, %c0_238] : memref<8x1x8xf32, #tpu.memory_space<vmem>>, vector<1x1x8xf32>
    %393 = vector.shape_cast %392 : vector<1x1x8xf32> to vector<1x8xf32>
    %394 = vector.broadcast %393 : vector<1x8xf32> to vector<8x8xf32>
    %395 = arith.addf %391, %394 : vector<8x8xf32>
    %c6_239 = arith.constant 6 : index
    %c0_240 = arith.constant 0 : index
    %c0_241 = arith.constant 0 : index
    %396 = vector.load %arg7[%c6_239, %c0_240, %c0_241] : memref<8x32x8xbf16, #tpu.memory_space<vmem>>, vector<1x32x8xbf16>
    %397 = vector.shape_cast %396 : vector<1x32x8xbf16> to vector<32x8xbf16>
    %cst_242 = arith.constant dense<0.000000e+00> : vector<8x8xf32>
    %398 = tpu.matmul %295, %397, %cst_242 {dimension_numbers = #tpu.dot_dimension_numbers<[1], [0], [0], [1], [0, 0, 1, 1], [], []>} : vector<8x32xbf16>, vector<32x8xbf16>, vector<8x8xf32> -> vector<8x8xf32>
    %c6_243 = arith.constant 6 : index
    %c0_244 = arith.constant 0 : index
    %c0_245 = arith.constant 0 : index
    %399 = vector.load %arg8[%c6_243, %c0_244, %c0_245] : memref<8x1x8xf32, #tpu.memory_space<vmem>>, vector<1x1x8xf32>
    %400 = vector.shape_cast %399 : vector<1x1x8xf32> to vector<1x8xf32>
    %401 = vector.broadcast %400 : vector<1x8xf32> to vector<8x8xf32>
    %402 = arith.addf %398, %401 : vector<8x8xf32>
    %c6_246 = arith.constant 6 : index
    %c0_247 = arith.constant 0 : index
    %c0_248 = arith.constant 0 : index
    %403 = vector.load %arg9[%c6_246, %c0_247, %c0_248] : memref<8x32x8xbf16, #tpu.memory_space<vmem>>, vector<1x32x8xbf16>
    %404 = vector.shape_cast %403 : vector<1x32x8xbf16> to vector<32x8xbf16>
    %cst_249 = arith.constant dense<0.000000e+00> : vector<8x8xf32>
    %405 = tpu.matmul %295, %404, %cst_249 {dimension_numbers = #tpu.dot_dimension_numbers<[1], [0], [0], [1], [0, 0, 1, 1], [], []>} : vector<8x32xbf16>, vector<32x8xbf16>, vector<8x8xf32> -> vector<8x8xf32>
    %c6_250 = arith.constant 6 : index
    %c0_251 = arith.constant 0 : index
    %c0_252 = arith.constant 0 : index
    %406 = vector.load %arg10[%c6_250, %c0_251, %c0_252] : memref<8x1x8xf32, #tpu.memory_space<vmem>>, vector<1x1x8xf32>
    %407 = vector.shape_cast %406 : vector<1x1x8xf32> to vector<1x8xf32>
    %408 = vector.broadcast %407 : vector<1x8xf32> to vector<8x8xf32>
    %409 = arith.addf %405, %408 : vector<8x8xf32>
    %410 = arith.truncf %395 : vector<8x8xf32> to vector<8x8xbf16>
    %411 = arith.truncf %402 : vector<8x8xf32> to vector<8x8xbf16>
    %cst_253 = arith.constant dense<0.000000e+00> : vector<8x8xf32>
    %412 = tpu.matmul %410, %411, %cst_253 {dimension_numbers = #tpu.dot_dimension_numbers<[1], [1], [0], [0], [0, 0, 1, 0], [], []>} : vector<8x8xbf16>, vector<8x8xbf16>, vector<8x8xf32> -> vector<8x8xf32>
    %cst_254 = arith.constant 0.353553385 : f32
    %413 = vector.broadcast %cst_254 : f32 to vector<8x8xf32>
    %414 = arith.mulf %412, %413 : vector<8x8xf32>
    %415 = vector.broadcast %25 : vector<1x8xf32> to vector<8x8xf32>
    %416 = arith.addf %414, %415 : vector<8x8xf32>
    %cst_255 = arith.constant dense<0xFF800000> : vector<8xf32>
    %417 = vector.multi_reduction <maximumf>, %416, %cst_255 [1] : vector<8x8xf32> to vector<8xf32>
    %418 = vector.shape_cast %417 : vector<8xf32> to vector<8x1xf32>
    %419 = vector.broadcast %418 : vector<8x1xf32> to vector<8x8xf32>
    %420 = arith.subf %416, %419 : vector<8x8xf32>
    %421 = math.exp %420 : vector<8x8xf32>
    %cst_256 = arith.constant dense<0.000000e+00> : vector<8xf32>
    %422 = vector.multi_reduction <add>, %421, %cst_256 [1] : vector<8x8xf32> to vector<8xf32>
    %423 = vector.shape_cast %422 : vector<8xf32> to vector<8x1xf32>
    %424 = tpu.reciprocal %423 {approx = true} : vector<8x1xf32> -> vector<8x1xf32>
    %425 = vector.broadcast %424 : vector<8x1xf32> to vector<8x8xf32>
    %426 = arith.mulf %421, %425 : vector<8x8xf32>
    %427 = arith.truncf %426 : vector<8x8xf32> to vector<8x8xbf16>
    %428 = arith.truncf %409 : vector<8x8xf32> to vector<8x8xbf16>
    %cst_257 = arith.constant dense<0.000000e+00> : vector<8x8xf32>
    %429 = tpu.matmul %427, %428, %cst_257 {dimension_numbers = #tpu.dot_dimension_numbers<[1], [0], [0], [1], [0, 0, 1, 1], [], []>} : vector<8x8xbf16>, vector<8x8xbf16>, vector<8x8xf32> -> vector<8x8xf32>
    %430 = arith.truncf %429 : vector<8x8xf32> to vector<8x8xbf16>
    %c6_258 = arith.constant 6 : index
    %c0_259 = arith.constant 0 : index
    %c0_260 = arith.constant 0 : index
    %431 = vector.load %arg11[%c6_258, %c0_259, %c0_260] : memref<8x8x32xbf16, #tpu.memory_space<vmem>>, vector<1x8x32xbf16>
    %432 = vector.shape_cast %431 : vector<1x8x32xbf16> to vector<8x32xbf16>
    %cst_261 = arith.constant dense<0.000000e+00> : vector<8x32xf32>
    %433 = tpu.matmul %430, %432, %cst_261 {dimension_numbers = #tpu.dot_dimension_numbers<[1], [0], [0], [1], [0, 0, 1, 1], [], []>} : vector<8x8xbf16>, vector<8x32xbf16>, vector<8x32xf32> -> vector<8x32xf32>
    %434 = arith.addf %388, %433 : vector<8x32xf32>
    %c7 = arith.constant 7 : index
    %c0_262 = arith.constant 0 : index
    %c0_263 = arith.constant 0 : index
    %435 = vector.load %arg5[%c7, %c0_262, %c0_263] : memref<8x32x8xbf16, #tpu.memory_space<vmem>>, vector<1x32x8xbf16>
    %436 = vector.shape_cast %435 : vector<1x32x8xbf16> to vector<32x8xbf16>
    %cst_264 = arith.constant dense<0.000000e+00> : vector<8x8xf32>
    %437 = tpu.matmul %295, %436, %cst_264 {dimension_numbers = #tpu.dot_dimension_numbers<[1], [0], [0], [1], [0, 0, 1, 1], [], []>} : vector<8x32xbf16>, vector<32x8xbf16>, vector<8x8xf32> -> vector<8x8xf32>
    %c7_265 = arith.constant 7 : index
    %c0_266 = arith.constant 0 : index
    %c0_267 = arith.constant 0 : index
    %438 = vector.load %arg6[%c7_265, %c0_266, %c0_267] : memref<8x1x8xf32, #tpu.memory_space<vmem>>, vector<1x1x8xf32>
    %439 = vector.shape_cast %438 : vector<1x1x8xf32> to vector<1x8xf32>
    %440 = vector.broadcast %439 : vector<1x8xf32> to vector<8x8xf32>
    %441 = arith.addf %437, %440 : vector<8x8xf32>
    %c7_268 = arith.constant 7 : index
    %c0_269 = arith.constant 0 : index
    %c0_270 = arith.constant 0 : index
    %442 = vector.load %arg7[%c7_268, %c0_269, %c0_270] : memref<8x32x8xbf16, #tpu.memory_space<vmem>>, vector<1x32x8xbf16>
    %443 = vector.shape_cast %442 : vector<1x32x8xbf16> to vector<32x8xbf16>
    %cst_271 = arith.constant dense<0.000000e+00> : vector<8x8xf32>
    %444 = tpu.matmul %295, %443, %cst_271 {dimension_numbers = #tpu.dot_dimension_numbers<[1], [0], [0], [1], [0, 0, 1, 1], [], []>} : vector<8x32xbf16>, vector<32x8xbf16>, vector<8x8xf32> -> vector<8x8xf32>
    %c7_272 = arith.constant 7 : index
    %c0_273 = arith.constant 0 : index
    %c0_274 = arith.constant 0 : index
    %445 = vector.load %arg8[%c7_272, %c0_273, %c0_274] : memref<8x1x8xf32, #tpu.memory_space<vmem>>, vector<1x1x8xf32>
    %446 = vector.shape_cast %445 : vector<1x1x8xf32> to vector<1x8xf32>
    %447 = vector.broadcast %446 : vector<1x8xf32> to vector<8x8xf32>
    %448 = arith.addf %444, %447 : vector<8x8xf32>
    %c7_275 = arith.constant 7 : index
    %c0_276 = arith.constant 0 : index
    %c0_277 = arith.constant 0 : index
    %449 = vector.load %arg9[%c7_275, %c0_276, %c0_277] : memref<8x32x8xbf16, #tpu.memory_space<vmem>>, vector<1x32x8xbf16>
    %450 = vector.shape_cast %449 : vector<1x32x8xbf16> to vector<32x8xbf16>
    %cst_278 = arith.constant dense<0.000000e+00> : vector<8x8xf32>
    %451 = tpu.matmul %295, %450, %cst_278 {dimension_numbers = #tpu.dot_dimension_numbers<[1], [0], [0], [1], [0, 0, 1, 1], [], []>} : vector<8x32xbf16>, vector<32x8xbf16>, vector<8x8xf32> -> vector<8x8xf32>
    %c7_279 = arith.constant 7 : index
    %c0_280 = arith.constant 0 : index
    %c0_281 = arith.constant 0 : index
    %452 = vector.load %arg10[%c7_279, %c0_280, %c0_281] : memref<8x1x8xf32, #tpu.memory_space<vmem>>, vector<1x1x8xf32>
    %453 = vector.shape_cast %452 : vector<1x1x8xf32> to vector<1x8xf32>
    %454 = vector.broadcast %453 : vector<1x8xf32> to vector<8x8xf32>
    %455 = arith.addf %451, %454 : vector<8x8xf32>
    %456 = arith.truncf %441 : vector<8x8xf32> to vector<8x8xbf16>
    %457 = arith.truncf %448 : vector<8x8xf32> to vector<8x8xbf16>
    %cst_282 = arith.constant dense<0.000000e+00> : vector<8x8xf32>
    %458 = tpu.matmul %456, %457, %cst_282 {dimension_numbers = #tpu.dot_dimension_numbers<[1], [1], [0], [0], [0, 0, 1, 0], [], []>} : vector<8x8xbf16>, vector<8x8xbf16>, vector<8x8xf32> -> vector<8x8xf32>
    %cst_283 = arith.constant 0.353553385 : f32
    %459 = vector.broadcast %cst_283 : f32 to vector<8x8xf32>
    %460 = arith.mulf %458, %459 : vector<8x8xf32>
    %461 = vector.broadcast %25 : vector<1x8xf32> to vector<8x8xf32>
    %462 = arith.addf %460, %461 : vector<8x8xf32>
    %cst_284 = arith.constant dense<0xFF800000> : vector<8xf32>
    %463 = vector.multi_reduction <maximumf>, %462, %cst_284 [1] : vector<8x8xf32> to vector<8xf32>
    %464 = vector.shape_cast %463 : vector<8xf32> to vector<8x1xf32>
    %465 = vector.broadcast %464 : vector<8x1xf32> to vector<8x8xf32>
    %466 = arith.subf %462, %465 : vector<8x8xf32>
    %467 = math.exp %466 : vector<8x8xf32>
    %cst_285 = arith.constant dense<0.000000e+00> : vector<8xf32>
    %468 = vector.multi_reduction <add>, %467, %cst_285 [1] : vector<8x8xf32> to vector<8xf32>
    %469 = vector.shape_cast %468 : vector<8xf32> to vector<8x1xf32>
    %470 = tpu.reciprocal %469 {approx = true} : vector<8x1xf32> -> vector<8x1xf32>
    %471 = vector.broadcast %470 : vector<8x1xf32> to vector<8x8xf32>
    %472 = arith.mulf %467, %471 : vector<8x8xf32>
    %473 = arith.truncf %472 : vector<8x8xf32> to vector<8x8xbf16>
    %474 = arith.truncf %455 : vector<8x8xf32> to vector<8x8xbf16>
    %cst_286 = arith.constant dense<0.000000e+00> : vector<8x8xf32>
    %475 = tpu.matmul %473, %474, %cst_286 {dimension_numbers = #tpu.dot_dimension_numbers<[1], [0], [0], [1], [0, 0, 1, 1], [], []>} : vector<8x8xbf16>, vector<8x8xbf16>, vector<8x8xf32> -> vector<8x8xf32>
    %476 = arith.truncf %475 : vector<8x8xf32> to vector<8x8xbf16>
    %c7_287 = arith.constant 7 : index
    %c0_288 = arith.constant 0 : index
    %c0_289 = arith.constant 0 : index
    %477 = vector.load %arg11[%c7_287, %c0_288, %c0_289] : memref<8x8x32xbf16, #tpu.memory_space<vmem>>, vector<1x8x32xbf16>
    %478 = vector.shape_cast %477 : vector<1x8x32xbf16> to vector<8x32xbf16>
    %cst_290 = arith.constant dense<0.000000e+00> : vector<8x32xf32>
    %479 = tpu.matmul %476, %478, %cst_290 {dimension_numbers = #tpu.dot_dimension_numbers<[1], [0], [0], [1], [0, 0, 1, 1], [], []>} : vector<8x8xbf16>, vector<8x32xbf16>, vector<8x32xf32> -> vector<8x32xf32>
    %480 = arith.addf %434, %479 : vector<8x32xf32>
    %c1_291 = arith.constant 1 : index
    %c0_292 = arith.constant 0 : index
    %c0_293 = arith.constant 0 : index
    %481 = vector.load %arg12[%c1_291, %c0_292, %c0_293] : memref<2x1x32xf32, #tpu.memory_space<vmem>>, vector<1x1x32xf32>
    %482 = vector.shape_cast %481 : vector<1x1x32xf32> to vector<1x32xf32>
    %483 = vector.broadcast %482 : vector<1x32xf32> to vector<8x32xf32>
    %484 = arith.addf %480, %483 : vector<8x32xf32>
    %485 = arith.addf %294, %484 : vector<8x32xf32>
    %c1_294 = arith.constant 1 : index
    %c0_295 = arith.constant 0 : index
    %c0_296 = arith.constant 0 : index
    %486 = vector.load %arg13[%c1_294, %c0_295, %c0_296] : memref<2x1x32xf32, #tpu.memory_space<vmem>>, vector<1x1x32xf32>
    %487 = vector.shape_cast %486 : vector<1x1x32xf32> to vector<1x32xf32>
    %c1_297 = arith.constant 1 : index
    %c0_298 = arith.constant 0 : index
    %c0_299 = arith.constant 0 : index
    %488 = vector.load %arg14[%c1_297, %c0_298, %c0_299] : memref<2x1x32xf32, #tpu.memory_space<vmem>>, vector<1x1x32xf32>
    %489 = vector.shape_cast %488 : vector<1x1x32xf32> to vector<1x32xf32>
    %cst_300 = arith.constant dense<0.000000e+00> : vector<8xf32>
    %490 = vector.multi_reduction <add>, %485, %cst_300 [1] : vector<8x32xf32> to vector<8xf32>
    %491 = vector.shape_cast %490 : vector<8xf32> to vector<8x1xf32>
    %cst_301 = arith.constant 3.200000e+01 : f32
    %492 = vector.broadcast %cst_301 : f32 to vector<8x1xf32>
    %493 = arith.divf %491, %492 : vector<8x1xf32>
    %494 = vector.broadcast %493 : vector<8x1xf32> to vector<8x32xf32>
    %495 = arith.subf %485, %494 : vector<8x32xf32>
    %496 = arith.mulf %495, %495 : vector<8x32xf32>
    %cst_302 = arith.constant dense<0.000000e+00> : vector<8xf32>
    %497 = vector.multi_reduction <add>, %496, %cst_302 [1] : vector<8x32xf32> to vector<8xf32>
    %498 = vector.shape_cast %497 : vector<8xf32> to vector<8x1xf32>
    %cst_303 = arith.constant 3.200000e+01 : f32
    %499 = vector.broadcast %cst_303 : f32 to vector<8x1xf32>
    %500 = arith.divf %498, %499 : vector<8x1xf32>
    %cst_304 = arith.constant 9.99999996E-13 : f32
    %501 = vector.broadcast %cst_304 : f32 to vector<8x1xf32>
    %502 = arith.addf %500, %501 : vector<8x1xf32>
    %503 = math.rsqrt %502 : vector<8x1xf32>
    %504 = vector.broadcast %503 : vector<8x1xf32> to vector<8x32xf32>
    %505 = arith.mulf %495, %504 : vector<8x32xf32>
    %506 = vector.broadcast %487 : vector<1x32xf32> to vector<8x32xf32>
    %507 = arith.mulf %505, %506 : vector<8x32xf32>
    %508 = vector.broadcast %489 : vector<1x32xf32> to vector<8x32xf32>
    %509 = arith.addf %507, %508 : vector<8x32xf32>
    %510 = arith.truncf %509 : vector<8x32xf32> to vector<8x32xbf16>
    %c1_305 = arith.constant 1 : index
    %c0_306 = arith.constant 0 : index
    %c0_307 = arith.constant 0 : index
    %511 = vector.load %arg15[%c1_305, %c0_306, %c0_307] : memref<2x32x64xbf16, #tpu.memory_space<vmem>>, vector<1x32x64xbf16>
    %512 = vector.shape_cast %511 : vector<1x32x64xbf16> to vector<32x64xbf16>
    %cst_308 = arith.constant dense<0.000000e+00> : vector<8x64xf32>
    %513 = tpu.matmul %510, %512, %cst_308 {dimension_numbers = #tpu.dot_dimension_numbers<[1], [0], [0], [1], [0, 0, 1, 1], [], []>} : vector<8x32xbf16>, vector<32x64xbf16>, vector<8x64xf32> -> vector<8x64xf32>
    %c1_309 = arith.constant 1 : index
    %c0_310 = arith.constant 0 : index
    %c0_311 = arith.constant 0 : index
    %514 = vector.load %arg16[%c1_309, %c0_310, %c0_311] : memref<2x1x64xf32, #tpu.memory_space<vmem>>, vector<1x1x64xf32>
    %515 = vector.shape_cast %514 : vector<1x1x64xf32> to vector<1x64xf32>
    %516 = vector.broadcast %515 : vector<1x64xf32> to vector<8x64xf32>
    %517 = arith.addf %513, %516 : vector<8x64xf32>
    %cst_312 = arith.constant 5.000000e-01 : f32
    %518 = vector.broadcast %cst_312 : f32 to vector<8x64xf32>
    %519 = arith.mulf %518, %517 : vector<8x64xf32>
    %cst_313 = arith.constant 4.471500e-02 : f32
    %520 = vector.broadcast %cst_313 : f32 to vector<8x64xf32>
    %521 = arith.mulf %520, %517 : vector<8x64xf32>
    %522 = arith.mulf %521, %517 : vector<8x64xf32>
    %523 = arith.mulf %522, %517 : vector<8x64xf32>
    %524 = arith.addf %517, %523 : vector<8x64xf32>
    %cst_314 = arith.constant 0.797884583 : f32
    %525 = vector.broadcast %cst_314 : f32 to vector<8x64xf32>
    %526 = arith.mulf %525, %524 : vector<8x64xf32>
    %527 = math.tanh %526 : vector<8x64xf32>
    %cst_315 = arith.constant 1.000000e+00 : f32
    %528 = vector.broadcast %cst_315 : f32 to vector<8x64xf32>
    %529 = arith.addf %528, %527 : vector<8x64xf32>
    %530 = arith.mulf %519, %529 : vector<8x64xf32>
    %531 = arith.truncf %530 : vector<8x64xf32> to vector<8x64xbf16>
    %c1_316 = arith.constant 1 : index
    %c0_317 = arith.constant 0 : index
    %c0_318 = arith.constant 0 : index
    %532 = vector.load %arg17[%c1_316, %c0_317, %c0_318] : memref<2x64x32xbf16, #tpu.memory_space<vmem>>, vector<1x64x32xbf16>
    %533 = vector.shape_cast %532 : vector<1x64x32xbf16> to vector<64x32xbf16>
    %cst_319 = arith.constant dense<0.000000e+00> : vector<8x32xf32>
    %534 = tpu.matmul %531, %533, %cst_319 {dimension_numbers = #tpu.dot_dimension_numbers<[1], [0], [0], [1], [0, 0, 1, 1], [], []>} : vector<8x64xbf16>, vector<64x32xbf16>, vector<8x32xf32> -> vector<8x32xf32>
    %c1_320 = arith.constant 1 : index
    %c0_321 = arith.constant 0 : index
    %c0_322 = arith.constant 0 : index
    %535 = vector.load %arg18[%c1_320, %c0_321, %c0_322] : memref<2x1x32xf32, #tpu.memory_space<vmem>>, vector<1x1x32xf32>
    %536 = vector.shape_cast %535 : vector<1x1x32xf32> to vector<1x32xf32>
    %537 = vector.broadcast %536 : vector<1x32xf32> to vector<8x32xf32>
    %538 = arith.addf %534, %537 : vector<8x32xf32>
    %539 = arith.addf %509, %538 : vector<8x32xf32>
    %c1_323 = arith.constant 1 : index
    %c0_324 = arith.constant 0 : index
    %c0_325 = arith.constant 0 : index
    %540 = vector.load %arg19[%c1_323, %c0_324, %c0_325] : memref<2x1x32xf32, #tpu.memory_space<vmem>>, vector<1x1x32xf32>
    %541 = vector.shape_cast %540 : vector<1x1x32xf32> to vector<1x32xf32>
    %c1_326 = arith.constant 1 : index
    %c0_327 = arith.constant 0 : index
    %c0_328 = arith.constant 0 : index
    %542 = vector.load %arg20[%c1_326, %c0_327, %c0_328] : memref<2x1x32xf32, #tpu.memory_space<vmem>>, vector<1x1x32xf32>
    %543 = vector.shape_cast %542 : vector<1x1x32xf32> to vector<1x32xf32>
    %cst_329 = arith.constant dense<0.000000e+00> : vector<8xf32>
    %544 = vector.multi_reduction <add>, %539, %cst_329 [1] : vector<8x32xf32> to vector<8xf32>
    %545 = vector.shape_cast %544 : vector<8xf32> to vector<8x1xf32>
    %cst_330 = arith.constant 3.200000e+01 : f32
    %546 = vector.broadcast %cst_330 : f32 to vector<8x1xf32>
    %547 = arith.divf %545, %546 : vector<8x1xf32>
    %548 = vector.broadcast %547 : vector<8x1xf32> to vector<8x32xf32>
    %549 = arith.subf %539, %548 : vector<8x32xf32>
    %550 = arith.mulf %549, %549 : vector<8x32xf32>
    %cst_331 = arith.constant dense<0.000000e+00> : vector<8xf32>
    %551 = vector.multi_reduction <add>, %550, %cst_331 [1] : vector<8x32xf32> to vector<8xf32>
    %552 = vector.shape_cast %551 : vector<8xf32> to vector<8x1xf32>
    %cst_332 = arith.constant 3.200000e+01 : f32
    %553 = vector.broadcast %cst_332 : f32 to vector<8x1xf32>
    %554 = arith.divf %552, %553 : vector<8x1xf32>
    %cst_333 = arith.constant 9.99999996E-13 : f32
    %555 = vector.broadcast %cst_333 : f32 to vector<8x1xf32>
    %556 = arith.addf %554, %555 : vector<8x1xf32>
    %557 = math.rsqrt %556 : vector<8x1xf32>
    %558 = vector.broadcast %557 : vector<8x1xf32> to vector<8x32xf32>
    %559 = arith.mulf %549, %558 : vector<8x32xf32>
    %560 = vector.broadcast %541 : vector<1x32xf32> to vector<8x32xf32>
    %561 = arith.mulf %559, %560 : vector<8x32xf32>
    %562 = vector.broadcast %543 : vector<1x32xf32> to vector<8x32xf32>
    %563 = arith.addf %561, %562 : vector<8x32xf32>
    %564 = vector.extract_strided_slice %563 {offsets = [0, 0], sizes = [1, 32], strides = [1, 1]} : vector<8x32xf32> to vector<1x32xf32>
    %c0_334 = arith.constant 0 : index
    %c0_335 = arith.constant 0 : index
    %565 = vector.load %arg21[%c0_334, %c0_335] : memref<1x32xf32, #tpu.memory_space<vmem>>, vector<1x32xf32>
    %566 = arith.mulf %564, %565 : vector<1x32xf32>
    %cst_336 = arith.constant dense<0.000000e+00> : vector<1xf32>
    %567 = vector.multi_reduction <add>, %566, %cst_336 [1] : vector<1x32xf32> to vector<1xf32>
    %568 = vector.shape_cast %567 : vector<1xf32> to vector<1x1xf32>
    %c0_337 = arith.constant 0 : index
    %c0_338 = arith.constant 0 : index
    %569 = vector.load %arg22[%c0_337, %c0_338] : memref<1x1xf32, #tpu.memory_space<vmem>>, vector<1x1xf32>
    %570 = arith.addf %568, %569 : vector<1x1xf32>
    %c0_339 = arith.constant 0 : index
    %c0_340 = arith.constant 0 : index
    %c0_341 = arith.constant 0 : index
    %571 = vector.load %arg23[%c0_339, %c0_340, %c0_341] : memref<1x1x1xf32, #tpu.memory_space<vmem>>, vector<1x1x1xf32>
    %572 = vector.shape_cast %571 : vector<1x1x1xf32> to vector<1x1xf32>
    %573 = vector.shape_cast %570 : vector<1x1xf32> to vector<1x1x1xf32>
    tpu.vector_store %arg23[%c0_339, %c0_340, %c0_341], %573 {strides = array<i32>} : memref<1x1x1xf32, #tpu.memory_space<vmem>>, vector<1x1x1xf32>,
    return
  }
  func.func @transform_0(%arg0: i32) -> (i32, i32, i32) {
    %c0_i32 = arith.constant 0 : i32
    %c0_i32_0 = arith.constant 0 : i32
    %c0_i32_1 = arith.constant 0 : i32
    return %arg0, %c0_i32, %c0_i32_0 : i32, i32, i32
  }
  func.func @transform_1(%arg0: i32) -> (i32, i32, i32) {
    %c0_i32 = arith.constant 0 : i32
    %c0_i32_0 = arith.constant 0 : i32
    %c0_i32_1 = arith.constant 0 : i32
    return %arg0, %c0_i32, %c0_i32_0 : i32, i32, i32
  }
  func.func @transform_2(%arg0: i32) -> (i32, i32) {
    %c0_i32 = arith.constant 0 : i32
    %c0_i32_0 = arith.constant 0 : i32
    %c0_i32_1 = arith.constant 0 : i32
    return %c0_i32, %c0_i32_0 : i32, i32
  }
  func.func @transform_3(%arg0: i32) -> (i32, i32) {
    %c0_i32 = arith.constant 0 : i32
    %c0_i32_0 = arith.constant 0 : i32
    %c0_i32_1 = arith.constant 0 : i32
    return %c0_i32, %c0_i32_0 : i32, i32
  }
  func.func @transform_4(%arg0: i32) -> (i32, i32, i32) {
    %c0_i32 = arith.constant 0 : i32
    %c0_i32_0 = arith.constant 0 : i32
    %c0_i32_1 = arith.constant 0 : i32
    %c0_i32_2 = arith.constant 0 : i32
    return %c0_i32, %c0_i32_0, %c0_i32_1 : i32, i32, i32
  }
  func.func @transform_5(%arg0: i32) -> (i32, i32, i32) {
    %c0_i32 = arith.constant 0 : i32
    %c0_i32_0 = arith.constant 0 : i32
    %c0_i32_1 = arith.constant 0 : i32
    %c0_i32_2 = arith.constant 0 : i32
    return %c0_i32, %c0_i32_0, %c0_i32_1 : i32, i32, i32
  }
  func.func @transform_6(%arg0: i32) -> (i32, i32, i32) {
    %c0_i32 = arith.constant 0 : i32
    %c0_i32_0 = arith.constant 0 : i32
    %c0_i32_1 = arith.constant 0 : i32
    %c0_i32_2 = arith.constant 0 : i32
    return %c0_i32, %c0_i32_0, %c0_i32_1 : i32, i32, i32
  }
  func.func @transform_7(%arg0: i32) -> (i32, i32, i32) {
    %c0_i32 = arith.constant 0 : i32
    %c0_i32_0 = arith.constant 0 : i32
    %c0_i32_1 = arith.constant 0 : i32
    %c0_i32_2 = arith.constant 0 : i32
    return %c0_i32, %c0_i32_0, %c0_i32_1 : i32, i32, i32
  }
  func.func @transform_8(%arg0: i32) -> (i32, i32, i32) {
    %c0_i32 = arith.constant 0 : i32
    %c0_i32_0 = arith.constant 0 : i32
    %c0_i32_1 = arith.constant 0 : i32
    %c0_i32_2 = arith.constant 0 : i32
    return %c0_i32, %c0_i32_0, %c0_i32_1 : i32, i32, i32
  }
  func.func @transform_9(%arg0: i32) -> (i32, i32, i32) {
    %c0_i32 = arith.constant 0 : i32
    %c0_i32_0 = arith.constant 0 : i32
    %c0_i32_1 = arith.constant 0 : i32
    %c0_i32_2 = arith.constant 0 : i32
    return %c0_i32, %c0_i32_0, %c0_i32_1 : i32, i32, i32
  }
  func.func @transform_10(%arg0: i32) -> (i32, i32, i32) {
    %c0_i32 = arith.constant 0 : i32
    %c0_i32_0 = arith.constant 0 : i32
    %c0_i32_1 = arith.constant 0 : i32
    %c0_i32_2 = arith.constant 0 : i32
    return %c0_i32, %c0_i32_0, %c0_i32_1 : i32, i32, i32
  }
  func.func @transform_11(%arg0: i32) -> (i32, i32, i32) {
    %c0_i32 = arith.constant 0 : i32
    %c0_i32_0 = arith.constant 0 : i32
    %c0_i32_1 = arith.constant 0 : i32
    %c0_i32_2 = arith.constant 0 : i32
    return %c0_i32, %c0_i32_0, %c0_i32_1 : i32, i32, i32
  }
  func.func @transform_12(%arg0: i32) -> (i32, i32, i32) {
    %c0_i32 = arith.constant 0 : i32
    %c0_i32_0 = arith.constant 0 : i32
    %c0_i32_1 = arith.constant 0 : i32
    %c0_i32_2 = arith.constant 0 : i32
    return %c0_i32, %c0_i32_0, %c0_i32_1 : i32, i32, i32
  }
  func.func @transform_13(%arg0: i32) -> (i32, i32, i32) {
    %c0_i32 = arith.constant 0 : i32
    %c0_i32_0 = arith.constant 0 : i32
    %c0_i32_1 = arith.constant 0 : i32
    %c0_i32_2 = arith.constant 0 : i32
    return %c0_i32, %c0_i32_0, %c0_i32_1 : i32, i32, i32
  }
  func.func @transform_14(%arg0: i32) -> (i32, i32, i32) {
    %c0_i32 = arith.constant 0 : i32
    %c0_i32_0 = arith.constant 0 : i32
    %c0_i32_1 = arith.constant 0 : i32
    %c0_i32_2 = arith.constant 0 : i32
    return %c0_i32, %c0_i32_0, %c0_i32_1 : i32, i32, i32
  }
  func.func @transform_15(%arg0: i32) -> (i32, i32, i32) {
    %c0_i32 = arith.constant 0 : i32
    %c0_i32_0 = arith.constant 0 : i32
    %c0_i32_1 = arith.constant 0 : i32
    %c0_i32_2 = arith.constant 0 : i32
    return %c0_i32, %c0_i32_0, %c0_i32_1 : i32, i32, i32
  }
  func.func @transform_16(%arg0: i32) -> (i32, i32, i32) {
    %c0_i32 = arith.constant 0 : i32
    %c0_i32_0 = arith.constant 0 : i32
    %c0_i32_1 = arith.constant 0 : i32
    %c0_i32_2 = arith.constant 0 : i32
    return %c0_i32, %c0_i32_0, %c0_i32_1 : i32, i32, i32
  }
  func.func @transform_17(%arg0: i32) -> (i32, i32, i32) {
    %c0_i32 = arith.constant 0 : i32
    %c0_i32_0 = arith.constant 0 : i32
    %c0_i32_1 = arith.constant 0 : i32
    %c0_i32_2 = arith.constant 0 : i32
    return %c0_i32, %c0_i32_0, %c0_i32_1 : i32, i32, i32
  }
  func.func @transform_18(%arg0: i32) -> (i32, i32, i32) {
    %c0_i32 = arith.constant 0 : i32
    %c0_i32_0 = arith.constant 0 : i32
    %c0_i32_1 = arith.constant 0 : i32
    %c0_i32_2 = arith.constant 0 : i32
    return %c0_i32, %c0_i32_0, %c0_i32_1 : i32, i32, i32
  }
  func.func @transform_19(%arg0: i32) -> (i32, i32, i32) {
    %c0_i32 = arith.constant 0 : i32
    %c0_i32_0 = arith.constant 0 : i32
    %c0_i32_1 = arith.constant 0 : i32
    %c0_i32_2 = arith.constant 0 : i32
    return %c0_i32, %c0_i32_0, %c0_i32_1 : i32, i32, i32
  }
  func.func @transform_20(%arg0: i32) -> (i32, i32) {
    %c0_i32 = arith.constant 0 : i32
    %c0_i32_0 = arith.constant 0 : i32
    %c0_i32_1 = arith.constant 0 : i32
    return %c0_i32, %c0_i32_0 : i32, i32
  }
  func.func @transform_21(%arg0: i32) -> (i32, i32) {
    %c0_i32 = arith.constant 0 : i32
    %c0_i32_0 = arith.constant 0 : i32
    %c0_i32_1 = arith.constant 0 : i32
    return %c0_i32, %c0_i32_0 : i32, i32
  }
  func.func @transform_22(%arg0: i32) -> (i32, i32, i32) {
    %c0_i32 = arith.constant 0 : i32
    %c0_i32_0 = arith.constant 0 : i32
    %c0_i32_1 = arith.constant 0 : i32
    return %arg0, %c0_i32, %c0_i32_0 : i32, i32, i32
  }
}

</mosaic_0001>

<llo_original>
// kernel: tpu_custom_call.1
$region0: #{tpu_custom_call.1}
  #allocation0 [shape = 'u32[]', space=smem, size = 0x4, offset = 0x4, fixed_abs, tag = 'smem constant byte address 0x4 - core index']
  #allocation1 [shape = 'u32[144,128]{1,0:T(1,128)}', space=vmem, size = 0x12000, scoped, tag = 'internal scratch']
  #allocation2 [shape = 'f32[1,1]{1,0:T(1,128)S(1)}', space=vmem, size = 0x200, scoped, tag = 'scoped memory for tpu_custom_call.1']
  %s0 = inlined_call_operand.vmem [shape: f32[2,8,32], index: 0, kind: input, shape index: {}]
  %s1 = inlined_call_operand.vmem [shape: f32[2,1,8], index: 1, kind: input, shape index: {}]
  %s2 = inlined_call_operand.vmem [shape: f32[1,32], index: 2, kind: input, shape index: {}]
  %s3 = inlined_call_operand.vmem [shape: f32[1,32], index: 3, kind: input, shape index: {}]
  %s4 = inlined_call_operand.vmem [shape: bf16[8,32,8], index: 4, kind: input, shape index: {}]
  %s5 = inlined_call_operand.vmem [shape: f32[8,1,8], index: 5, kind: input, shape index: {}]
  %s6 = inlined_call_operand.vmem [shape: bf16[8,32,8], index: 6, kind: input, shape index: {}]
  %s7 = inlined_call_operand.vmem [shape: f32[8,1,8], index: 7, kind: input, shape index: {}]
  %s8 = inlined_call_operand.vmem [shape: bf16[8,32,8], index: 8, kind: input, shape index: {}]
  %s9 = inlined_call_operand.vmem [shape: f32[8,1,8], index: 9, kind: input, shape index: {}]
  %s10 = inlined_call_operand.vmem [shape: bf16[8,8,32], index: 10, kind: input, shape index: {}]
  %s11 = inlined_call_operand.vmem [shape: f32[2,1,32], index: 11, kind: input, shape index: {}]
  %s12 = inlined_call_operand.vmem [shape: f32[2,1,32], index: 12, kind: input, shape index: {}]
  %s13 = inlined_call_operand.vmem [shape: f32[2,1,32], index: 13, kind: input, shape index: {}]
  %s14 = inlined_call_operand.vmem [shape: bf16[2,32,64], index: 14, kind: input, shape index: {}]
  %s15 = inlined_call_operand.vmem [shape: f32[2,1,64], index: 15, kind: input, shape index: {}]
  %s16 = inlined_call_operand.vmem [shape: bf16[2,64,32], index: 16, kind: input, shape index: {}]
  %s17 = inlined_call_operand.vmem [shape: f32[2,1,32], index: 17, kind: input, shape index: {}]
  %s18 = inlined_call_operand.vmem [shape: f32[2,1,32], index: 18, kind: input, shape index: {}]
  %s19 = inlined_call_operand.vmem [shape: f32[2,1,32], index: 19, kind: input, shape index: {}]
  %s20 = inlined_call_operand.vmem [shape: f32[1,32], index: 20, kind: input, shape index: {}]
  %s21 = inlined_call_operand.<no memory space> [shape: f32[1,1], index: 21, kind: input, shape index: {}]
  %s22 = inlined_call_operand.vmem [shape: f32[2,1,1], index: 22, kind: output, shape index: {}]
  %s23 = sld [smem:[#allocation0]]
  $region121: #{tpu_custom_call.1} parent=0
    _
  %s25 = ssub.s32 1, %s23
  %s26 = scalar_select 0, %s25, %s23
  %v27 = vstv %s21
  %28 = vst [vmem:[#allocation2] sm:$0x1] %v27
  loop: start=0, step=1, limit=4
  $region2: #{tpu_custom_call.1} parent=0 // loop_pre_header
    _
  $region3: #{tpu_custom_call.1} parent=0 // loop_header
    %s30 = sphi 0, %s34
    %p31 = scmp.ge.s32.totalorder %s30, 4
    %s40 = sphi 0, %s42
    %s43 = sphi 0, %s40
    %s44 = sphi 0, %s43
    %s60 = sphi 0, %s44
    %s66 = sphi 0, %s68
    %s69 = sphi 0, %s66
    %s70 = sphi 0, %s69
    %s86 = sphi 0, %s70
    %s90 = sphi 0, %s90
    %s92 = sphi 0, %s90
    %s93 = sphi 0, %s92
    %s107 = sphi 0, %s93
    %s111 = sphi 0, %s111
    %s113 = sphi 0, %s111
    %s114 = sphi 0, %s113
    %s128 = sphi 0, %s114
    %s132 = sphi 0, %s132
    %s134 = sphi 0, %s132
    %s135 = sphi 0, %s134
    %s149 = sphi 0, %s135
    %s153 = sphi 0, %s153
    %s155 = sphi 0, %s153
    %s156 = sphi 0, %s155
    %s170 = sphi 0, %s156
    %s174 = sphi 0, %s174
    %s176 = sphi 0, %s174
    %s177 = sphi 0, %s176
    %s191 = sphi 0, %s177
    %s195 = sphi 0, %s195
    %s197 = sphi 0, %s195
    %s198 = sphi 0, %s197
    %s212 = sphi 0, %s198
    %s216 = sphi 0, %s216
    %s218 = sphi 0, %s216
    %s219 = sphi 0, %s218
    %s233 = sphi 0, %s219
    %s237 = sphi 0, %s237
    %s239 = sphi 0, %s237
    %s240 = sphi 0, %s239
    %s254 = sphi 0, %s240
    %s258 = sphi 0, %s258
    %s260 = sphi 0, %s258
    %s261 = sphi 0, %s260
    %s275 = sphi 0, %s261
    %s279 = sphi 0, %s279
    %s281 = sphi 0, %s279
    %s282 = sphi 0, %s281
    %s296 = sphi 0, %s282
    %s300 = sphi 0, %s300
    %s302 = sphi 0, %s300
    %s303 = sphi 0, %s302
    %s317 = sphi 0, %s303
    %s321 = sphi 0, %s321
    %s323 = sphi 0, %s321
    %s324 = sphi 0, %s323
    %s338 = sphi 0, %s324
    %s342 = sphi 0, %s342
    %s344 = sphi 0, %s342
    %s345 = sphi 0, %s344
    %s359 = sphi 0, %s345
    %s363 = sphi 0, %s363
    %s365 = sphi 0, %s363
    %s366 = sphi 0, %s365
    %s380 = sphi 0, %s366
    %s384 = sphi 0, %s384
    %s386 = sphi 0, %s384
    %s387 = sphi 0, %s386
    %s401 = sphi 0, %s387
    %s405 = sphi 0, %s405
    %s407 = sphi 0, %s405
    %s408 = sphi 0, %s407
    %s422 = sphi 0, %s408
    %s426 = sphi 0, %s426
    %s428 = sphi 0, %s426
    %s429 = sphi 0, %s428
    %s443 = sphi 0, %s429
    %s447 = sphi 0, %s447
    %s449 = sphi 0, %s447
    %s450 = sphi 0, %s449
    %s464 = sphi 0, %s450
    %s468 = sphi 0, %s468
    %s470 = sphi 0, %s468
    %s471 = sphi 0, %s470
    %s485 = sphi 0, %s471
    %s489 = sphi 0, %s489
    %s491 = sphi 0, %s489
    %s492 = sphi 0, %s491
    %s506 = sphi 0, %s492
    %s512 = sphi 0, %s514
    %s515 = sphi 0, %s512
    %s516 = sphi 0, %s515
    %s532 = sphi 0, %s516
  $region4: #{tpu_custom_call.1} parent=0 // loop_header_branch
    %33 = sbr.rel (%p31) target = $region8
  $region5: #{tpu_custom_call.1} parent=0 // loop_body
    %s35 = ssub.s32 %s30, 1
    %s36 = ssub.s32 %s30, 2
    %s37 = sadd.s32 %s30, 1
    %s38 = ssub.s32 %s30, %s37
    %p39 = scmp.eq.s32.totalorder %s38, 0
    %s41 = sadd.s32 %s40, 1
    %s42 = scalar_select %p39, %s40, %s41
    %p45 = pneg %p39
    %p46 = scmp.eq.s32.totalorder %s30, 1
    %p47 = por %p45, %p46
    %p48 = scmp.ne.s32.totalorder %s40, %s43
    %p49 = scmp.eq.s32.totalorder %s30, 0
    %p50 = por %p48, %p49
    %p51 = scmp.ne.s32.totalorder %s40, %s43
    %p52 = scmp.eq.s32.totalorder %s35, 1
    %p53 = por %p51, %p52
    %p54 = scmp.ne.s32.totalorder %s43, %s44
    %p55 = scmp.eq.s32.totalorder %s35, 0
    %p56 = por %p54, %p55
    %p57 = scmp.ne.s32.totalorder %s43, %s44
    %p58 = scmp.eq.s32.totalorder %s36, 1
    %p59 = por %p57, %p58
    %p61 = scmp.ne.s32.totalorder %s44, %s60
    %p62 = scmp.eq.s32.totalorder %s36, 0
    %p63 = por %p61, %p62
    %s64 = ssub.s32 %s30, %s37
    %p65 = scmp.eq.s32.totalorder %s64, 0
    %s67 = sadd.s32 %s66, 1
    %s68 = scalar_select %p65, %s66, %s67
    %p71 = pneg %p65
    %p72 = scmp.eq.s32.totalorder %s30, 1
    %p73 = por %p71, %p72
    %p74 = scmp.ne.s32.totalorder %s66, %s69
    %p75 = scmp.eq.s32.totalorder %s30, 0
    %p76 = por %p74, %p75
    %p77 = scmp.ne.s32.totalorder %s66, %s69
    %p78 = scmp.eq.s32.totalorder %s35, 1
    %p79 = por %p77, %p78
    %p80 = scmp.ne.s32.totalorder %s69, %s70
    %p81 = scmp.eq.s32.totalorder %s35, 0
    %p82 = por %p80, %p81
    %p83 = scmp.ne.s32.totalorder %s69, %s70
    %p84 = scmp.eq.s32.totalorder %s36, 1
    %p85 = por %p83, %p84
    %p87 = scmp.ne.s32.totalorder %s70, %s86
    %p88 = scmp.eq.s32.totalorder %s36, 0
    %p89 = por %p87, %p88
    %s91 = sadd.s32 %s90, 1
    %p94 = scmp.eq.s32.totalorder %s30, 1
    %p95 = scmp.ne.s32.totalorder %s90, %s92
    %p96 = scmp.eq.s32.totalorder %s30, 0
    %p97 = por %p95, %p96
    %p98 = scmp.ne.s32.totalorder %s90, %s92
    %p99 = scmp.eq.s32.totalorder %s35, 1
    %p100 = por %p98, %p99
    %p101 = scmp.ne.s32.totalorder %s92, %s93
    %p102 = scmp.eq.s32.totalorder %s35, 0
    %p103 = por %p101, %p102
    %p104 = scmp.ne.s32.totalorder %s92, %s93
    %p105 = scmp.eq.s32.totalorder %s36, 1
    %p106 = por %p104, %p105
    %p108 = scmp.ne.s32.totalorder %s93, %s107
    %p109 = scmp.eq.s32.totalorder %s36, 0
    %p110 = por %p108, %p109
    %s112 = sadd.s32 %s111, 1
    %p115 = scmp.eq.s32.totalorder %s30, 1
    %p116 = scmp.ne.s32.totalorder %s111, %s113
    %p117 = scmp.eq.s32.totalorder %s30, 0
    %p118 = por %p116, %p117
    %p119 = scmp.ne.s32.totalorder %s111, %s113
    %p120 = scmp.eq.s32.totalorder %s35, 1
    %p121 = por %p119, %p120
    %p122 = scmp.ne.s32.totalorder %s113, %s114
    %p123 = scmp.eq.s32.totalorder %s35, 0
    %p124 = por %p122, %p123
    %p125 = scmp.ne.s32.totalorder %s113, %s114
    %p126 = scmp.eq.s32.totalorder %s36, 1
    %p127 = por %p125, %p126
    %p129 = scmp.ne.s32.totalorder %s114, %s128
    %p130 = scmp.eq.s32.totalorder %s36, 0
    %p131 = por %p129, %p130
    %s133 = sadd.s32 %s132, 1
    %p136 = scmp.eq.s32.totalorder %s30, 1
    %p137 = scmp.ne.s32.totalorder %s132, %s134
    %p138 = scmp.eq.s32.totalorder %s30, 0
    %p139 = por %p137, %p138
    %p140 = scmp.ne.s32.totalorder %s132, %s134
    %p141 = scmp.eq.s32.totalorder %s35, 1
    %p142 = por %p140, %p141
    %p143 = scmp.ne.s32.totalorder %s134, %s135
    %p144 = scmp.eq.s32.totalorder %s35, 0
    %p145 = por %p143, %p144
    %p146 = scmp.ne.s32.totalorder %s134, %s135
    %p147 = scmp.eq.s32.totalorder %s36, 1
    %p148 = por %p146, %p147
    %p150 = scmp.ne.s32.totalorder %s135, %s149
    %p151 = scmp.eq.s32.totalorder %s36, 0
    %p152 = por %p150, %p151
    %s154 = sadd.s32 %s153, 1
    %p157 = scmp.eq.s32.totalorder %s30, 1
    %p158 = scmp.ne.s32.totalorder %s153, %s155
    %p159 = scmp.eq.s32.totalorder %s30, 0
    %p160 = por %p158, %p159
    %p161 = scmp.ne.s32.totalorder %s153, %s155
    %p162 = scmp.eq.s32.totalorder %s35, 1
    %p163 = por %p161, %p162
    %p164 = scmp.ne.s32.totalorder %s155, %s156
    %p165 = scmp.eq.s32.totalorder %s35, 0
    %p166 = por %p164, %p165
    %p167 = scmp.ne.s32.totalorder %s155, %s156
    %p168 = scmp.eq.s32.totalorder %s36, 1
    %p169 = por %p167, %p168
    %p171 = scmp.ne.s32.totalorder %s156, %s170
    %p172 = scmp.eq.s32.totalorder %s36, 0
    %p173 = por %p171, %p172
    %s175 = sadd.s32 %s174, 1
    %p178 = scmp.eq.s32.totalorder %s30, 1
    %p179 = scmp.ne.s32.totalorder %s174, %s176
    %p180 = scmp.eq.s32.totalorder %s30, 0
    %p181 = por %p179, %p180
    %p182 = scmp.ne.s32.totalorder %s174, %s176
    %p183 = scmp.eq.s32.totalorder %s35, 1
    %p184 = por %p182, %p183
    %p185 = scmp.ne.s32.totalorder %s176, %s177
    %p186 = scmp.eq.s32.totalorder %s35, 0
    %p187 = por %p185, %p186
    %p188 = scmp.ne.s32.totalorder %s176, %s177
    %p189 = scmp.eq.s32.totalorder %s36, 1
    %p190 = por %p188, %p189
    %p192 = scmp.ne.s32.totalorder %s177, %s191
    %p193 = scmp.eq.s32.totalorder %s36, 0
    %p194 = por %p192, %p193
    %s196 = sadd.s32 %s195, 1
    %p199 = scmp.eq.s32.totalorder %s30, 1
    %p200 = scmp.ne.s32.totalorder %s195, %s197
    %p201 = scmp.eq.s32.totalorder %s30, 0
    %p202 = por %p200, %p201
    %p203 = scmp.ne.s32.totalorder %s195, %s197
    %p204 = scmp.eq.s32.totalorder %s35, 1
    %p205 = por %p203, %p204
    %p206 = scmp.ne.s32.totalorder %s197, %s198
    %p207 = scmp.eq.s32.totalorder %s35, 0
    %p208 = por %p206, %p207
    %p209 = scmp.ne.s32.totalorder %s197, %s198
    %p210 = scmp.eq.s32.totalorder %s36, 1
    %p211 = por %p209, %p210
    %p213 = scmp.ne.s32.totalorder %s198, %s212
    %p214 = scmp.eq.s32.totalorder %s36, 0
    %p215 = por %p213, %p214
    %s217 = sadd.s32 %s216, 1
    %p220 = scmp.eq.s32.totalorder %s30, 1
    %p221 = scmp.ne.s32.totalorder %s216, %s218
    %p222 = scmp.eq.s32.totalorder %s30, 0
    %p223 = por %p221, %p222
    %p224 = scmp.ne.s32.totalorder %s216, %s218
    %p225 = scmp.eq.s32.totalorder %s35, 1
    %p226 = por %p224, %p225
    %p227 = scmp.ne.s32.totalorder %s218, %s219
    %p228 = scmp.eq.s32.totalorder %s35, 0
    %p229 = por %p227, %p228
    %p230 = scmp.ne.s32.totalorder %s218, %s219
    %p231 = scmp.eq.s32.totalorder %s36, 1
    %p232 = por %p230, %p231
    %p234 = scmp.ne.s32.totalorder %s219, %s233
    %p235 = scmp.eq.s32.totalorder %s36, 0
    %p236 = por %p234, %p235
    %s238 = sadd.s32 %s237, 1
    %p241 = scmp.eq.s32.totalorder %s30, 1
    %p242 = scmp.ne.s32.totalorder %s237, %s239
    %p243 = scmp.eq.s32.totalorder %s30, 0
    %p244 = por %p242, %p243
    %p245 = scmp.ne.s32.totalorder %s237, %s239
    %p246 = scmp.eq.s32.totalorder %s35, 1
    %p247 = por %p245, %p246
    %p248 = scmp.ne.s32.totalorder %s239, %s240
    %p249 = scmp.eq.s32.totalorder %s35, 0
    %p250 = por %p248, %p249
    %p251 = scmp.ne.s32.totalorder %s239, %s240
    %p252 = scmp.eq.s32.totalorder %s36, 1
    %p253 = por %p251, %p252
    %p255 = scmp.ne.s32.totalorder %s240, %s254
    %p256 = scmp.eq.s32.totalorder %s36, 0
    %p257 = por %p255, %p256
    %s259 = sadd.s32 %s258, 1
    %p262 = scmp.eq.s32.totalorder %s30, 1
    %p263 = scmp.ne.s32.totalorder %s258, %s260
    %p264 = scmp.eq.s32.totalorder %s30, 0
    %p265 = por %p263, %p264
    %p266 = scmp.ne.s32.totalorder %s258, %s260
    %p267 = scmp.eq.s32.totalorder %s35, 1
    %p268 = por %p266, %p267
    %p269 = scmp.ne.s32.totalorder %s260, %s261
    %p270 = scmp.eq.s32.totalorder %s35, 0
    %p271 = por %p269, %p270
    %p272 = scmp.ne.s32.totalorder %s260, %s261
    %p273 = scmp.eq.s32.totalorder %s36, 1
    %p274 = por %p272, %p273
    %p276 = scmp.ne.s32.totalorder %s261, %s275
    %p277 = scmp.eq.s32.totalorder %s36, 0
    %p278 = por %p276, %p277
    %s280 = sadd.s32 %s279, 1
    %p283 = scmp.eq.s32.totalorder %s30, 1
    %p284 = scmp.ne.s32.totalorder %s279, %s281
    %p285 = scmp.eq.s32.totalorder %s30, 0
    %p286 = por %p284, %p285
    %p287 = scmp.ne.s32.totalorder %s279, %s281
    %p288 = scmp.eq.s32.totalorder %s35, 1
    %p289 = por %p287, %p288
    %p290 = scmp.ne.s32.totalorder %s281, %s282
    %p291 = scmp.eq.s32.totalorder %s35, 0
    %p292 = por %p290, %p291
    %p293 = scmp.ne.s32.totalorder %s281, %s282
    %p294 = scmp.eq.s32.totalorder %s36, 1
    %p295 = por %p293, %p294
    %p297 = scmp.ne.s32.totalorder %s282, %s296
    %p298 = scmp.eq.s32.totalorder %s36, 0
    %p299 = por %p297, %p298
    %s301 = sadd.s32 %s300, 1
    %p304 = scmp.eq.s32.totalorder %s30, 1
    %p305 = scmp.ne.s32.totalorder %s300, %s302
    %p306 = scmp.eq.s32.totalorder %s30, 0
    %p307 = por %p305, %p306
    %p308 = scmp.ne.s32.totalorder %s300, %s302
    %p309 = scmp.eq.s32.totalorder %s35, 1
    %p310 = por %p308, %p309
    %p311 = scmp.ne.s32.totalorder %s302, %s303
    %p312 = scmp.eq.s32.totalorder %s35, 0
    %p313 = por %p311, %p312
    %p314 = scmp.ne.s32.totalorder %s302, %s303
    %p315 = scmp.eq.s32.totalorder %s36, 1
    %p316 = por %p314, %p315
    %p318 = scmp.ne.s32.totalorder %s303, %s317
    %p319 = scmp.eq.s32.totalorder %s36, 0
    %p320 = por %p318, %p319
    %s322 = sadd.s32 %s321, 1
    %p325 = scmp.eq.s32.totalorder %s30, 1
    %p326 = scmp.ne.s32.totalorder %s321, %s323
    %p327 = scmp.eq.s32.totalorder %s30, 0
    %p328 = por %p326, %p327
    %p329 = scmp.ne.s32.totalorder %s321, %s323
    %p330 = scmp.eq.s32.totalorder %s35, 1
    %p331 = por %p329, %p330
    %p332 = scmp.ne.s32.totalorder %s323, %s324
    %p333 = scmp.eq.s32.totalorder %s35, 0
    %p334 = por %p332, %p333
    %p335 = scmp.ne.s32.totalorder %s323, %s324
    %p336 = scmp.eq.s32.totalorder %s36, 1
    %p337 = por %p335, %p336
    %p339 = scmp.ne.s32.totalorder %s324, %s338
    %p340 = scmp.eq.s32.totalorder %s36, 0
    %p341 = por %p339, %p340
    %s343 = sadd.s32 %s342, 1
    %p346 = scmp.eq.s32.totalorder %s30, 1
    %p347 = scmp.ne.s32.totalorder %s342, %s344
    %p348 = scmp.eq.s32.totalorder %s30, 0
    %p349 = por %p347, %p348
    %p350 = scmp.ne.s32.totalorder %s342, %s344
    %p351 = scmp.eq.s32.totalorder %s35, 1
    %p352 = por %p350, %p351
    %p353 = scmp.ne.s32.totalorder %s344, %s345
    %p354 = scmp.eq.s32.totalorder %s35, 0
    %p355 = por %p353, %p354
    %p356 = scmp.ne.s32.totalorder %s344, %s345
    %p357 = scmp.eq.s32.totalorder %s36, 1
    %p358 = por %p356, %p357
    %p360 = scmp.ne.s32.totalorder %s345, %s359
    %p361 = scmp.eq.s32.totalorder %s36, 0
    %p362 = por %p360, %p361
    %s364 = sadd.s32 %s363, 1
    %p367 = scmp.eq.s32.totalorder %s30, 1
    %p368 = scmp.ne.s32.totalorder %s363, %s365
    %p369 = scmp.eq.s32.totalorder %s30, 0
    %p370 = por %p368, %p369
    %p371 = scmp.ne.s32.totalorder %s363, %s365
    %p372 = scmp.eq.s32.totalorder %s35, 1
    %p373 = por %p371, %p372
    %p374 = scmp.ne.s32.totalorder %s365, %s366
    %p375 = scmp.eq.s32.totalorder %s35, 0
    %p376 = por %p374, %p375
    %p377 = scmp.ne.s32.totalorder %s365, %s366
    %p378 = scmp.eq.s32.totalorder %s36, 1
    %p379 = por %p377, %p378
    %p381 = scmp.ne.s32.totalorder %s366, %s380
    %p382 = scmp.eq.s32.totalorder %s36, 0
    %p383 = por %p381, %p382
    %s385 = sadd.s32 %s384, 1
    %p388 = scmp.eq.s32.totalorder %s30, 1
    %p389 = scmp.ne.s32.totalorder %s384, %s386
    %p390 = scmp.eq.s32.totalorder %s30, 0
    %p391 = por %p389, %p390
    %p392 = scmp.ne.s32.totalorder %s384, %s386
    %p393 = scmp.eq.s32.totalorder %s35, 1
    %p394 = por %p392, %p393
    %p395 = scmp.ne.s32.totalorder %s386, %s387
    %p396 = scmp.eq.s32.totalorder %s35, 0
    %p397 = por %p395, %p396
    %p398 = scmp.ne.s32.totalorder %s386, %s387
    %p399 = scmp.eq.s32.totalorder %s36, 1
    %p400 = por %p398, %p399
    %p402 = scmp.ne.s32.totalorder %s387, %s401
    %p403 = scmp.eq.s32.totalorder %s36, 0
    %p404 = por %p402, %p403
    %s406 = sadd.s32 %s405, 1
    %p409 = scmp.eq.s32.totalorder %s30, 1
    %p410 = scmp.ne.s32.totalorder %s405, %s407
    %p411 = scmp.eq.s32.totalorder %s30, 0
    %p412 = por %p410, %p411
    %p413 = scmp.ne.s32.totalorder %s405, %s407
    %p414 = scmp.eq.s32.totalorder %s35, 1
    %p415 = por %p413, %p414
    %p416 = scmp.ne.s32.totalorder %s407, %s408
    %p417 = scmp.eq.s32.totalorder %s35, 0
    %p418 = por %p416, %p417
    %p419 = scmp.ne.s32.totalorder %s407, %s408
    %p420 = scmp.eq.s32.totalorder %s36, 1
    %p421 = por %p419, %p420
    %p423 = scmp.ne.s32.totalorder %s408, %s422
    %p424 = scmp.eq.s32.totalorder %s36, 0
    %p425 = por %p423, %p424
    %s427 = sadd.s32 %s426, 1
    %p430 = scmp.eq.s32.totalorder %s30, 1
    %p431 = scmp.ne.s32.totalorder %s426, %s428
    %p432 = scmp.eq.s32.totalorder %s30, 0
    %p433 = por %p431, %p432
    %p434 = scmp.ne.s32.totalorder %s426, %s428
    %p435 = scmp.eq.s32.totalorder %s35, 1
    %p436 = por %p434, %p435
    %p437 = scmp.ne.s32.totalorder %s428, %s429
    %p438 = scmp.eq.s32.totalorder %s35, 0
    %p439 = por %p437, %p438
    %p440 = scmp.ne.s32.totalorder %s428, %s429
    %p441 = scmp.eq.s32.totalorder %s36, 1
    %p442 = por %p440, %p441
    %p444 = scmp.ne.s32.totalorder %s429, %s443
    %p445 = scmp.eq.s32.totalorder %s36, 0
    %p446 = por %p444, %p445
    %s448 = sadd.s32 %s447, 1
    %p451 = scmp.eq.s32.totalorder %s30, 1
    %p452 = scmp.ne.s32.totalorder %s447, %s449
    %p453 = scmp.eq.s32.totalorder %s30, 0
    %p454 = por %p452, %p453
    %p455 = scmp.ne.s32.totalorder %s447, %s449
    %p456 = scmp.eq.s32.totalorder %s35, 1
    %p457 = por %p455, %p456
    %p458 = scmp.ne.s32.totalorder %s449, %s450
    %p459 = scmp.eq.s32.totalorder %s35, 0
    %p460 = por %p458, %p459
    %p461 = scmp.ne.s32.totalorder %s449, %s450
    %p462 = scmp.eq.s32.totalorder %s36, 1
    %p463 = por %p461, %p462
    %p465 = scmp.ne.s32.totalorder %s450, %s464
    %p466 = scmp.eq.s32.totalorder %s36, 0
    %p467 = por %p465, %p466
    %s469 = sadd.s32 %s468, 1
    %p472 = scmp.eq.s32.totalorder %s30, 1
    %p473 = scmp.ne.s32.totalorder %s468, %s470
    %p474 = scmp.eq.s32.totalorder %s30, 0
    %p475 = por %p473, %p474
    %p476 = scmp.ne.s32.totalorder %s468, %s470
    %p477 = scmp.eq.s32.totalorder %s35, 1
    %p478 = por %p476, %p477
    %p479 = scmp.ne.s32.totalorder %s470, %s471
    %p480 = scmp.eq.s32.totalorder %s35, 0
    %p481 = por %p479, %p480
    %p482 = scmp.ne.s32.totalorder %s470, %s471
    %p483 = scmp.eq.s32.totalorder %s36, 1
    %p484 = por %p482, %p483
    %p486 = scmp.ne.s32.totalorder %s471, %s485
    %p487 = scmp.eq.s32.totalorder %s36, 0
    %p488 = por %p486, %p487
    %s490 = sadd.s32 %s489, 1
    %p493 = scmp.eq.s32.totalorder %s30, 1
    %p494 = scmp.ne.s32.totalorder %s489, %s491
    %p495 = scmp.eq.s32.totalorder %s30, 0
    %p496 = por %p494, %p495
    %p497 = scmp.ne.s32.totalorder %s489, %s491
    %p498 = scmp.eq.s32.totalorder %s35, 1
    %p499 = por %p497, %p498
    %p500 = scmp.ne.s32.totalorder %s491, %s492
    %p501 = scmp.eq.s32.totalorder %s35, 0
    %p502 = por %p500, %p501
    %p503 = scmp.ne.s32.totalorder %s491, %s492
    %p504 = scmp.eq.s32.totalorder %s36, 1
    %p505 = por %p503, %p504
    %p507 = scmp.ne.s32.totalorder %s492, %s506
    %p508 = scmp.eq.s32.totalorder %s36, 0
    %p509 = por %p507, %p508
    %s510 = ssub.s32 %s30, %s37
    %p511 = scmp.eq.s32.totalorder %s510, 0
    %s513 = sadd.s32 %s512, 1
    %s514 = scalar_select %p511, %s512, %s513
    %p517 = pneg %p511
    %p518 = scmp.eq.s32.totalorder %s30, 1
    %p519 = por %p517, %p518
    %p520 = scmp.ne.s32.totalorder %s512, %s515
    %p521 = scmp.eq.s32.totalorder %s30, 0
    %p522 = por %p520, %p521
    %p523 = scmp.ne.s32.totalorder %s512, %s515
    %p524 = scmp.eq.s32.totalorder %s35, 1
    %p525 = por %p523, %p524
    %p526 = scmp.ne.s32.totalorder %s515, %s516
    %p527 = scmp.eq.s32.totalorder %s35, 0
    %p528 = por %p526, %p527
    %p529 = scmp.ne.s32.totalorder %s515, %s516
    %p530 = scmp.eq.s32.totalorder %s36, 1
    %p531 = por %p529, %p530
    %p533 = scmp.ne.s32.totalorder %s516, %s532
    %p534 = scmp.eq.s32.totalorder %s36, 0
    %p535 = por %p533, %p534
    %p536 = scmp.le.s32.totalorder 1, %s30
    %p537 = scmp.lt.s32.totalorder %s30, 3
    %p538 = pnand %p536, %p537
    %p539 = pneg %p538
    // Predicated region
    $region9: #{tpu_custom_call.1} parent=5 // pred_check
      _
    $region10: #{tpu_custom_call.1} parent=5 // pred_check_branch
      %541 = sbr.rel (%p538) target = $region12
    $region11: #{tpu_custom_call.1} parent=5 // pred_region
      %s542 = ssub.s32 %s30, 1
      // Predicated region
      $region13: #{tpu_custom_call.1} parent=11 // pred_check
        %p543 = pneg %p103
      $region14: #{tpu_custom_call.1} parent=11 // pred_check_branch
        %545 = sbr.rel (%p543) target = $region16
      $region15: #{tpu_custom_call.1} parent=11 // pred_region
        _
      $region16: #{tpu_custom_call.1} parent=11 // pred_fallthru
        _
      // Predicated region
      $region17: #{tpu_custom_call.1} parent=11 // pred_check
        %p546 = pneg %p124
      $region18: #{tpu_custom_call.1} parent=11 // pred_check_branch
        %548 = sbr.rel (%p546) target = $region20
      $region19: #{tpu_custom_call.1} parent=11 // pred_region
        _
      $region20: #{tpu_custom_call.1} parent=11 // pred_fallthru
        _
      // Predicated region
      $region21: #{tpu_custom_call.1} parent=11 // pred_check
        %p549 = pneg %p145
      $region22: #{tpu_custom_call.1} parent=11 // pred_check_branch
        %551 = sbr.rel (%p549) target = $region24
      $region23: #{tpu_custom_call.1} parent=11 // pred_region
        _
      $region24: #{tpu_custom_call.1} parent=11 // pred_fallthru
        _
      // Predicated region
      $region25: #{tpu_custom_call.1} parent=11 // pred_check
        %p552 = pneg %p166
      $region26: #{tpu_custom_call.1} parent=11 // pred_check_branch
        %554 = sbr.rel (%p552) target = $region28
      $region27: #{tpu_custom_call.1} parent=11 // pred_region
        _
      $region28: #{tpu_custom_call.1} parent=11 // pred_fallthru
        _
      // Predicated region
      $region29: #{tpu_custom_call.1} parent=11 // pred_check
        %p555 = pneg %p187
      $region30: #{tpu_custom_call.1} parent=11 // pred_check_branch
        %557 = sbr.rel (%p555) target = $region32
      $region31: #{tpu_custom_call.1} parent=11 // pred_region
        _
      $region32: #{tpu_custom_call.1} parent=11 // pred_fallthru
        _
      // Predicated region
      $region33: #{tpu_custom_call.1} parent=11 // pred_check
        %p558 = pneg %p208
      $region34: #{tpu_custom_call.1} parent=11 // pred_check_branch
        %560 = sbr.rel (%p558) target = $region36
      $region35: #{tpu_custom_call.1} parent=11 // pred_region
        _
      $region36: #{tpu_custom_call.1} parent=11 // pred_fallthru
        _
      // Predicated region
      $region37: #{tpu_custom_call.1} parent=11 // pred_check
        %p561 = pneg %p229
      $region38: #{tpu_custom_call.1} parent=11 // pred_check_branch
        %563 = sbr.rel (%p561) target = $region40
      $region39: #{tpu_custom_call.1} parent=11 // pred_region
        _
      $region40: #{tpu_custom_call.1} parent=11 // pred_fallthru
        _
      // Predicated region
      $region41: #{tpu_custom_call.1} parent=11 // pred_check
        %p564 = pneg %p250
      $region42: #{tpu_custom_call.1} parent=11 // pred_check_branch
        %566 = sbr.rel (%p564) target = $region44
      $region43: #{tpu_custom_call.1} parent=11 // pred_region
        _
      $region44: #{tpu_custom_call.1} parent=11 // pred_fallthru
        _
      // Predicated region
      $region45: #{tpu_custom_call.1} parent=11 // pred_check
        %p567 = pneg %p271
      $region46: #{tpu_custom_call.1} parent=11 // pred_check_branch
        %569 = sbr.rel (%p567) target = $region48
      $region47: #{tpu_custom_call.1} parent=11 // pred_region
        _
      $region48: #{tpu_custom_call.1} parent=11 // pred_fallthru
        _
      // Predicated region
      $region49: #{tpu_custom_call.1} parent=11 // pred_check
        %p570 = pneg %p292
      $region50: #{tpu_custom_call.1} parent=11 // pred_check_branch
        %572 = sbr.rel (%p570) target = $region52
      $region51: #{tpu_custom_call.1} parent=11 // pred_region
        _
      $region52: #{tpu_custom_call.1} parent=11 // pred_fallthru
        _
      // Predicated region
      $region53: #{tpu_custom_call.1} parent=11 // pred_check
        %p573 = pneg %p313
      $region54: #{tpu_custom_call.1} parent=11 // pred_check_branch
        %575 = sbr.rel (%p573) target = $region56
      $region55: #{tpu_custom_call.1} parent=11 // pred_region
        _
      $region56: #{tpu_custom_call.1} parent=11 // pred_fallthru
        _
      // Predicated region
      $region57: #{tpu_custom_call.1} parent=11 // pred_check
        %p576 = pneg %p334
      $region58: #{tpu_custom_call.1} parent=11 // pred_check_branch
        %578 = sbr.rel (%p576) target = $region60
      $region59: #{tpu_custom_call.1} parent=11 // pred_region
        _
      $region60: #{tpu_custom_call.1} parent=11 // pred_fallthru
        _
      // Predicated region
      $region61: #{tpu_custom_call.1} parent=11 // pred_check
        %p579 = pneg %p355
      $region62: #{tpu_custom_call.1} parent=11 // pred_check_branch
        %581 = sbr.rel (%p579) target = $region64
      $region63: #{tpu_custom_call.1} parent=11 // pred_region
        _
      $region64: #{tpu_custom_call.1} parent=11 // pred_fallthru
        _
      // Predicated region
      $region65: #{tpu_custom_call.1} parent=11 // pred_check
        %p582 = pneg %p376
      $region66: #{tpu_custom_call.1} parent=11 // pred_check_branch
        %584 = sbr.rel (%p582) target = $region68
      $region67: #{tpu_custom_call.1} parent=11 // pred_region
        _
      $region68: #{tpu_custom_call.1} parent=11 // pred_fallthru
        _
      // Predicated region
      $region69: #{tpu_custom_call.1} parent=11 // pred_check
        %p585 = pneg %p397
      $region70: #{tpu_custom_call.1} parent=11 // pred_check_branch
        %587 = sbr.rel (%p585) target = $region72
      $region71: #{tpu_custom_call.1} parent=11 // pred_region
        _
      $region72: #{tpu_custom_call.1} parent=11 // pred_fallthru
        _
      // Predicated region
      $region73: #{tpu_custom_call.1} parent=11 // pred_check
        %p588 = pneg %p418
      $region74: #{tpu_custom_call.1} parent=11 // pred_check_branch
        %590 = sbr.rel (%p588) target = $region76
      $region75: #{tpu_custom_call.1} parent=11 // pred_region
        _
      $region76: #{tpu_custom_call.1} parent=11 // pred_fallthru
        _
      // Predicated region
      $region77: #{tpu_custom_call.1} parent=11 // pred_check
        %p591 = pneg %p439
      $region78: #{tpu_custom_call.1} parent=11 // pred_check_branch
        %593 = sbr.rel (%p591) target = $region80
      $region79: #{tpu_custom_call.1} parent=11 // pred_region
        _
      $region80: #{tpu_custom_call.1} parent=11 // pred_fallthru
        _
      // Predicated region
      $region81: #{tpu_custom_call.1} parent=11 // pred_check
        %p594 = pneg %p460
      $region82: #{tpu_custom_call.1} parent=11 // pred_check_branch
        %596 = sbr.rel (%p594) target = $region84
      $region83: #{tpu_custom_call.1} parent=11 // pred_region
        _
      $region84: #{tpu_custom_call.1} parent=11 // pred_fallthru
        _
      // Predicated region
      $region85: #{tpu_custom_call.1} parent=11 // pred_check
        %p597 = pneg %p481
      $region86: #{tpu_custom_call.1} parent=11 // pred_check_branch
        %599 = sbr.rel (%p597) target = $region88
      $region87: #{tpu_custom_call.1} parent=11 // pred_region
        _
      $region88: #{tpu_custom_call.1} parent=11 // pred_fallthru
        _
      // Predicated region
      $region89: #{tpu_custom_call.1} parent=11 // pred_check
        %p600 = pneg %p502
      $region90: #{tpu_custom_call.1} parent=11 // pred_check_branch
        %602 = sbr.rel (%p600) target = $region92
      $region91: #{tpu_custom_call.1} parent=11 // pred_region
        _
      $region92: #{tpu_custom_call.1} parent=11 // pred_fallthru
        _
    $region12: #{tpu_custom_call.1} parent=5 // pred_fallthru
      _
    %p603 = scmp.lt.s32.totalorder %s30, 2
    // Predicated region
    $region93: #{tpu_custom_call.1} parent=5 // pred_check
      %p604 = pneg %p603
    $region94: #{tpu_custom_call.1} parent=5 // pred_check_branch
      %606 = sbr.rel (%p604) target = $region96
    $region95: #{tpu_custom_call.1} parent=5 // pred_region
      // Predicated region
      $region97: #{tpu_custom_call.1} parent=95 // pred_check
        %p607 = pneg %p50
      $region98: #{tpu_custom_call.1} parent=95 // pred_check_branch
        %609 = sbr.rel (%p607) target = $region100
      $region99: #{tpu_custom_call.1} parent=95 // pred_region
        %p610 = scmp.lt.s32.totalorder %s30, 1
        %s611 = scalar_select %p610, %s30, 1
        %s612 = smul.addr %s611, 8
        %s613 = scalar_lea.vmem %s0, %s612
      $region100: #{tpu_custom_call.1} parent=95 // pred_fallthru
        _
      // Predicated region
      $region101: #{tpu_custom_call.1} parent=95 // pred_check
        %p614 = pneg %p76
      $region102: #{tpu_custom_call.1} parent=95 // pred_check_branch
        %616 = sbr.rel (%p614) target = $region104
      $region103: #{tpu_custom_call.1} parent=95 // pred_region
        %p617 = scmp.lt.s32.totalorder %s30, 1
        %s618 = scalar_select %p617, %s30, 1
        %s619 = scalar_lea.vmem %s1, %s618
      $region104: #{tpu_custom_call.1} parent=95 // pred_fallthru
        _
    $region96: #{tpu_custom_call.1} parent=5 // pred_fallthru
      _
    %p620 = scmp.le.s32.totalorder 1, %s30
    %p621 = scmp.lt.s32.totalorder %s30, 3
    %p622 = pnand %p620, %p621
    %p623 = pneg %p622
    // Predicated region
    $region105: #{tpu_custom_call.1} parent=5 // pred_check
      _
    $region106: #{tpu_custom_call.1} parent=5 // pred_check_branch
      %625 = sbr.rel (%p622) target = $region108
    $region107: #{tpu_custom_call.1} parent=5 // pred_region
      %s626 = ssub.s32 %s30, 1
      %p627 = scmp.lt.s32.totalorder %s35, 1
      %s628 = scalar_select %p627, %s35, 1
      %s629 = smul.addr %s628, 8
      %s630 = scalar_lea.vmem %s0, %s629
      %p631 = pneg %p56
      %p632 = pneg %p53
      %p633 = scmp.lt.s32.totalorder %s35, 1
      %s634 = scalar_select %p633, %s35, 1
      %s635 = scalar_lea.vmem %s1, %s634
      %p636 = pneg %p82
      %p637 = pneg %p79
      %p638 = pneg %p103
      %p639 = pneg %p100
      %p640 = pneg %p124
      %p641 = pneg %p121
      %p642 = pneg %p145
      %p643 = pneg %p142
      %p644 = pneg %p166
      %p645 = pneg %p163
      %p646 = pneg %p187
      %p647 = pneg %p184
      %p648 = pneg %p208
      %p649 = pneg %p205
      %p650 = pneg %p229
      %p651 = pneg %p226
      %p652 = pneg %p250
      %p653 = pneg %p247
      %p654 = pneg %p271
      %p655 = pneg %p268
      %p656 = pneg %p292
      %p657 = pneg %p289
      %p658 = pneg %p313
      %p659 = pneg %p310
      %p660 = pneg %p334
      %p661 = pneg %p331
      %p662 = pneg %p355
      %p663 = pneg %p352
      %p664 = pneg %p376
      %p665 = pneg %p373
      %p666 = pneg %p397
      %p667 = pneg %p394
      %p668 = pneg %p418
      %p669 = pneg %p415
      %p670 = pneg %p439
      %p671 = pneg %p436
      %p672 = pneg %p460
      %p673 = pneg %p457
      %p674 = pneg %p481
      %p675 = pneg %p478
      %p676 = pneg %p502
      %p677 = pneg %p499
      %p678 = pneg %p528
      %p679 = pneg %p525
      %p680 = scmp.lt.s32.totalorder %s35, 1
      %s681 = scalar_select %p680, %s35, 1
      %s682 = scalar_lea.vmem %s22, %s681
      %p683 = scmp.lt.s32.totalorder %s35, 1
      %s684 = scalar_select %p683, %s35, 1
      %s685 = smul.addr %s684, 8
      %s686 = scalar_lea.vmem %s0, %s685
      %p687 = scmp.lt.s32.totalorder %s35, 1
      %s688 = scalar_select %p687, %s35, 1
      %s689 = scalar_lea.vmem %s1, %s688
      %p690 = scmp.lt.s32.totalorder %s35, 1
      %s691 = scalar_select %p690, %s35, 1
      %s692 = scalar_lea.vmem %s22, %s691
      %v694 = vld [vmem:[%s686] sm:$0xff]
      %v695 = vld [vmem:[%s2] sm:$0x1]
      %v696 = vld [vmem:[%s3] sm:$0x1]
      %vm697 = vcmask 261120
      %v698 = vsel %vm697, %v694, 0.0
      %699 = vadd.xlane.f32.xlu0 %v698
      %v700 = vpop.xlane.xlu0 %699
      %v701 = vrcp.pop 32.0
      %v702 = vmul.f32 %v700, %v701
      %v703 = vsub.f32 %v694, %v702
      %v704 = vmul.f32 %v703, %v703
      %v705 = vsel %vm697, %v704, 0.0
      %706 = vadd.xlane.f32.xlu0 %v705
      %v707 = vpop.xlane.xlu0 %706
      %v708 = vmul.f32 %v707, %v701
      %v709 = vadd.f32 %v708, 1e-12
      %v710 = vrsqrt.pop %v709
      %v711 = vmul.f32 %v703, %v710
      %v713 = vlaneseq
      %v714 = vshrl.u32 %v713, 7
      %v715 = vsub.s32 0, %v714
      %v716 = vrot.slane %v695, %v715
      %v718 = vmul.f32 %v711, %v716
      %v720 = vlaneseq
      %v721 = vshrl.u32 %v720, 7
      %v722 = vsub.s32 0, %v721
      %v723 = vrot.slane %v696, %v722
      %v725 = vadd.f32 %v718, %v723
      %v726 = vld [vmem:[%s689] sm:$0x1]
      %v727 = vpack.c.bf16 %v725, %v725
      %v728 = vld [vmem:[%s4] sm:$0xf]
      %v729 = vld [vmem:[%s4 + $0x4] sm:$0xf]
      %v730 = vld [vmem:[%s4 + $0x8] sm:$0xf]
      %v731 = vld [vmem:[%s4 + $0xc] sm:$0xf]
      %v732 = vld [vmem:[%s5] sm:$0x1]
      %v734 = vlaneseq
      %v735 = vshrl.u32 %v734, 7
      %v736 = vsub.s32 0, %v735
      %v737 = vrot.slane %v732, %v736
      %v743 = vunpack.c.l.b16 %v728
      %v744 = vunpack.c.l.b16 %v729
      %v745 = vunpack.c.l.b16 %v730
      %v746 = vunpack.c.l.b16 %v731
      %v747 = vpack.c.b16 %v744, %v743
      %v748 = vpack.c.b16 %v746, %v745
      %v752 = vsel %vm697, %v727, 0
      %754 = vmatprep.subr.bf16.mxu0 0
      %755 = vmatpush1.bf16.msra.mxu0 0
      %756 = vmatprep.subr.bf16.mxu0 0
      %757 = vmatpush1.bf16.msra.mxu0 0
      %758 = vmatprep.subr.bf16.mxu0 0
      %759 = vmatpush1.bf16.msra.mxu0 0
      %760 = vmatprep.subr.bf16.mxu0 0
      %761 = vmatpush1.bf16.msra.mxu0 0
      %762 = vmatprep.subr.bf16.mxu0 0
      %763 = vmatpush1.bf16.msra.mxu0 0
      %764 = vmatprep.subr.bf16.mxu0 0
      %765 = vmatpush1.bf16.msra.mxu0 0
      %766 = vmatprep.subr.bf16.mxu0 0
      %767 = vmatpush1.bf16.msra.mxu0 %v748
      %768 = vmatprep.subr.bf16.mxu0 0
      %769 = vmatpush1.bf16.msra.mxu0 %v747
      %770 = vmatprep.subr.bf16.mxu0 0
      %771 = vmatpush2.bf16.msra.mxu0 0
      %772 = vmatprep.subr.bf16.mxu0 0
      %773 = vmatpush2.bf16.msra.mxu0 0
      %774 = vmatprep.subr.bf16.mxu0 0
      %775 = vmatpush2.bf16.msra.mxu0 0
      %776 = vmatprep.subr.bf16.mxu0 0
      %777 = vmatpush2.bf16.msra.mxu0 0
      %778 = vmatprep.subr.bf16.mxu0 0
      %779 = vmatpush2.bf16.msra.mxu0 0
      %780 = vmatprep.subr.bf16.mxu0 0
      %781 = vmatpush2.bf16.msra.mxu0 0
      %782 = vmatprep.subr.bf16.mxu0 0
      %783 = vmatpush2.bf16.msra.mxu0 0
      %784 = vmatprep.subr.bf16.mxu0 0
      %785 = vmatpush2.bf16.msra.mxu0 0
      %786 = vmatprep.mubr.bf16.mxu0 0
      %787 = vmatmul.mubr.bf16.gmra.mxu0 %v752
      %v788 = vpop.f32.mrf.mxu0
      %v789 = vadd.f32 %v737, %v788
      %v790 = vpop.f32.mrf.mxu0
      %v791 = vpop.f32.mrf.mxu0
      %v792 = vpop.f32.mrf.mxu0
      %793 = vdwg.mxu0
      %v794 = vld [vmem:[%s6] sm:$0xf]
      %v795 = vld [vmem:[%s6 + $0x4] sm:$0xf]
      %v796 = vld [vmem:[%s6 + $0x8] sm:$0xf]
      %v797 = vld [vmem:[%s6 + $0xc] sm:$0xf]
      %v798 = vld [vmem:[%s7] sm:$0x1]
      %v800 = vlaneseq
      %v801 = vshrl.u32 %v800, 7
      %v802 = vsub.s32 0, %v801
      %v803 = vrot.slane %v798, %v802
      %v809 = vunpack.c.l.b16 %v794
      %v810 = vunpack.c.l.b16 %v795
      %v811 = vunpack.c.l.b16 %v796
      %v812 = vunpack.c.l.b16 %v797
      %v813 = vpack.c.b16 %v810, %v809
      %v814 = vpack.c.b16 %v812, %v811
      %817 = vmatprep.subr.bf16.mxu0 0
      %818 = vmatpush1.bf16.msra.mxu0 0
      %819 = vmatprep.subr.bf16.mxu0 0
      %820 = vmatpush1.bf16.msra.mxu0 0
      %821 = vmatprep.subr.bf16.mxu0 0
      %822 = vmatpush1.bf16.msra.mxu0 0
      %823 = vmatprep.subr.bf16.mxu0 0
      %824 = vmatpush1.bf16.msra.mxu0 0
      %825 = vmatprep.subr.bf16.mxu0 0
      %826 = vmatpush1.bf16.msra.mxu0 0
      %827 = vmatprep.subr.bf16.mxu0 0
      %828 = vmatpush1.bf16.msra.mxu0 0
      %829 = vmatprep.subr.bf16.mxu0 0
      %830 = vmatpush1.bf16.msra.mxu0 %v814
      %831 = vmatprep.subr.bf16.mxu0 0
      %832 = vmatpush1.bf16.msra.mxu0 %v813
      %833 = vmatprep.subr.bf16.mxu0 0
      %834 = vmatpush2.bf16.msra.mxu0 0
      %835 = vmatprep.subr.bf16.mxu0 0
      %836 = vmatpush2.bf16.msra.mxu0 0
      %837 = vmatprep.subr.bf16.mxu0 0
      %838 = vmatpush2.bf16.msra.mxu0 0
      %839 = vmatprep.subr.bf16.mxu0 0
      %840 = vmatpush2.bf16.msra.mxu0 0
      %841 = vmatprep.subr.bf16.mxu0 0
      %842 = vmatpush2.bf16.msra.mxu0 0
      %843 = vmatprep.subr.bf16.mxu0 0
      %844 = vmatpush2.bf16.msra.mxu0 0
      %845 = vmatprep.subr.bf16.mxu0 0
      %846 = vmatpush2.bf16.msra.mxu0 0
      %847 = vmatprep.subr.bf16.mxu0 0
      %848 = vmatpush2.bf16.msra.mxu0 0
      %849 = vmatprep.mubr.bf16.mxu0 0
      %850 = vmatmul.mubr.bf16.gmra.mxu0 %v752
      %v851 = vpop.f32.mrf.mxu0
      %v852 = vadd.f32 %v803, %v851
      %v853 = vpop.f32.mrf.mxu0
      %v854 = vpop.f32.mrf.mxu0
      %v855 = vpop.f32.mrf.mxu0
      %856 = vdwg.mxu0
      %v857 = vld [vmem:[%s8] sm:$0xf]
      %v858 = vld [vmem:[%s8 + $0x4] sm:$0xf]
      %v859 = vld [vmem:[%s8 + $0x8] sm:$0xf]
      %v860 = vld [vmem:[%s8 + $0xc] sm:$0xf]
      %v861 = vld [vmem:[%s9] sm:$0x1]
      %v863 = vlaneseq
      %v864 = vshrl.u32 %v863, 7
      %v865 = vsub.s32 0, %v864
      %v866 = vrot.slane %v861, %v865
      %v872 = vunpack.c.l.b16 %v857
      %v873 = vunpack.c.l.b16 %v858
      %v874 = vunpack.c.l.b16 %v859
      %v875 = vunpack.c.l.b16 %v860
      %v876 = vpack.c.b16 %v873, %v872
      %v877 = vpack.c.b16 %v875, %v874
      %880 = vmatprep.subr.bf16.mxu0 0
      %881 = vmatpush1.bf16.msra.mxu0 0
      %882 = vmatprep.subr.bf16.mxu0 0
      %883 = vmatpush1.bf16.msra.mxu0 0
      %884 = vmatprep.subr.bf16.mxu0 0
      %885 = vmatpush1.bf16.msra.mxu0 0
      %886 = vmatprep.subr.bf16.mxu0 0
      %887 = vmatpush1.bf16.msra.mxu0 0
      %888 = vmatprep.subr.bf16.mxu0 0
      %889 = vmatpush1.bf16.msra.mxu0 0
      %890 = vmatprep.subr.bf16.mxu0 0
      %891 = vmatpush1.bf16.msra.mxu0 0
      %892 = vmatprep.subr.bf16.mxu0 0
      %893 = vmatpush1.bf16.msra.mxu0 %v877
      %894 = vmatprep.subr.bf16.mxu0 0
      %895 = vmatpush1.bf16.msra.mxu0 %v876
      %896 = vmatprep.subr.bf16.mxu0 0
      %897 = vmatpush2.bf16.msra.mxu0 0
      %898 = vmatprep.subr.bf16.mxu0 0
      %899 = vmatpush2.bf16.msra.mxu0 0
      %900 = vmatprep.subr.bf16.mxu0 0
      %901 = vmatpush2.bf16.msra.mxu0 0
      %902 = vmatprep.subr.bf16.mxu0 0
      %903 = vmatpush2.bf16.msra.mxu0 0
      %904 = vmatprep.subr.bf16.mxu0 0
      %905 = vmatpush2.bf16.msra.mxu0 0
      %906 = vmatprep.subr.bf16.mxu0 0
      %907 = vmatpush2.bf16.msra.mxu0 0
      %908 = vmatprep.subr.bf16.mxu0 0
      %909 = vmatpush2.bf16.msra.mxu0 0
      %910 = vmatprep.subr.bf16.mxu0 0
      %911 = vmatpush2.bf16.msra.mxu0 0
      %912 = vmatprep.mubr.bf16.mxu0 0
      %913 = vmatmul.mubr.bf16.gmra.mxu0 %v752
      %v914 = vpop.f32.mrf.mxu0
      %v915 = vadd.f32 %v866, %v914
      %v916 = vpop.f32.mrf.mxu0
      %v917 = vpop.f32.mrf.mxu0
      %v918 = vpop.f32.mrf.mxu0
      %919 = vdwg.mxu0
      %v920 = vpack.c.bf16 %v789, %v789
      %v921 = vpack.c.bf16 %v852, %v852
      %vm922 = vcmask 64512
      %v924 = vsel %vm922, %v920, 0
      %v927 = vsel %vm922, %v921, 0
      %929 = vmatprep.subr.bf16.mxu0 0
      %930 = vmatpush1.bf16.xpose.msra.mxu0 0
      %931 = vmatprep.subr.bf16.mxu0 0
      %932 = vmatpush1.bf16.xpose.msra.mxu0 0
      %933 = vmatprep.subr.bf16.mxu0 0
      %934 = vmatpush1.bf16.xpose.msra.mxu0 0
      %935 = vmatprep.subr.bf16.mxu0 0
      %936 = vmatpush1.bf16.xpose.msra.mxu0 0
      %937 = vmatprep.subr.bf16.mxu0 0
      %938 = vmatpush1.bf16.xpose.msra.mxu0 0
      %939 = vmatprep.subr.bf16.mxu0 0
      %940 = vmatpush1.bf16.xpose.msra.mxu0 0
      %941 = vmatprep.subr.bf16.mxu0 0
      %942 = vmatpush1.bf16.xpose.msra.mxu0 0
      %943 = vmatprep.subr.bf16.mxu0 0
      %944 = vmatpush1.bf16.xpose.msra.mxu0 %v927
      %945 = vmatprep.subr.bf16.mxu0 0
      %946 = vmatpush2.bf16.xpose.msra.mxu0 0
      %947 = vmatprep.subr.bf16.mxu0 0
      %948 = vmatpush2.bf16.xpose.msra.mxu0 0
      %949 = vmatprep.subr.bf16.mxu0 0
      %950 = vmatpush2.bf16.xpose.msra.mxu0 0
      %951 = vmatprep.subr.bf16.mxu0 0
      %952 = vmatpush2.bf16.xpose.msra.mxu0 0
      %953 = vmatprep.subr.bf16.mxu0 0
      %954 = vmatpush2.bf16.xpose.msra.mxu0 0
      %955 = vmatprep.subr.bf16.mxu0 0
      %956 = vmatpush2.bf16.xpose.msra.mxu0 0
      %957 = vmatprep.subr.bf16.mxu0 0
      %958 = vmatpush2.bf16.xpose.msra.mxu0 0
      %959 = vmatprep.subr.bf16.mxu0 0
      %960 = vmatpush2.bf16.xpose.msra.mxu0 0
      %961 = vmatprep.mubr.bf16.mxu0 0
      %962 = vmatmul.mubr.bf16.gmra.mxu0 %v924
      %v963 = vpop.f32.mrf.mxu0
      %v964 = vadd.f32 0.0, %v963
      %v965 = vpop.f32.mrf.mxu0
      %v966 = vpop.f32.mrf.mxu0
      %v967 = vpop.f32.mrf.mxu0
      %968 = vdwg.mxu0
      %v969 = vmul.f32 %v964, 0.35355338
      %v971 = vlaneseq
      %v972 = vshrl.u32 %v971, 7
      %v973 = vsub.s32 0, %v972
      %v974 = vrot.slane %v726, %v973
      %v976 = vadd.f32 %v969, %v974
      %v977 = vsel %vm922, %v976, -inf
      %978 = vmax.xlane.f32.xlu0 %v977
      %v979 = vpop.xlane.xlu0 %978
      %v980 = vsub.f32 %v976, %v979
      %v981 = vmul.f32 %v980, 1.442695
      %v982 = vpow.pop %v981
      %v983 = vsel %vm922, %v982, 0.0
      %984 = vadd.xlane.f32.xlu0 %v983
      %v985 = vpop.xlane.xlu0 %984
      %v986 = vrcp.pop %v985
      %v987 = vmul.f32 %v982, %v986
      %v988 = vpack.c.bf16 %v987, %v987
      %v989 = vpack.c.bf16 %v915, %v915
      %v991 = vsel %vm922, %v988, 0
      %vm993 = vcmask 1043456
      %v995 = vsel %vm993, %v989, 0
      %997 = vmatprep.subr.bf16.mxu0 0
      %998 = vmatpush1.bf16.msra.mxu0 0
      %999 = vmatprep.subr.bf16.mxu0 0
      %1000 = vmatpush1.bf16.msra.mxu0 0
      %1001 = vmatprep.subr.bf16.mxu0 0
      %1002 = vmatpush1.bf16.msra.mxu0 0
      %1003 = vmatprep.subr.bf16.mxu0 0
      %1004 = vmatpush1.bf16.msra.mxu0 0
      %1005 = vmatprep.subr.bf16.mxu0 0
      %1006 = vmatpush1.bf16.msra.mxu0 0
      %1007 = vmatprep.subr.bf16.mxu0 0
      %1008 = vmatpush1.bf16.msra.mxu0 0
      %1009 = vmatprep.subr.bf16.mxu0 0
      %1010 = vmatpush1.bf16.msra.mxu0 0
      %1011 = vmatprep.subr.bf16.mxu0 0
      %1012 = vmatpush1.bf16.msra.mxu0 %v995
      %1013 = vmatprep.subr.bf16.mxu0 0
      %1014 = vmatpush2.bf16.msra.mxu0 0
      %1015 = vmatprep.subr.bf16.mxu0 0
      %1016 = vmatpush2.bf16.msra.mxu0 0
      %1017 = vmatprep.subr.bf16.mxu0 0
      %1018 = vmatpush2.bf16.msra.mxu0 0
      %1019 = vmatprep.subr.bf16.mxu0 0
      %1020 = vmatpush2.bf16.msra.mxu0 0
      %1021 = vmatprep.subr.bf16.mxu0 0
      %1022 = vmatpush2.bf16.msra.mxu0 0
      %1023 = vmatprep.subr.bf16.mxu0 0
      %1024 = vmatpush2.bf16.msra.mxu0 0
      %1025 = vmatprep.subr.bf16.mxu0 0
      %1026 = vmatpush2.bf16.msra.mxu0 0
      %1027 = vmatprep.subr.bf16.mxu0 0
      %1028 = vmatpush2.bf16.msra.mxu0 0
      %1029 = vmatprep.mubr.bf16.mxu0 0
      %1030 = vmatmul.mubr.bf16.gmra.mxu0 %v991
      %v1031 = vpop.f32.mrf.mxu0
      %v1032 = vadd.f32 0.0, %v1031
      %v1033 = vpop.f32.mrf.mxu0
      %v1034 = vpop.f32.mrf.mxu0
      %v1035 = vpop.f32.mrf.mxu0
      %1036 = vdwg.mxu0
      %v1037 = vpack.c.bf16 %v1032, %v1032
      %v1038 = vld [vmem:[%s10] sm:$0xf]
      %s1039 = scalar_lea.vmem %s4, 16
      %v1040 = vld [vmem:[%s1039] sm:$0xf]
      %v1041 = vld [vmem:[%s1039 + $0x4] sm:$0xf]
      %v1042 = vld [vmem:[%s1039 + $0x8] sm:$0xf]
      %v1043 = vld [vmem:[%s1039 + $0xc] sm:$0xf]
      %s1044 = scalar_lea.vmem %s5, 1
      %v1045 = vld [vmem:[%s1044] sm:$0x1]
      %v1047 = vlaneseq
      %v1048 = vshrl.u32 %v1047, 7
      %v1049 = vsub.s32 0, %v1048
      %v1050 = vrot.slane %v1045, %v1049
      %v1056 = vunpack.c.l.b16 %v1040
      %v1057 = vunpack.c.l.b16 %v1041
      %v1058 = vunpack.c.l.b16 %v1042
      %v1059 = vunpack.c.l.b16 %v1043
      %v1060 = vpack.c.b16 %v1057, %v1056
      %v1061 = vpack.c.b16 %v1059, %v1058
      %1064 = vmatprep.subr.bf16.mxu0 0
      %1065 = vmatpush1.bf16.msra.mxu0 0
      %1066 = vmatprep.subr.bf16.mxu0 0
      %1067 = vmatpush1.bf16.msra.mxu0 0
      %1068 = vmatprep.subr.bf16.mxu0 0
      %1069 = vmatpush1.bf16.msra.mxu0 0
      %1070 = vmatprep.subr.bf16.mxu0 0
      %1071 = vmatpush1.bf16.msra.mxu0 0
      %1072 = vmatprep.subr.bf16.mxu0 0
      %1073 = vmatpush1.bf16.msra.mxu0 0
      %1074 = vmatprep.subr.bf16.mxu0 0
      %1075 = vmatpush1.bf16.msra.mxu0 0
      %1076 = vmatprep.subr.bf16.mxu0 0
      %1077 = vmatpush1.bf16.msra.mxu0 %v1061
      %1078 = vmatprep.subr.bf16.mxu0 0
      %1079 = vmatpush1.bf16.msra.mxu0 %v1060
      %1080 = vmatprep.subr.bf16.mxu0 0
      %1081 = vmatpush2.bf16.msra.mxu0 0
      %1082 = vmatprep.subr.bf16.mxu0 0
      %1083 = vmatpush2.bf16.msra.mxu0 0
      %1084 = vmatprep.subr.bf16.mxu0 0
      %1085 = vmatpush2.bf16.msra.mxu0 0
      %1086 = vmatprep.subr.bf16.mxu0 0
      %1087 = vmatpush2.bf16.msra.mxu0 0
      %1088 = vmatprep.subr.bf16.mxu0 0
      %1089 = vmatpush2.bf16.msra.mxu0 0
      %1090 = vmatprep.subr.bf16.mxu0 0
      %1091 = vmatpush2.bf16.msra.mxu0 0
      %1092 = vmatprep.subr.bf16.mxu0 0
      %1093 = vmatpush2.bf16.msra.mxu0 0
      %1094 = vmatprep.subr.bf16.mxu0 0
      %1095 = vmatpush2.bf16.msra.mxu0 0
      %1096 = vmatprep.mubr.bf16.mxu0 0
      %1097 = vmatmul.mubr.bf16.gmra.mxu0 %v752
      %v1098 = vpop.f32.mrf.mxu0
      %v1099 = vadd.f32 %v1050, %v1098
      %v1100 = vpop.f32.mrf.mxu0
      %v1101 = vpop.f32.mrf.mxu0
      %v1102 = vpop.f32.mrf.mxu0
      %1103 = vdwg.mxu0
      %s1104 = scalar_lea.vmem %s6, 16
      %v1105 = vld [vmem:[%s1104] sm:$0xf]
      %v1106 = vld [vmem:[%s1104 + $0x4] sm:$0xf]
      %v1107 = vld [vmem:[%s1104 + $0x8] sm:$0xf]
      %v1108 = vld [vmem:[%s1104 + $0xc] sm:$0xf]
      %s1109 = scalar_lea.vmem %s7, 1
      %v1110 = vld [vmem:[%s1109] sm:$0x1]
      %v1112 = vlaneseq
      %v1113 = vshrl.u32 %v1112, 7
      %v1114 = vsub.s32 0, %v1113
      %v1115 = vrot.slane %v1110, %v1114
      %v1121 = vunpack.c.l.b16 %v1105
      %v1122 = vunpack.c.l.b16 %v1106
      %v1123 = vunpack.c.l.b16 %v1107
      %v1124 = vunpack.c.l.b16 %v1108
      %v1125 = vpack.c.b16 %v1122, %v1121
      %v1126 = vpack.c.b16 %v1124, %v1123
      %1129 = vmatprep.subr.bf16.mxu0 0
      %1130 = vmatpush1.bf16.msra.mxu0 0
      %1131 = vmatprep.subr.bf16.mxu0 0
      %1132 = vmatpush1.bf16.msra.mxu0 0
      %1133 = vmatprep.subr.bf16.mxu0 0
      %1134 = vmatpush1.bf16.msra.mxu0 0
      %1135 = vmatprep.subr.bf16.mxu0 0
      %1136 = vmatpush1.bf16.msra.mxu0 0
      %1137 = vmatprep.subr.bf16.mxu0 0
      %1138 = vmatpush1.bf16.msra.mxu0 0
      %1139 = vmatprep.subr.bf16.mxu0 0
      %1140 = vmatpush1.bf16.msra.mxu0 0
      %1141 = vmatprep.subr.bf16.mxu0 0
      %1142 = vmatpush1.bf16.msra.mxu0 %v1126
      %1143 = vmatprep.subr.bf16.mxu0 0
      %1144 = vmatpush1.bf16.msra.mxu0 %v1125
      %1145 = vmatprep.subr.bf16.mxu0 0
      %1146 = vmatpush2.bf16.msra.mxu0 0
      %1147 = vmatprep.subr.bf16.mxu0 0
      %1148 = vmatpush2.bf16.msra.mxu0 0
      %1149 = vmatprep.subr.bf16.mxu0 0
      %1150 = vmatpush2.bf16.msra.mxu0 0
      %1151 = vmatprep.subr.bf16.mxu0 0
      %1152 = vmatpush2.bf16.msra.mxu0 0
      %1153 = vmatprep.subr.bf16.mxu0 0
      %1154 = vmatpush2.bf16.msra.mxu0 0
      %1155 = vmatprep.subr.bf16.mxu0 0
      %1156 = vmatpush2.bf16.msra.mxu0 0
      %1157 = vmatprep.subr.bf16.mxu0 0
      %1158 = vmatpush2.bf16.msra.mxu0 0
      %1159 = vmatprep.subr.bf16.mxu0 0
      %1160 = vmatpush2.bf16.msra.mxu0 0
      %1161 = vmatprep.mubr.bf16.mxu0 0
      %1162 = vmatmul.mubr.bf16.gmra.mxu0 %v752
      %v1163 = vpop.f32.mrf.mxu0
      %v1164 = vadd.f32 %v1115, %v1163
      %v1165 = vpop.f32.mrf.mxu0
      %v1166 = vpop.f32.mrf.mxu0
      %v1167 = vpop.f32.mrf.mxu0
      %1168 = vdwg.mxu0
      %s1169 = scalar_lea.vmem %s8, 16
      %v1170 = vld [vmem:[%s1169] sm:$0xf]
      %v1171 = vld [vmem:[%s1169 + $0x4] sm:$0xf]
      %v1172 = vld [vmem:[%s1169 + $0x8] sm:$0xf]
      %v1173 = vld [vmem:[%s1169 + $0xc] sm:$0xf]
      %s1174 = scalar_lea.vmem %s9, 1
      %v1175 = vld [vmem:[%s1174] sm:$0x1]
      %v1177 = vlaneseq
      %v1178 = vshrl.u32 %v1177, 7
      %v1179 = vsub.s32 0, %v1178
      %v1180 = vrot.slane %v1175, %v1179
      %v1186 = vunpack.c.l.b16 %v1170
      %v1187 = vunpack.c.l.b16 %v1171
      %v1188 = vunpack.c.l.b16 %v1172
      %v1189 = vunpack.c.l.b16 %v1173
      %v1190 = vpack.c.b16 %v1187, %v1186
      %v1191 = vpack.c.b16 %v1189, %v1188
      %1194 = vmatprep.subr.bf16.mxu0 0
      %1195 = vmatpush1.bf16.msra.mxu0 0
      %1196 = vmatprep.subr.bf16.mxu0 0
      %1197 = vmatpush1.bf16.msra.mxu0 0
      %1198 = vmatprep.subr.bf16.mxu0 0
      %1199 = vmatpush1.bf16.msra.mxu0 0
      %1200 = vmatprep.subr.bf16.mxu0 0
      %1201 = vmatpush1.bf16.msra.mxu0 0
      %1202 = vmatprep.subr.bf16.mxu0 0
      %1203 = vmatpush1.bf16.msra.mxu0 0
      %1204 = vmatprep.subr.bf16.mxu0 0
      %1205 = vmatpush1.bf16.msra.mxu0 0
      %1206 = vmatprep.subr.bf16.mxu0 0
      %1207 = vmatpush1.bf16.msra.mxu0 %v1191
      %1208 = vmatprep.subr.bf16.mxu0 0
      %1209 = vmatpush1.bf16.msra.mxu0 %v1190
      %1210 = vmatprep.subr.bf16.mxu0 0
      %1211 = vmatpush2.bf16.msra.mxu0 0
      %1212 = vmatprep.subr.bf16.mxu0 0
      %1213 = vmatpush2.bf16.msra.mxu0 0
      %1214 = vmatprep.subr.bf16.mxu0 0
      %1215 = vmatpush2.bf16.msra.mxu0 0
      %1216 = vmatprep.subr.bf16.mxu0 0
      %1217 = vmatpush2.bf16.msra.mxu0 0
      %1218 = vmatprep.subr.bf16.mxu0 0
      %1219 = vmatpush2.bf16.msra.mxu0 0
      %1220 = vmatprep.subr.bf16.mxu0 0
      %1221 = vmatpush2.bf16.msra.mxu0 0
      %1222 = vmatprep.subr.bf16.mxu0 0
      %1223 = vmatpush2.bf16.msra.mxu0 0
      %1224 = vmatprep.subr.bf16.mxu0 0
      %1225 = vmatpush2.bf16.msra.mxu0 0
      %1226 = vmatprep.mubr.bf16.mxu0 0
      %1227 = vmatmul.mubr.bf16.gmra.mxu0 %v752
      %v1228 = vpop.f32.mrf.mxu0
      %v1229 = vadd.f32 %v1180, %v1228
      %v1230 = vpop.f32.mrf.mxu0
      %v1231 = vpop.f32.mrf.mxu0
      %v1232 = vpop.f32.mrf.mxu0
      %1233 = vdwg.mxu0
      %v1234 = vpack.c.bf16 %v1099, %v1099
      %v1235 = vpack.c.bf16 %v1164, %v1164
      %v1237 = vsel %vm922, %v1234, 0
      %v1240 = vsel %vm922, %v1235, 0
      %1242 = vmatprep.subr.bf16.mxu0 0
      %1243 = vmatpush1.bf16.xpose.msra.mxu0 0
      %1244 = vmatprep.subr.bf16.mxu0 0
      %1245 = vmatpush1.bf16.xpose.msra.mxu0 0
      %1246 = vmatprep.subr.bf16.mxu0 0
      %1247 = vmatpush1.bf16.xpose.msra.mxu0 0
      %1248 = vmatprep.subr.bf16.mxu0 0
      %1249 = vmatpush1.bf16.xpose.msra.mxu0 0
      %1250 = vmatprep.subr.bf16.mxu0 0
      %1251 = vmatpush1.bf16.xpose.msra.mxu0 0
      %1252 = vmatprep.subr.bf16.mxu0 0
      %1253 = vmatpush1.bf16.xpose.msra.mxu0 0
      %1254 = vmatprep.subr.bf16.mxu0 0
      %1255 = vmatpush1.bf16.xpose.msra.mxu0 0
      %1256 = vmatprep.subr.bf16.mxu0 0
      %1257 = vmatpush1.bf16.xpose.msra.mxu0 %v1240
      %1258 = vmatprep.subr.bf16.mxu0 0
      %1259 = vmatpush2.bf16.xpose.msra.mxu0 0
      %1260 = vmatprep.subr.bf16.mxu0 0
      %1261 = vmatpush2.bf16.xpose.msra.mxu0 0
      %1262 = vmatprep.subr.bf16.mxu0 0
      %1263 = vmatpush2.bf16.xpose.msra.mxu0 0
      %1264 = vmatprep.subr.bf16.mxu0 0
      %1265 = vmatpush2.bf16.xpose.msra.mxu0 0
      %1266 = vmatprep.subr.bf16.mxu0 0
      %1267 = vmatpush2.bf16.xpose.msra.mxu0 0
      %1268 = vmatprep.subr.bf16.mxu0 0
      %1269 = vmatpush2.bf16.xpose.msra.mxu0 0
      %1270 = vmatprep.subr.bf16.mxu0 0
      %1271 = vmatpush2.bf16.xpose.msra.mxu0 0
      %1272 = vmatprep.subr.bf16.mxu0 0
      %1273 = vmatpush2.bf16.xpose.msra.mxu0 0
      %1274 = vmatprep.mubr.bf16.mxu0 0
      %1275 = vmatmul.mubr.bf16.gmra.mxu0 %v1237
      %v1276 = vpop.f32.mrf.mxu0
      %v1277 = vadd.f32 0.0, %v1276
      %v1278 = vpop.f32.mrf.mxu0
      %v1279 = vpop.f32.mrf.mxu0
      %v1280 = vpop.f32.mrf.mxu0
      %1281 = vdwg.mxu0
      %v1282 = vmul.f32 %v1277, 0.35355338
      %v1283 = vadd.f32 %v1282, %v974
      %v1284 = vsel %vm922, %v1283, -inf
      %1285 = vmax.xlane.f32.xlu0 %v1284
      %v1286 = vpop.xlane.xlu0 %1285
      %v1287 = vsub.f32 %v1283, %v1286
      %v1288 = vmul.f32 %v1287, 1.442695
      %v1289 = vpow.pop %v1288
      %v1290 = vsel %vm922, %v1289, 0.0
      %1291 = vadd.xlane.f32.xlu0 %v1290
      %v1292 = vpop.xlane.xlu0 %1291
      %v1293 = vrcp.pop %v1292
      %v1294 = vmul.f32 %v1289, %v1293
      %v1295 = vpack.c.bf16 %v1294, %v1294
      %v1296 = vpack.c.bf16 %v1229, %v1229
      %v1298 = vsel %vm922, %v1295, 0
      %v1301 = vsel %vm993, %v1296, 0
      %1303 = vmatprep.subr.bf16.mxu0 0
      %1304 = vmatpush1.bf16.msra.mxu0 0
      %1305 = vmatprep.subr.bf16.mxu0 0
      %1306 = vmatpush1.bf16.msra.mxu0 0
      %1307 = vmatprep.subr.bf16.mxu0 0
      %1308 = vmatpush1.bf16.msra.mxu0 0
      %1309 = vmatprep.subr.bf16.mxu0 0
      %1310 = vmatpush1.bf16.msra.mxu0 0
      %1311 = vmatprep.subr.bf16.mxu0 0
      %1312 = vmatpush1.bf16.msra.mxu0 0
      %1313 = vmatprep.subr.bf16.mxu0 0
      %1314 = vmatpush1.bf16.msra.mxu0 0
      %1315 = vmatprep.subr.bf16.mxu0 0
      %1316 = vmatpush1.bf16.msra.mxu0 0
      %1317 = vmatprep.subr.bf16.mxu0 0
      %1318 = vmatpush1.bf16.msra.mxu0 %v1301
      %1319 = vmatprep.subr.bf16.mxu0 0
      %1320 = vmatpush2.bf16.msra.mxu0 0
      %1321 = vmatprep.subr.bf16.mxu0 0
      %1322 = vmatpush2.bf16.msra.mxu0 0
      %1323 = vmatprep.subr.bf16.mxu0 0
      %1324 = vmatpush2.bf16.msra.mxu0 0
      %1325 = vmatprep.subr.bf16.mxu0 0
      %1326 = vmatpush2.bf16.msra.mxu0 0
      %1327 = vmatprep.subr.bf16.mxu0 0
      %1328 = vmatpush2.bf16.msra.mxu0 0
      %1329 = vmatprep.subr.bf16.mxu0 0
      %1330 = vmatpush2.bf16.msra.mxu0 0
      %1331 = vmatprep.subr.bf16.mxu0 0
      %1332 = vmatpush2.bf16.msra.mxu0 0
      %1333 = vmatprep.subr.bf16.mxu0 0
      %1334 = vmatpush2.bf16.msra.mxu0 0
      %1335 = vmatprep.mubr.bf16.mxu0 0
      %1336 = vmatmul.mubr.bf16.gmra.mxu0 %v1298
      %v1337 = vpop.f32.mrf.mxu0
      %v1338 = vadd.f32 0.0, %v1337
      %v1339 = vpop.f32.mrf.mxu0
      %v1340 = vpop.f32.mrf.mxu0
      %v1341 = vpop.f32.mrf.mxu0
      %1342 = vdwg.mxu0
      %v1343 = vpack.c.bf16 %v1338, %v1338
      %s1344 = scalar_lea.vmem %s10, 4
      %v1345 = vld [vmem:[%s1344] sm:$0xf]
      %v1347 = vsel %vm922, %v1343, 0
      %v1350 = vsel %vm993, %v1345, 0
      %1352 = vmatprep.subr.bf16.mxu0 0
      %1353 = vmatpush1.bf16.msra.mxu0 0
      %1354 = vmatprep.subr.bf16.mxu0 0
      %1355 = vmatpush1.bf16.msra.mxu0 0
      %1356 = vmatprep.subr.bf16.mxu0 0
      %1357 = vmatpush1.bf16.msra.mxu0 0
      %1358 = vmatprep.subr.bf16.mxu0 0
      %1359 = vmatpush1.bf16.msra.mxu0 0
      %1360 = vmatprep.subr.bf16.mxu0 0
      %1361 = vmatpush1.bf16.msra.mxu0 0
      %1362 = vmatprep.subr.bf16.mxu0 0
      %1363 = vmatpush1.bf16.msra.mxu0 0
      %1364 = vmatprep.subr.bf16.mxu0 0
      %1365 = vmatpush1.bf16.msra.mxu0 0
      %1366 = vmatprep.subr.bf16.mxu0 0
      %1367 = vmatpush1.bf16.msra.mxu0 %v1350
      %1368 = vmatprep.subr.bf16.mxu0 0
      %1369 = vmatpush2.bf16.msra.mxu0 0
      %1370 = vmatprep.subr.bf16.mxu0 0
      %1371 = vmatpush2.bf16.msra.mxu0 0
      %1372 = vmatprep.subr.bf16.mxu0 0
      %1373 = vmatpush2.bf16.msra.mxu0 0
      %1374 = vmatprep.subr.bf16.mxu0 0
      %1375 = vmatpush2.bf16.msra.mxu0 0
      %1376 = vmatprep.subr.bf16.mxu0 0
      %1377 = vmatpush2.bf16.msra.mxu0 0
      %1378 = vmatprep.subr.bf16.mxu0 0
      %1379 = vmatpush2.bf16.msra.mxu0 0
      %1380 = vmatprep.subr.bf16.mxu0 0
      %1381 = vmatpush2.bf16.msra.mxu0 0
      %1382 = vmatprep.subr.bf16.mxu0 0
      %1383 = vmatpush2.bf16.msra.mxu0 0
      %1384 = vmatprep.mubr.bf16.mxu0 0
      %1385 = vmatmul.mubr.bf16.gmra.mxu0 %v1347
      %v1386 = vpop.f32.mrf.mxu0
      %v1387 = vadd.f32 0.0, %v1386
      %v1388 = vpop.f32.mrf.mxu0
      %v1389 = vpop.f32.mrf.mxu0
      %v1390 = vpop.f32.mrf.mxu0
      %1391 = vdwg.mxu0
      %v1393 = vsel %vm922, %v1037, 0
      %v1396 = vsel %vm993, %v1038, 0
      %1398 = vmatprep.subr.bf16.mxu0 0
      %1399 = vmatpush1.bf16.msra.mxu0 0
      %1400 = vmatprep.subr.bf16.mxu0 0
      %1401 = vmatpush1.bf16.msra.mxu0 0
      %1402 = vmatprep.subr.bf16.mxu0 0
      %1403 = vmatpush1.bf16.msra.mxu0 0
      %1404 = vmatprep.subr.bf16.mxu0 0
      %1405 = vmatpush1.bf16.msra.mxu0 0
      %1406 = vmatprep.subr.bf16.mxu0 0
      %1407 = vmatpush1.bf16.msra.mxu0 0
      %1408 = vmatprep.subr.bf16.mxu0 0
      %1409 = vmatpush1.bf16.msra.mxu0 0
      %1410 = vmatprep.subr.bf16.mxu0 0
      %1411 = vmatpush1.bf16.msra.mxu0 0
      %1412 = vmatprep.subr.bf16.mxu0 0
      %1413 = vmatpush1.bf16.msra.mxu0 %v1396
      %1414 = vmatprep.subr.bf16.mxu0 0
      %1415 = vmatpush2.bf16.msra.mxu0 0
      %1416 = vmatprep.subr.bf16.mxu0 0
      %1417 = vmatpush2.bf16.msra.mxu0 0
      %1418 = vmatprep.subr.bf16.mxu0 0
      %1419 = vmatpush2.bf16.msra.mxu0 0
      %1420 = vmatprep.subr.bf16.mxu0 0
      %1421 = vmatpush2.bf16.msra.mxu0 0
      %1422 = vmatprep.subr.bf16.mxu0 0
      %1423 = vmatpush2.bf16.msra.mxu0 0
      %1424 = vmatprep.subr.bf16.mxu0 0
      %1425 = vmatpush2.bf16.msra.mxu0 0
      %1426 = vmatprep.subr.bf16.mxu0 0
      %1427 = vmatpush2.bf16.msra.mxu0 0
      %1428 = vmatprep.subr.bf16.mxu0 0
      %1429 = vmatpush2.bf16.msra.mxu0 0
      %1430 = vmatprep.mubr.bf16.mxu0 0
      %1431 = vmatmul.mubr.bf16.gmra.mxu0 %v1393
      %v1432 = vpop.f32.mrf.mxu0
      %v1433 = vadd.f32 %v1387, %v1432
      %v1434 = vpop.f32.mrf.mxu0
      %v1435 = vpop.f32.mrf.mxu0
      %v1436 = vpop.f32.mrf.mxu0
      %1437 = vdwg.mxu0
      %s1438 = scalar_lea.vmem %s4, 32
      %v1439 = vld [vmem:[%s1438] sm:$0xf]
      %v1440 = vld [vmem:[%s1438 + $0x4] sm:$0xf]
      %v1441 = vld [vmem:[%s1438 + $0x8] sm:$0xf]
      %v1442 = vld [vmem:[%s1438 + $0xc] sm:$0xf]
      %s1443 = scalar_lea.vmem %s5, 2
      %v1444 = vld [vmem:[%s1443] sm:$0x1]
      %v1446 = vlaneseq
      %v1447 = vshrl.u32 %v1446, 7
      %v1448 = vsub.s32 0, %v1447
      %v1449 = vrot.slane %v1444, %v1448
      %v1455 = vunpack.c.l.b16 %v1439
      %v1456 = vunpack.c.l.b16 %v1440
      %v1457 = vunpack.c.l.b16 %v1441
      %v1458 = vunpack.c.l.b16 %v1442
      %v1459 = vpack.c.b16 %v1456, %v1455
      %v1460 = vpack.c.b16 %v1458, %v1457
      %1463 = vmatprep.subr.bf16.mxu0 0
      %1464 = vmatpush1.bf16.msra.mxu0 0
      %1465 = vmatprep.subr.bf16.mxu0 0
      %1466 = vmatpush1.bf16.msra.mxu0 0
      %1467 = vmatprep.subr.bf16.mxu0 0
      %1468 = vmatpush1.bf16.msra.mxu0 0
      %1469 = vmatprep.subr.bf16.mxu0 0
      %1470 = vmatpush1.bf16.msra.mxu0 0
      %1471 = vmatprep.subr.bf16.mxu0 0
      %1472 = vmatpush1.bf16.msra.mxu0 0
      %1473 = vmatprep.subr.bf16.mxu0 0
      %1474 = vmatpush1.bf16.msra.mxu0 0
      %1475 = vmatprep.subr.bf16.mxu0 0
      %1476 = vmatpush1.bf16.msra.mxu0 %v1460
      %1477 = vmatprep.subr.bf16.mxu0 0
      %1478 = vmatpush1.bf16.msra.mxu0 %v1459
      %1479 = vmatprep.subr.bf16.mxu0 0
      %1480 = vmatpush2.bf16.msra.mxu0 0
      %1481 = vmatprep.subr.bf16.mxu0 0
      %1482 = vmatpush2.bf16.msra.mxu0 0
      %1483 = vmatprep.subr.bf16.mxu0 0
      %1484 = vmatpush2.bf16.msra.mxu0 0
      %1485 = vmatprep.subr.bf16.mxu0 0
      %1486 = vmatpush2.bf16.msra.mxu0 0
      %1487 = vmatprep.subr.bf16.mxu0 0
      %1488 = vmatpush2.bf16.msra.mxu0 0
      %1489 = vmatprep.subr.bf16.mxu0 0
      %1490 = vmatpush2.bf16.msra.mxu0 0
      %1491 = vmatprep.subr.bf16.mxu0 0
      %1492 = vmatpush2.bf16.msra.mxu0 0
      %1493 = vmatprep.subr.bf16.mxu0 0
      %1494 = vmatpush2.bf16.msra.mxu0 0
      %1495 = vmatprep.mubr.bf16.mxu0 0
      %1496 = vmatmul.mubr.bf16.gmra.mxu0 %v752
      %v1497 = vpop.f32.mrf.mxu0
      %v1498 = vadd.f32 %v1449, %v1497
      %v1499 = vpop.f32.mrf.mxu0
      %v1500 = vpop.f32.mrf.mxu0
      %v1501 = vpop.f32.mrf.mxu0
      %1502 = vdwg.mxu0
      %s1503 = scalar_lea.vmem %s6, 32
      %v1504 = vld [vmem:[%s1503] sm:$0xf]
      %v1505 = vld [vmem:[%s1503 + $0x4] sm:$0xf]
      %v1506 = vld [vmem:[%s1503 + $0x8] sm:$0xf]
      %v1507 = vld [vmem:[%s1503 + $0xc] sm:$0xf]
      %s1508 = scalar_lea.vmem %s7, 2
      %v1509 = vld [vmem:[%s1508] sm:$0x1]
      %v1511 = vlaneseq
      %v1512 = vshrl.u32 %v1511, 7
      %v1513 = vsub.s32 0, %v1512
      %v1514 = vrot.slane %v1509, %v1513
      %v1520 = vunpack.c.l.b16 %v1504
      %v1521 = vunpack.c.l.b16 %v1505
      %v1522 = vunpack.c.l.b16 %v1506
      %v1523 = vunpack.c.l.b16 %v1507
      %v1524 = vpack.c.b16 %v1521, %v1520
      %v1525 = vpack.c.b16 %v1523, %v1522
      %1528 = vmatprep.subr.bf16.mxu0 0
      %1529 = vmatpush1.bf16.msra.mxu0 0
      %1530 = vmatprep.subr.bf16.mxu0 0
      %1531 = vmatpush1.bf16.msra.mxu0 0
      %1532 = vmatprep.subr.bf16.mxu0 0
      %1533 = vmatpush1.bf16.msra.mxu0 0
      %1534 = vmatprep.subr.bf16.mxu0 0
      %1535 = vmatpush1.bf16.msra.mxu0 0
      %1536 = vmatprep.subr.bf16.mxu0 0
      %1537 = vmatpush1.bf16.msra.mxu0 0
      %1538 = vmatprep.subr.bf16.mxu0 0
      %1539 = vmatpush1.bf16.msra.mxu0 0
      %1540 = vmatprep.subr.bf16.mxu0 0
      %1541 = vmatpush1.bf16.msra.mxu0 %v1525
      %1542 = vmatprep.subr.bf16.mxu0 0
      %1543 = vmatpush1.bf16.msra.mxu0 %v1524
      %1544 = vmatprep.subr.bf16.mxu0 0
      %1545 = vmatpush2.bf16.msra.mxu0 0
      %1546 = vmatprep.subr.bf16.mxu0 0
      %1547 = vmatpush2.bf16.msra.mxu0 0
      %1548 = vmatprep.subr.bf16.mxu0 0
      %1549 = vmatpush2.bf16.msra.mxu0 0
      %1550 = vmatprep.subr.bf16.mxu0 0
      %1551 = vmatpush2.bf16.msra.mxu0 0
      %1552 = vmatprep.subr.bf16.mxu0 0
      %1553 = vmatpush2.bf16.msra.mxu0 0
      %1554 = vmatprep.subr.bf16.mxu0 0
      %1555 = vmatpush2.bf16.msra.mxu0 0
      %1556 = vmatprep.subr.bf16.mxu0 0
      %1557 = vmatpush2.bf16.msra.mxu0 0
      %1558 = vmatprep.subr.bf16.mxu0 0
      %1559 = vmatpush2.bf16.msra.mxu0 0
      %1560 = vmatprep.mubr.bf16.mxu0 0
      %1561 = vmatmul.mubr.bf16.gmra.mxu0 %v752
      %v1562 = vpop.f32.mrf.mxu0
      %v1563 = vadd.f32 %v1514, %v1562
      %v1564 = vpop.f32.mrf.mxu0
      %v1565 = vpop.f32.mrf.mxu0
      %v1566 = vpop.f32.mrf.mxu0
      %1567 = vdwg.mxu0
      %s1568 = scalar_lea.vmem %s8, 32
      %v1569 = vld [vmem:[%s1568] sm:$0xf]
      %v1570 = vld [vmem:[%s1568 + $0x4] sm:$0xf]
      %v1571 = vld [vmem:[%s1568 + $0x8] sm:$0xf]
      %v1572 = vld [vmem:[%s1568 + $0xc] sm:$0xf]
      %s1573 = scalar_lea.vmem %s9, 2
      %v1574 = vld [vmem:[%s1573] sm:$0x1]
      %v1576 = vlaneseq
      %v1577 = vshrl.u32 %v1576, 7
      %v1578 = vsub.s32 0, %v1577
      %v1579 = vrot.slane %v1574, %v1578
      %v1585 = vunpack.c.l.b16 %v1569
      %v1586 = vunpack.c.l.b16 %v1570
      %v1587 = vunpack.c.l.b16 %v1571
      %v1588 = vunpack.c.l.b16 %v1572
      %v1589 = vpack.c.b16 %v1586, %v1585
      %v1590 = vpack.c.b16 %v1588, %v1587
      %1593 = vmatprep.subr.bf16.mxu0 0
      %1594 = vmatpush1.bf16.msra.mxu0 0
      %1595 = vmatprep.subr.bf16.mxu0 0
      %1596 = vmatpush1.bf16.msra.mxu0 0
      %1597 = vmatprep.subr.bf16.mxu0 0
      %1598 = vmatpush1.bf16.msra.mxu0 0
      %1599 = vmatprep.subr.bf16.mxu0 0
      %1600 = vmatpush1.bf16.msra.mxu0 0
      %1601 = vmatprep.subr.bf16.mxu0 0
      %1602 = vmatpush1.bf16.msra.mxu0 0
      %1603 = vmatprep.subr.bf16.mxu0 0
      %1604 = vmatpush1.bf16.msra.mxu0 0
      %1605 = vmatprep.subr.bf16.mxu0 0
      %1606 = vmatpush1.bf16.msra.mxu0 %v1590
      %1607 = vmatprep.subr.bf16.mxu0 0
      %1608 = vmatpush1.bf16.msra.mxu0 %v1589
      %1609 = vmatprep.subr.bf16.mxu0 0
      %1610 = vmatpush2.bf16.msra.mxu0 0
      %1611 = vmatprep.subr.bf16.mxu0 0
      %1612 = vmatpush2.bf16.msra.mxu0 0
      %1613 = vmatprep.subr.bf16.mxu0 0
      %1614 = vmatpush2.bf16.msra.mxu0 0
      %1615 = vmatprep.subr.bf16.mxu0 0
      %1616 = vmatpush2.bf16.msra.mxu0 0
      %1617 = vmatprep.subr.bf16.mxu0 0
      %1618 = vmatpush2.bf16.msra.mxu0 0
      %1619 = vmatprep.subr.bf16.mxu0 0
      %1620 = vmatpush2.bf16.msra.mxu0 0
      %1621 = vmatprep.subr.bf16.mxu0 0
      %1622 = vmatpush2.bf16.msra.mxu0 0
      %1623 = vmatprep.subr.bf16.mxu0 0
      %1624 = vmatpush2.bf16.msra.mxu0 0
      %1625 = vmatprep.mubr.bf16.mxu0 0
      %1626 = vmatmul.mubr.bf16.gmra.mxu0 %v752
      %v1627 = vpop.f32.mrf.mxu0
      %v1628 = vadd.f32 %v1579, %v1627
      %v1629 = vpop.f32.mrf.mxu0
      %v1630 = vpop.f32.mrf.mxu0
      %v1631 = vpop.f32.mrf.mxu0
      %1632 = vdwg.mxu0
      %v1633 = vpack.c.bf16 %v1498, %v1498
      %v1634 = vpack.c.bf16 %v1563, %v1563
      %v1636 = vsel %vm922, %v1633, 0
      %v1639 = vsel %vm922, %v1634, 0
      %1641 = vmatprep.subr.bf16.mxu0 0
      %1642 = vmatpush1.bf16.xpose.msra.mxu0 0
      %1643 = vmatprep.subr.bf16.mxu0 0
      %1644 = vmatpush1.bf16.xpose.msra.mxu0 0
      %1645 = vmatprep.subr.bf16.mxu0 0
      %1646 = vmatpush1.bf16.xpose.msra.mxu0 0
      %1647 = vmatprep.subr.bf16.mxu0 0
      %1648 = vmatpush1.bf16.xpose.msra.mxu0 0
      %1649 = vmatprep.subr.bf16.mxu0 0
      %1650 = vmatpush1.bf16.xpose.msra.mxu0 0
      %1651 = vmatprep.subr.bf16.mxu0 0
      %1652 = vmatpush1.bf16.xpose.msra.mxu0 0
      %1653 = vmatprep.subr.bf16.mxu0 0
      %1654 = vmatpush1.bf16.xpose.msra.mxu0 0
      %1655 = vmatprep.subr.bf16.mxu0 0
      %1656 = vmatpush1.bf16.xpose.msra.mxu0 %v1639
      %1657 = vmatprep.subr.bf16.mxu0 0
      %1658 = vmatpush2.bf16.xpose.msra.mxu0 0
      %1659 = vmatprep.subr.bf16.mxu0 0
      %1660 = vmatpush2.bf16.xpose.msra.mxu0 0
      %1661 = vmatprep.subr.bf16.mxu0 0
      %1662 = vmatpush2.bf16.xpose.msra.mxu0 0
      %1663 = vmatprep.subr.bf16.mxu0 0
      %1664 = vmatpush2.bf16.xpose.msra.mxu0 0
      %1665 = vmatprep.subr.bf16.mxu0 0
      %1666 = vmatpush2.bf16.xpose.msra.mxu0 0
      %1667 = vmatprep.subr.bf16.mxu0 0
      %1668 = vmatpush2.bf16.xpose.msra.mxu0 0
      %1669 = vmatprep.subr.bf16.mxu0 0
      %1670 = vmatpush2.bf16.xpose.msra.mxu0 0
      %1671 = vmatprep.subr.bf16.mxu0 0
      %1672 = vmatpush2.bf16.xpose.msra.mxu0 0
      %1673 = vmatprep.mubr.bf16.mxu0 0
      %1674 = vmatmul.mubr.bf16.gmra.mxu0 %v1636
      %v1675 = vpop.f32.mrf.mxu0
      %v1676 = vadd.f32 0.0, %v1675
      %v1677 = vpop.f32.mrf.mxu0
      %v1678 = vpop.f32.mrf.mxu0
      %v1679 = vpop.f32.mrf.mxu0
      %1680 = vdwg.mxu0
      %v1681 = vmul.f32 %v1676, 0.35355338
      %v1682 = vadd.f32 %v1681, %v974
      %v1683 = vsel %vm922, %v1682, -inf
      %1684 = vmax.xlane.f32.xlu0 %v1683
      %v1685 = vpop.xlane.xlu0 %1684
      %v1686 = vsub.f32 %v1682, %v1685
      %v1687 = vmul.f32 %v1686, 1.442695
      %v1688 = vpow.pop %v1687
      %v1689 = vsel %vm922, %v1688, 0.0
      %1690 = vadd.xlane.f32.xlu0 %v1689
      %v1691 = vpop.xlane.xlu0 %1690
      %v1692 = vrcp.pop %v1691
      %v1693 = vmul.f32 %v1688, %v1692
      %v1694 = vpack.c.bf16 %v1693, %v1693
      %v1695 = vpack.c.bf16 %v1628, %v1628
      %v1697 = vsel %vm922, %v1694, 0
      %v1700 = vsel %vm993, %v1695, 0
      %1702 = vmatprep.subr.bf16.mxu0 0
      %1703 = vmatpush1.bf16.msra.mxu0 0
      %1704 = vmatprep.subr.bf16.mxu0 0
      %1705 = vmatpush1.bf16.msra.mxu0 0
      %1706 = vmatprep.subr.bf16.mxu0 0
      %1707 = vmatpush1.bf16.msra.mxu0 0
      %1708 = vmatprep.subr.bf16.mxu0 0
      %1709 = vmatpush1.bf16.msra.mxu0 0
      %1710 = vmatprep.subr.bf16.mxu0 0
      %1711 = vmatpush1.bf16.msra.mxu0 0
      %1712 = vmatprep.subr.bf16.mxu0 0
      %1713 = vmatpush1.bf16.msra.mxu0 0
      %1714 = vmatprep.subr.bf16.mxu0 0
      %1715 = vmatpush1.bf16.msra.mxu0 0
      %1716 = vmatprep.subr.bf16.mxu0 0
      %1717 = vmatpush1.bf16.msra.mxu0 %v1700
      %1718 = vmatprep.subr.bf16.mxu0 0
      %1719 = vmatpush2.bf16.msra.mxu0 0
      %1720 = vmatprep.subr.bf16.mxu0 0
      %1721 = vmatpush2.bf16.msra.mxu0 0
      %1722 = vmatprep.subr.bf16.mxu0 0
      %1723 = vmatpush2.bf16.msra.mxu0 0
      %1724 = vmatprep.subr.bf16.mxu0 0
      %1725 = vmatpush2.bf16.msra.mxu0 0
      %1726 = vmatprep.subr.bf16.mxu0 0
      %1727 = vmatpush2.bf16.msra.mxu0 0
      %1728 = vmatprep.subr.bf16.mxu0 0
      %1729 = vmatpush2.bf16.msra.mxu0 0
      %1730 = vmatprep.subr.bf16.mxu0 0
      %1731 = vmatpush2.bf16.msra.mxu0 0
      %1732 = vmatprep.subr.bf16.mxu0 0
      %1733 = vmatpush2.bf16.msra.mxu0 0
      %1734 = vmatprep.mubr.bf16.mxu0 0
      %1735 = vmatmul.mubr.bf16.gmra.mxu0 %v1697
      %v1736 = vpop.f32.mrf.mxu0
      %v1737 = vadd.f32 0.0, %v1736
      %v1738 = vpop.f32.mrf.mxu0
      %v1739 = vpop.f32.mrf.mxu0
      %v1740 = vpop.f32.mrf.mxu0
      %1741 = vdwg.mxu0
      %v1742 = vpack.c.bf16 %v1737, %v1737
      %s1743 = scalar_lea.vmem %s10, 8
      %v1744 = vld [vmem:[%s1743] sm:$0xf]
      %v1746 = vsel %vm922, %v1742, 0
      %v1749 = vsel %vm993, %v1744, 0
      %1751 = vmatprep.subr.bf16.mxu0 0
      %1752 = vmatpush1.bf16.msra.mxu0 0
      %1753 = vmatprep.subr.bf16.mxu0 0
      %1754 = vmatpush1.bf16.msra.mxu0 0
      %1755 = vmatprep.subr.bf16.mxu0 0
      %1756 = vmatpush1.bf16.msra.mxu0 0
      %1757 = vmatprep.subr.bf16.mxu0 0
      %1758 = vmatpush1.bf16.msra.mxu0 0
      %1759 = vmatprep.subr.bf16.mxu0 0
      %1760 = vmatpush1.bf16.msra.mxu0 0
      %1761 = vmatprep.subr.bf16.mxu0 0
      %1762 = vmatpush1.bf16.msra.mxu0 0
      %1763 = vmatprep.subr.bf16.mxu0 0
      %1764 = vmatpush1.bf16.msra.mxu0 0
      %1765 = vmatprep.subr.bf16.mxu0 0
      %1766 = vmatpush1.bf16.msra.mxu0 %v1749
      %1767 = vmatprep.subr.bf16.mxu0 0
      %1768 = vmatpush2.bf16.msra.mxu0 0
      %1769 = vmatprep.subr.bf16.mxu0 0
      %1770 = vmatpush2.bf16.msra.mxu0 0
      %1771 = vmatprep.subr.bf16.mxu0 0
      %1772 = vmatpush2.bf16.msra.mxu0 0
      %1773 = vmatprep.subr.bf16.mxu0 0
      %1774 = vmatpush2.bf16.msra.mxu0 0
      %1775 = vmatprep.subr.bf16.mxu0 0
      %1776 = vmatpush2.bf16.msra.mxu0 0
      %1777 = vmatprep.subr.bf16.mxu0 0
      %1778 = vmatpush2.bf16.msra.mxu0 0
      %1779 = vmatprep.subr.bf16.mxu0 0
      %1780 = vmatpush2.bf16.msra.mxu0 0
      %1781 = vmatprep.subr.bf16.mxu0 0
      %1782 = vmatpush2.bf16.msra.mxu0 0
      %1783 = vmatprep.mubr.bf16.mxu0 0
      %1784 = vmatmul.mubr.bf16.gmra.mxu0 %v1746
      %v1785 = vpop.f32.mrf.mxu0
      %v1786 = vadd.f32 0.0, %v1785
      %v1787 = vpop.f32.mrf.mxu0
      %v1788 = vpop.f32.mrf.mxu0
      %v1789 = vpop.f32.mrf.mxu0
      %1790 = vdwg.mxu0
      %v1791 = vadd.f32 %v1433, %v1786
      %s1792 = scalar_lea.vmem %s4, 48
      %v1793 = vld [vmem:[%s1792] sm:$0xf]
      %v1794 = vld [vmem:[%s1792 + $0x4] sm:$0xf]
      %v1795 = vld [vmem:[%s1792 + $0x8] sm:$0xf]
      %v1796 = vld [vmem:[%s1792 + $0xc] sm:$0xf]
      %s1797 = scalar_lea.vmem %s5, 3
      %v1798 = vld [vmem:[%s1797] sm:$0x1]
      %v1800 = vlaneseq
      %v1801 = vshrl.u32 %v1800, 7
      %v1802 = vsub.s32 0, %v1801
      %v1803 = vrot.slane %v1798, %v1802
      %v1809 = vunpack.c.l.b16 %v1793
      %v1810 = vunpack.c.l.b16 %v1794
      %v1811 = vunpack.c.l.b16 %v1795
      %v1812 = vunpack.c.l.b16 %v1796
      %v1813 = vpack.c.b16 %v1810, %v1809
      %v1814 = vpack.c.b16 %v1812, %v1811
      %1817 = vmatprep.subr.bf16.mxu0 0
      %1818 = vmatpush1.bf16.msra.mxu0 0
      %1819 = vmatprep.subr.bf16.mxu0 0
      %1820 = vmatpush1.bf16.msra.mxu0 0
      %1821 = vmatprep.subr.bf16.mxu0 0
      %1822 = vmatpush1.bf16.msra.mxu0 0
      %1823 = vmatprep.subr.bf16.mxu0 0
      %1824 = vmatpush1.bf16.msra.mxu0 0
      %1825 = vmatprep.subr.bf16.mxu0 0
      %1826 = vmatpush1.bf16.msra.mxu0 0
      %1827 = vmatprep.subr.bf16.mxu0 0
      %1828 = vmatpush1.bf16.msra.mxu0 0
      %1829 = vmatprep.subr.bf16.mxu0 0
      %1830 = vmatpush1.bf16.msra.mxu0 %v1814
      %1831 = vmatprep.subr.bf16.mxu0 0
      %1832 = vmatpush1.bf16.msra.mxu0 %v1813
      %1833 = vmatprep.subr.bf16.mxu0 0
      %1834 = vmatpush2.bf16.msra.mxu0 0
      %1835 = vmatprep.subr.bf16.mxu0 0
      %1836 = vmatpush2.bf16.msra.mxu0 0
      %1837 = vmatprep.subr.bf16.mxu0 0
      %1838 = vmatpush2.bf16.msra.mxu0 0
      %1839 = vmatprep.subr.bf16.mxu0 0
      %1840 = vmatpush2.bf16.msra.mxu0 0
      %1841 = vmatprep.subr.bf16.mxu0 0
      %1842 = vmatpush2.bf16.msra.mxu0 0
      %1843 = vmatprep.subr.bf16.mxu0 0
      %1844 = vmatpush2.bf16.msra.mxu0 0
      %1845 = vmatprep.subr.bf16.mxu0 0
      %1846 = vmatpush2.bf16.msra.mxu0 0
      %1847 = vmatprep.subr.bf16.mxu0 0
      %1848 = vmatpush2.bf16.msra.mxu0 0
      %1849 = vmatprep.mubr.bf16.mxu0 0
      %1850 = vmatmul.mubr.bf16.gmra.mxu0 %v752
      %v1851 = vpop.f32.mrf.mxu0
      %v1852 = vadd.f32 %v1803, %v1851
      %v1853 = vpop.f32.mrf.mxu0
      %v1854 = vpop.f32.mrf.mxu0
      %v1855 = vpop.f32.mrf.mxu0
      %1856 = vdwg.mxu0
      %s1857 = scalar_lea.vmem %s6, 48
      %v1858 = vld [vmem:[%s1857] sm:$0xf]
      %v1859 = vld [vmem:[%s1857 + $0x4] sm:$0xf]
      %v1860 = vld [vmem:[%s1857 + $0x8] sm:$0xf]
      %v1861 = vld [vmem:[%s1857 + $0xc] sm:$0xf]
      %s1862 = scalar_lea.vmem %s7, 3
      %v1863 = vld [vmem:[%s1862] sm:$0x1]
      %v1865 = vlaneseq
      %v1866 = vshrl.u32 %v1865, 7
      %v1867 = vsub.s32 0, %v1866
      %v1868 = vrot.slane %v1863, %v1867
      %v1874 = vunpack.c.l.b16 %v1858
      %v1875 = vunpack.c.l.b16 %v1859
      %v1876 = vunpack.c.l.b16 %v1860
      %v1877 = vunpack.c.l.b16 %v1861
      %v1878 = vpack.c.b16 %v1875, %v1874
      %v1879 = vpack.c.b16 %v1877, %v1876
      %1882 = vmatprep.subr.bf16.mxu0 0
      %1883 = vmatpush1.bf16.msra.mxu0 0
      %1884 = vmatprep.subr.bf16.mxu0 0
      %1885 = vmatpush1.bf16.msra.mxu0 0
      %1886 = vmatprep.subr.bf16.mxu0 0
      %1887 = vmatpush1.bf16.msra.mxu0 0
      %1888 = vmatprep.subr.bf16.mxu0 0
      %1889 = vmatpush1.bf16.msra.mxu0 0
      %1890 = vmatprep.subr.bf16.mxu0 0
      %1891 = vmatpush1.bf16.msra.mxu0 0
      %1892 = vmatprep.subr.bf16.mxu0 0
      %1893 = vmatpush1.bf16.msra.mxu0 0
      %1894 = vmatprep.subr.bf16.mxu0 0
      %1895 = vmatpush1.bf16.msra.mxu0 %v1879
      %1896 = vmatprep.subr.bf16.mxu0 0
      %1897 = vmatpush1.bf16.msra.mxu0 %v1878
      %1898 = vmatprep.subr.bf16.mxu0 0
      %1899 = vmatpush2.bf16.msra.mxu0 0
      %1900 = vmatprep.subr.bf16.mxu0 0
      %1901 = vmatpush2.bf16.msra.mxu0 0
      %1902 = vmatprep.subr.bf16.mxu0 0
      %1903 = vmatpush2.bf16.msra.mxu0 0
      %1904 = vmatprep.subr.bf16.mxu0 0
      %1905 = vmatpush2.bf16.msra.mxu0 0
      %1906 = vmatprep.subr.bf16.mxu0 0
      %1907 = vmatpush2.bf16.msra.mxu0 0
      %1908 = vmatprep.subr.bf16.mxu0 0
      %1909 = vmatpush2.bf16.msra.mxu0 0
      %1910 = vmatprep.subr.bf16.mxu0 0
      %1911 = vmatpush2.bf16.msra.mxu0 0
      %1912 = vmatprep.subr.bf16.mxu0 0
      %1913 = vmatpush2.bf16.msra.mxu0 0
      %1914 = vmatprep.mubr.bf16.mxu0 0
      %1915 = vmatmul.mubr.bf16.gmra.mxu0 %v752
      %v1916 = vpop.f32.mrf.mxu0
      %v1917 = vadd.f32 %v1868, %v1916
      %v1918 = vpop.f32.mrf.mxu0
      %v1919 = vpop.f32.mrf.mxu0
      %v1920 = vpop.f32.mrf.mxu0
      %1921 = vdwg.mxu0
      %s1922 = scalar_lea.vmem %s8, 48
      %v1923 = vld [vmem:[%s1922] sm:$0xf]
      %v1924 = vld [vmem:[%s1922 + $0x4] sm:$0xf]
      %v1925 = vld [vmem:[%s1922 + $0x8] sm:$0xf]
      %v1926 = vld [vmem:[%s1922 + $0xc] sm:$0xf]
      %s1927 = scalar_lea.vmem %s9, 3
      %v1928 = vld [vmem:[%s1927] sm:$0x1]
      %v1930 = vlaneseq
      %v1931 = vshrl.u32 %v1930, 7
      %v1932 = vsub.s32 0, %v1931
      %v1933 = vrot.slane %v1928, %v1932
      %v1939 = vunpack.c.l.b16 %v1923
      %v1940 = vunpack.c.l.b16 %v1924
      %v1941 = vunpack.c.l.b16 %v1925
      %v1942 = vunpack.c.l.b16 %v1926
      %v1943 = vpack.c.b16 %v1940, %v1939
      %v1944 = vpack.c.b16 %v1942, %v1941
      %1947 = vmatprep.subr.bf16.mxu0 0
      %1948 = vmatpush1.bf16.msra.mxu0 0
      %1949 = vmatprep.subr.bf16.mxu0 0
      %1950 = vmatpush1.bf16.msra.mxu0 0
      %1951 = vmatprep.subr.bf16.mxu0 0
      %1952 = vmatpush1.bf16.msra.mxu0 0
      %1953 = vmatprep.subr.bf16.mxu0 0
      %1954 = vmatpush1.bf16.msra.mxu0 0
      %1955 = vmatprep.subr.bf16.mxu0 0
      %1956 = vmatpush1.bf16.msra.mxu0 0
      %1957 = vmatprep.subr.bf16.mxu0 0
      %1958 = vmatpush1.bf16.msra.mxu0 0
      %1959 = vmatprep.subr.bf16.mxu0 0
      %1960 = vmatpush1.bf16.msra.mxu0 %v1944
      %1961 = vmatprep.subr.bf16.mxu0 0
      %1962 = vmatpush1.bf16.msra.mxu0 %v1943
      %1963 = vmatprep.subr.bf16.mxu0 0
      %1964 = vmatpush2.bf16.msra.mxu0 0
      %1965 = vmatprep.subr.bf16.mxu0 0
      %1966 = vmatpush2.bf16.msra.mxu0 0
      %1967 = vmatprep.subr.bf16.mxu0 0
      %1968 = vmatpush2.bf16.msra.mxu0 0
      %1969 = vmatprep.subr.bf16.mxu0 0
      %1970 = vmatpush2.bf16.msra.mxu0 0
      %1971 = vmatprep.subr.bf16.mxu0 0
      %1972 = vmatpush2.bf16.msra.mxu0 0
      %1973 = vmatprep.subr.bf16.mxu0 0
      %1974 = vmatpush2.bf16.msra.mxu0 0
      %1975 = vmatprep.subr.bf16.mxu0 0
      %1976 = vmatpush2.bf16.msra.mxu0 0
      %1977 = vmatprep.subr.bf16.mxu0 0
      %1978 = vmatpush2.bf16.msra.mxu0 0
      %1979 = vmatprep.mubr.bf16.mxu0 0
      %1980 = vmatmul.mubr.bf16.gmra.mxu0 %v752
      %v1981 = vpop.f32.mrf.mxu0
      %v1982 = vadd.f32 %v1933, %v1981
      %v1983 = vpop.f32.mrf.mxu0
      %v1984 = vpop.f32.mrf.mxu0
      %v1985 = vpop.f32.mrf.mxu0
      %1986 = vdwg.mxu0
      %v1987 = vpack.c.bf16 %v1852, %v1852
      %v1988 = vpack.c.bf16 %v1917, %v1917
      %v1990 = vsel %vm922, %v1987, 0
      %v1993 = vsel %vm922, %v1988, 0
      %1995 = vmatprep.subr.bf16.mxu0 0
      %1996 = vmatpush1.bf16.xpose.msra.mxu0 0
      %1997 = vmatprep.subr.bf16.mxu0 0
      %1998 = vmatpush1.bf16.xpose.msra.mxu0 0
      %1999 = vmatprep.subr.bf16.mxu0 0
      %2000 = vmatpush1.bf16.xpose.msra.mxu0 0
      %2001 = vmatprep.subr.bf16.mxu0 0
      %2002 = vmatpush1.bf16.xpose.msra.mxu0 0
      %2003 = vmatprep.subr.bf16.mxu0 0
      %2004 = vmatpush1.bf16.xpose.msra.mxu0 0
      %2005 = vmatprep.subr.bf16.mxu0 0
      %2006 = vmatpush1.bf16.xpose.msra.mxu0 0
      %2007 = vmatprep.subr.bf16.mxu0 0
      %2008 = vmatpush1.bf16.xpose.msra.mxu0 0
      %2009 = vmatprep.subr.bf16.mxu0 0
      %2010 = vmatpush1.bf16.xpose.msra.mxu0 %v1993
      %2011 = vmatprep.subr.bf16.mxu0 0
      %2012 = vmatpush2.bf16.xpose.msra.mxu0 0
      %2013 = vmatprep.subr.bf16.mxu0 0
      %2014 = vmatpush2.bf16.xpose.msra.mxu0 0
      %2015 = vmatprep.subr.bf16.mxu0 0
      %2016 = vmatpush2.bf16.xpose.msra.mxu0 0
      %2017 = vmatprep.subr.bf16.mxu0 0
      %2018 = vmatpush2.bf16.xpose.msra.mxu0 0
      %2019 = vmatprep.subr.bf16.mxu0 0
      %2020 = vmatpush2.bf16.xpose.msra.mxu0 0
      %2021 = vmatprep.subr.bf16.mxu0 0
      %2022 = vmatpush2.bf16.xpose.msra.mxu0 0
      %2023 = vmatprep.subr.bf16.mxu0 0
      %2024 = vmatpush2.bf16.xpose.msra.mxu0 0
      %2025 = vmatprep.subr.bf16.mxu0 0
      %2026 = vmatpush2.bf16.xpose.msra.mxu0 0
      %2027 = vmatprep.mubr.bf16.mxu0 0
      %2028 = vmatmul.mubr.bf16.gmra.mxu0 %v1990
      %v2029 = vpop.f32.mrf.mxu0
      %v2030 = vadd.f32 0.0, %v2029
      %v2031 = vpop.f32.mrf.mxu0
      %v2032 = vpop.f32.mrf.mxu0
      %v2033 = vpop.f32.mrf.mxu0
      %2034 = vdwg.mxu0
      %v2035 = vmul.f32 %v2030, 0.35355338
      %v2036 = vadd.f32 %v2035, %v974
      %v2037 = vsel %vm922, %v2036, -inf
      %2038 = vmax.xlane.f32.xlu0 %v2037
      %v2039 = vpop.xlane.xlu0 %2038
      %v2040 = vsub.f32 %v2036, %v2039
      %v2041 = vmul.f32 %v2040, 1.442695
      %v2042 = vpow.pop %v2041
      %v2043 = vsel %vm922, %v2042, 0.0
      %2044 = vadd.xlane.f32.xlu0 %v2043
      %v2045 = vpop.xlane.xlu0 %2044
      %v2046 = vrcp.pop %v2045
      %v2047 = vmul.f32 %v2042, %v2046
      %v2048 = vpack.c.bf16 %v2047, %v2047
      %v2049 = vpack.c.bf16 %v1982, %v1982
      %v2051 = vsel %vm922, %v2048, 0
      %v2054 = vsel %vm993, %v2049, 0
      %2056 = vmatprep.subr.bf16.mxu0 0
      %2057 = vmatpush1.bf16.msra.mxu0 0
      %2058 = vmatprep.subr.bf16.mxu0 0
      %2059 = vmatpush1.bf16.msra.mxu0 0
      %2060 = vmatprep.subr.bf16.mxu0 0
      %2061 = vmatpush1.bf16.msra.mxu0 0
      %2062 = vmatprep.subr.bf16.mxu0 0
      %2063 = vmatpush1.bf16.msra.mxu0 0
      %2064 = vmatprep.subr.bf16.mxu0 0
      %2065 = vmatpush1.bf16.msra.mxu0 0
      %2066 = vmatprep.subr.bf16.mxu0 0
      %2067 = vmatpush1.bf16.msra.mxu0 0
      %2068 = vmatprep.subr.bf16.mxu0 0
      %2069 = vmatpush1.bf16.msra.mxu0 0
      %2070 = vmatprep.subr.bf16.mxu0 0
      %2071 = vmatpush1.bf16.msra.mxu0 %v2054
      %2072 = vmatprep.subr.bf16.mxu0 0
      %2073 = vmatpush2.bf16.msra.mxu0 0
      %2074 = vmatprep.subr.bf16.mxu0 0
      %2075 = vmatpush2.bf16.msra.mxu0 0
      %2076 = vmatprep.subr.bf16.mxu0 0
      %2077 = vmatpush2.bf16.msra.mxu0 0
      %2078 = vmatprep.subr.bf16.mxu0 0
      %2079 = vmatpush2.bf16.msra.mxu0 0
      %2080 = vmatprep.subr.bf16.mxu0 0
      %2081 = vmatpush2.bf16.msra.mxu0 0
      %2082 = vmatprep.subr.bf16.mxu0 0
      %2083 = vmatpush2.bf16.msra.mxu0 0
      %2084 = vmatprep.subr.bf16.mxu0 0
      %2085 = vmatpush2.bf16.msra.mxu0 0
      %2086 = vmatprep.subr.bf16.mxu0 0
      %2087 = vmatpush2.bf16.msra.mxu0 0
      %2088 = vmatprep.mubr.bf16.mxu0 0
      %2089 = vmatmul.mubr.bf16.gmra.mxu0 %v2051
      %v2090 = vpop.f32.mrf.mxu0
      %v2091 = vadd.f32 0.0, %v2090
      %v2092 = vpop.f32.mrf.mxu0
      %v2093 = vpop.f32.mrf.mxu0
      %v2094 = vpop.f32.mrf.mxu0
      %2095 = vdwg.mxu0
      %v2096 = vpack.c.bf16 %v2091, %v2091
      %s2097 = scalar_lea.vmem %s10, 12
      %v2098 = vld [vmem:[%s2097] sm:$0xf]
      %v2100 = vsel %vm922, %v2096, 0
      %v2103 = vsel %vm993, %v2098, 0
      %2105 = vmatprep.subr.bf16.mxu0 0
      %2106 = vmatpush1.bf16.msra.mxu0 0
      %2107 = vmatprep.subr.bf16.mxu0 0
      %2108 = vmatpush1.bf16.msra.mxu0 0
      %2109 = vmatprep.subr.bf16.mxu0 0
      %2110 = vmatpush1.bf16.msra.mxu0 0
      %2111 = vmatprep.subr.bf16.mxu0 0
      %2112 = vmatpush1.bf16.msra.mxu0 0
      %2113 = vmatprep.subr.bf16.mxu0 0
      %2114 = vmatpush1.bf16.msra.mxu0 0
      %2115 = vmatprep.subr.bf16.mxu0 0
      %2116 = vmatpush1.bf16.msra.mxu0 0
      %2117 = vmatprep.subr.bf16.mxu0 0
      %2118 = vmatpush1.bf16.msra.mxu0 0
      %2119 = vmatprep.subr.bf16.mxu0 0
      %2120 = vmatpush1.bf16.msra.mxu0 %v2103
      %2121 = vmatprep.subr.bf16.mxu0 0
      %2122 = vmatpush2.bf16.msra.mxu0 0
      %2123 = vmatprep.subr.bf16.mxu0 0
      %2124 = vmatpush2.bf16.msra.mxu0 0
      %2125 = vmatprep.subr.bf16.mxu0 0
      %2126 = vmatpush2.bf16.msra.mxu0 0
      %2127 = vmatprep.subr.bf16.mxu0 0
      %2128 = vmatpush2.bf16.msra.mxu0 0
      %2129 = vmatprep.subr.bf16.mxu0 0
      %2130 = vmatpush2.bf16.msra.mxu0 0
      %2131 = vmatprep.subr.bf16.mxu0 0
      %2132 = vmatpush2.bf16.msra.mxu0 0
      %2133 = vmatprep.subr.bf16.mxu0 0
      %2134 = vmatpush2.bf16.msra.mxu0 0
      %2135 = vmatprep.subr.bf16.mxu0 0
      %2136 = vmatpush2.bf16.msra.mxu0 0
      %2137 = vmatprep.mubr.bf16.mxu0 0
      %2138 = vmatmul.mubr.bf16.gmra.mxu0 %v2100
      %v2139 = vpop.f32.mrf.mxu0
      %v2140 = vadd.f32 0.0, %v2139
      %v2141 = vpop.f32.mrf.mxu0
      %v2142 = vpop.f32.mrf.mxu0
      %v2143 = vpop.f32.mrf.mxu0
      %2144 = vdwg.mxu0
      %v2145 = vadd.f32 %v1791, %v2140
      %v2146 = vld [vmem:[%s11] sm:$0x1]
      %v2148 = vlaneseq
      %v2149 = vshrl.u32 %v2148, 7
      %v2150 = vsub.s32 0, %v2149
      %v2151 = vrot.slane %v2146, %v2150
      %v2153 = vadd.f32 %v2145, %v2151
      %v2154 = vadd.f32 %v725, %v2153
      %v2155 = vld [vmem:[%s12] sm:$0x1]
      %v2156 = vld [vmem:[%s13] sm:$0x1]
      %v2157 = vsel %vm697, %v2154, 0.0
      %2158 = vadd.xlane.f32.xlu0 %v2157
      %v2159 = vpop.xlane.xlu0 %2158
      %v2160 = vmul.f32 %v2159, %v701
      %v2161 = vsub.f32 %v2154, %v2160
      %v2162 = vmul.f32 %v2161, %v2161
      %v2163 = vsel %vm697, %v2162, 0.0
      %2164 = vadd.xlane.f32.xlu0 %v2163
      %v2165 = vpop.xlane.xlu0 %2164
      %v2166 = vmul.f32 %v2165, %v701
      %v2167 = vadd.f32 %v2166, 1e-12
      %v2168 = vrsqrt.pop %v2167
      %v2169 = vmul.f32 %v2161, %v2168
      %v2171 = vlaneseq
      %v2172 = vshrl.u32 %v2171, 7
      %v2173 = vsub.s32 0, %v2172
      %v2174 = vrot.slane %v2155, %v2173
      %v2176 = vmul.f32 %v2169, %v2174
      %v2178 = vlaneseq
      %v2179 = vshrl.u32 %v2178, 7
      %v2180 = vsub.s32 0, %v2179
      %v2181 = vrot.slane %v2156, %v2180
      %v2183 = vadd.f32 %v2176, %v2181
      %v2184 = vpack.c.bf16 %v2183, %v2183
      %v2185 = vld [vmem:[%s14] sm:$0xf]
      %v2186 = vld [vmem:[%s14 + $0x4] sm:$0xf]
      %v2187 = vld [vmem:[%s14 + $0x8] sm:$0xf]
      %v2188 = vld [vmem:[%s14 + $0xc] sm:$0xf]
      %v2189 = vld [vmem:[%s15] sm:$0x1]
      %v2191 = vlaneseq
      %v2192 = vshrl.u32 %v2191, 7
      %v2193 = vsub.s32 0, %v2192
      %v2194 = vrot.slane %v2189, %v2193
      %v2200 = vunpack.c.l.b16 %v2185
      %v2201 = vunpack.c.l.b16 %v2186
      %v2202 = vunpack.c.l.b16 %v2187
      %v2203 = vunpack.c.l.b16 %v2188
      %v2204 = vpack.c.b16 %v2201, %v2200
      %v2205 = vpack.c.b16 %v2203, %v2202
      %v2209 = vsel %vm697, %v2184, 0
      %2211 = vmatprep.subr.bf16.mxu0 0
      %2212 = vmatpush1.bf16.msra.mxu0 0
      %2213 = vmatprep.subr.bf16.mxu0 0
      %2214 = vmatpush1.bf16.msra.mxu0 0
      %2215 = vmatprep.subr.bf16.mxu0 0
      %2216 = vmatpush1.bf16.msra.mxu0 0
      %2217 = vmatprep.subr.bf16.mxu0 0
      %2218 = vmatpush1.bf16.msra.mxu0 0
      %2219 = vmatprep.subr.bf16.mxu0 0
      %2220 = vmatpush1.bf16.msra.mxu0 0
      %2221 = vmatprep.subr.bf16.mxu0 0
      %2222 = vmatpush1.bf16.msra.mxu0 0
      %2223 = vmatprep.subr.bf16.mxu0 0
      %2224 = vmatpush1.bf16.msra.mxu0 %v2205
      %2225 = vmatprep.subr.bf16.mxu0 0
      %2226 = vmatpush1.bf16.msra.mxu0 %v2204
      %2227 = vmatprep.subr.bf16.mxu0 0
      %2228 = vmatpush2.bf16.msra.mxu0 0
      %2229 = vmatprep.subr.bf16.mxu0 0
      %2230 = vmatpush2.bf16.msra.mxu0 0
      %2231 = vmatprep.subr.bf16.mxu0 0
      %2232 = vmatpush2.bf16.msra.mxu0 0
      %2233 = vmatprep.subr.bf16.mxu0 0
      %2234 = vmatpush2.bf16.msra.mxu0 0
      %2235 = vmatprep.subr.bf16.mxu0 0
      %2236 = vmatpush2.bf16.msra.mxu0 0
      %2237 = vmatprep.subr.bf16.mxu0 0
      %2238 = vmatpush2.bf16.msra.mxu0 0
      %2239 = vmatprep.subr.bf16.mxu0 0
      %2240 = vmatpush2.bf16.msra.mxu0 0
      %2241 = vmatprep.subr.bf16.mxu0 0
      %2242 = vmatpush2.bf16.msra.mxu0 0
      %2243 = vmatprep.mubr.bf16.mxu0 0
      %2244 = vmatmul.mubr.bf16.gmra.mxu0 %v2209
      %v2245 = vpop.f32.mrf.mxu0
      %v2246 = vadd.f32 %v2194, %v2245
      %v2247 = vpop.f32.mrf.mxu0
      %v2248 = vpop.f32.mrf.mxu0
      %v2249 = vpop.f32.mrf.mxu0
      %2250 = vdwg.mxu0
      %v2251 = vmul.f32 %v2246, 0.5
      %v2252 = vmul.f32 %v2246, 0.044715
      %v2253 = vmul.f32 %v2252, %v2246
      %v2254 = vmul.f32 %v2253, %v2246
      %v2255 = vadd.f32 %v2246, %v2254
      %v2256 = vmul.f32 %v2255, 0.7978846
      %v2257 = vtanh.pop %v2256
      %v2258 = vadd.f32 %v2257, 1.0
      %v2259 = vmul.f32 %v2251, %v2258
      %v2260 = vpack.c.bf16 %v2259, %v2259
      %v2261 = vld [vmem:[%s16] sm:$0xf]
      %v2262 = vld [vmem:[%s16 + $0x4] sm:$0xf]
      %v2263 = vld [vmem:[%s16 + $0x8] sm:$0xf]
      %v2264 = vld [vmem:[%s16 + $0xc] sm:$0xf]
      %v2265 = vld [vmem:[%s16 + $0x10] sm:$0xf]
      %v2266 = vld [vmem:[%s16 + $0x14] sm:$0xf]
      %v2267 = vld [vmem:[%s16 + $0x18] sm:$0xf]
      %v2268 = vld [vmem:[%s16 + $0x1c] sm:$0xf]
      %v2269 = vld [vmem:[%s17] sm:$0x1]
      %v2271 = vlaneseq
      %v2272 = vshrl.u32 %v2271, 7
      %v2273 = vsub.s32 0, %v2272
      %v2274 = vrot.slane %v2269, %v2273
      %v2284 = vunpack.c.l.b16 %v2261
      %v2285 = vunpack.c.l.b16 %v2262
      %v2286 = vunpack.c.l.b16 %v2263
      %v2287 = vunpack.c.l.b16 %v2264
      %v2288 = vunpack.c.l.b16 %v2265
      %v2289 = vunpack.c.l.b16 %v2266
      %v2290 = vunpack.c.l.b16 %v2267
      %v2291 = vunpack.c.l.b16 %v2268
      %v2292 = vpack.c.b16 %v2285, %v2284
      %v2293 = vpack.c.b16 %v2287, %v2286
      %v2294 = vpack.c.b16 %v2289, %v2288
      %v2295 = vpack.c.b16 %v2291, %v2290
      %vm2300 = vcmask 523264
      %v2302 = vsel %vm2300, %v2260, 0
      %2304 = vmatprep.subr.bf16.mxu0 0
      %2305 = vmatpush1.bf16.msra.mxu0 0
      %2306 = vmatprep.subr.bf16.mxu0 0
      %2307 = vmatpush1.bf16.msra.mxu0 0
      %2308 = vmatprep.subr.bf16.mxu0 0
      %2309 = vmatpush1.bf16.msra.mxu0 0
      %2310 = vmatprep.subr.bf16.mxu0 0
      %2311 = vmatpush1.bf16.msra.mxu0 0
      %2312 = vmatprep.subr.bf16.mxu0 0
      %2313 = vmatpush1.bf16.msra.mxu0 %v2295
      %2314 = vmatprep.subr.bf16.mxu0 0
      %2315 = vmatpush1.bf16.msra.mxu0 %v2294
      %2316 = vmatprep.subr.bf16.mxu0 0
      %2317 = vmatpush1.bf16.msra.mxu0 %v2293
      %2318 = vmatprep.subr.bf16.mxu0 0
      %2319 = vmatpush1.bf16.msra.mxu0 %v2292
      %2320 = vmatprep.subr.bf16.mxu0 0
      %2321 = vmatpush2.bf16.msra.mxu0 0
      %2322 = vmatprep.subr.bf16.mxu0 0
      %2323 = vmatpush2.bf16.msra.mxu0 0
      %2324 = vmatprep.subr.bf16.mxu0 0
      %2325 = vmatpush2.bf16.msra.mxu0 0
      %2326 = vmatprep.subr.bf16.mxu0 0
      %2327 = vmatpush2.bf16.msra.mxu0 0
      %2328 = vmatprep.subr.bf16.mxu0 0
      %2329 = vmatpush2.bf16.msra.mxu0 0
      %2330 = vmatprep.subr.bf16.mxu0 0
      %2331 = vmatpush2.bf16.msra.mxu0 0
      %2332 = vmatprep.subr.bf16.mxu0 0
      %2333 = vmatpush2.bf16.msra.mxu0 0
      %2334 = vmatprep.subr.bf16.mxu0 0
      %2335 = vmatpush2.bf16.msra.mxu0 0
      %2336 = vmatprep.mubr.bf16.mxu0 0
      %2337 = vmatmul.mubr.bf16.gmra.mxu0 %v2302
      %v2338 = vpop.f32.mrf.mxu0
      %v2339 = vadd.f32 %v2274, %v2338
      %v2340 = vpop.f32.mrf.mxu0
      %v2341 = vpop.f32.mrf.mxu0
      %v2342 = vpop.f32.mrf.mxu0
      %2343 = vdwg.mxu0
      %v2344 = vadd.f32 %v2183, %v2339
      %v2345 = vld [vmem:[%s18] sm:$0x1]
      %v2346 = vld [vmem:[%s19] sm:$0x1]
      %v2347 = vsel %vm697, %v2344, 0.0
      %2348 = vadd.xlane.f32.xlu0 %v2347
      %v2349 = vpop.xlane.xlu0 %2348
      %v2350 = vmul.f32 %v2349, %v701
      %v2351 = vsub.f32 %v2344, %v2350
      %v2352 = vmul.f32 %v2351, %v2351
      %v2353 = vsel %vm697, %v2352, 0.0
      %2354 = vadd.xlane.f32.xlu0 %v2353
      %v2355 = vpop.xlane.xlu0 %2354
      %v2356 = vmul.f32 %v2355, %v701
      %v2357 = vadd.f32 %v2356, 1e-12
      %v2358 = vrsqrt.pop %v2357
      %v2359 = vmul.f32 %v2351, %v2358
      %v2361 = vlaneseq
      %v2362 = vshrl.u32 %v2361, 7
      %v2363 = vsub.s32 0, %v2362
      %v2364 = vrot.slane %v2345, %v2363
      %v2366 = vmul.f32 %v2359, %v2364
      %v2368 = vlaneseq
      %v2369 = vshrl.u32 %v2368, 7
      %v2370 = vsub.s32 0, %v2369
      %v2371 = vrot.slane %v2346, %v2370
      %v2373 = vadd.f32 %v2366, %v2371
      %v2374 = vpack.c.bf16 %v2373, %v2373
      %s2375 = scalar_lea.vmem %s4, 64
      %v2376 = vld [vmem:[%s2375] sm:$0xf]
      %v2377 = vld [vmem:[%s2375 + $0x4] sm:$0xf]
      %v2378 = vld [vmem:[%s2375 + $0x8] sm:$0xf]
      %v2379 = vld [vmem:[%s2375 + $0xc] sm:$0xf]
      %s2380 = scalar_lea.vmem %s5, 4
      %v2381 = vld [vmem:[%s2380] sm:$0x1]
      %v2383 = vlaneseq
      %v2384 = vshrl.u32 %v2383, 7
      %v2385 = vsub.s32 0, %v2384
      %v2386 = vrot.slane %v2381, %v2385
      %v2392 = vunpack.c.l.b16 %v2376
      %v2393 = vunpack.c.l.b16 %v2377
      %v2394 = vunpack.c.l.b16 %v2378
      %v2395 = vunpack.c.l.b16 %v2379
      %v2396 = vpack.c.b16 %v2393, %v2392
      %v2397 = vpack.c.b16 %v2395, %v2394
      %v2401 = vsel %vm697, %v2374, 0
      %2403 = vmatprep.subr.bf16.mxu0 0
      %2404 = vmatpush1.bf16.msra.mxu0 0
      %2405 = vmatprep.subr.bf16.mxu0 0
      %2406 = vmatpush1.bf16.msra.mxu0 0
      %2407 = vmatprep.subr.bf16.mxu0 0
      %2408 = vmatpush1.bf16.msra.mxu0 0
      %2409 = vmatprep.subr.bf16.mxu0 0
      %2410 = vmatpush1.bf16.msra.mxu0 0
      %2411 = vmatprep.subr.bf16.mxu0 0
      %2412 = vmatpush1.bf16.msra.mxu0 0
      %2413 = vmatprep.subr.bf16.mxu0 0
      %2414 = vmatpush1.bf16.msra.mxu0 0
      %2415 = vmatprep.subr.bf16.mxu0 0
      %2416 = vmatpush1.bf16.msra.mxu0 %v2397
      %2417 = vmatprep.subr.bf16.mxu0 0
      %2418 = vmatpush1.bf16.msra.mxu0 %v2396
      %2419 = vmatprep.subr.bf16.mxu0 0
      %2420 = vmatpush2.bf16.msra.mxu0 0
      %2421 = vmatprep.subr.bf16.mxu0 0
      %2422 = vmatpush2.bf16.msra.mxu0 0
      %2423 = vmatprep.subr.bf16.mxu0 0
      %2424 = vmatpush2.bf16.msra.mxu0 0
      %2425 = vmatprep.subr.bf16.mxu0 0
      %2426 = vmatpush2.bf16.msra.mxu0 0
      %2427 = vmatprep.subr.bf16.mxu0 0
      %2428 = vmatpush2.bf16.msra.mxu0 0
      %2429 = vmatprep.subr.bf16.mxu0 0
      %2430 = vmatpush2.bf16.msra.mxu0 0
      %2431 = vmatprep.subr.bf16.mxu0 0
      %2432 = vmatpush2.bf16.msra.mxu0 0
      %2433 = vmatprep.subr.bf16.mxu0 0
      %2434 = vmatpush2.bf16.msra.mxu0 0
      %2435 = vmatprep.mubr.bf16.mxu0 0
      %2436 = vmatmul.mubr.bf16.gmra.mxu0 %v2401
      %v2437 = vpop.f32.mrf.mxu0
      %v2438 = vadd.f32 %v2386, %v2437
      %v2439 = vpop.f32.mrf.mxu0
      %v2440 = vpop.f32.mrf.mxu0
      %v2441 = vpop.f32.mrf.mxu0
      %2442 = vdwg.mxu0
      %s2443 = scalar_lea.vmem %s6, 64
      %v2444 = vld [vmem:[%s2443] sm:$0xf]
      %v2445 = vld [vmem:[%s2443 + $0x4] sm:$0xf]
      %v2446 = vld [vmem:[%s2443 + $0x8] sm:$0xf]
      %v2447 = vld [vmem:[%s2443 + $0xc] sm:$0xf]
      %s2448 = scalar_lea.vmem %s7, 4
      %v2449 = vld [vmem:[%s2448] sm:$0x1]
      %v2451 = vlaneseq
      %v2452 = vshrl.u32 %v2451, 7
      %v2453 = vsub.s32 0, %v2452
      %v2454 = vrot.slane %v2449, %v2453
      %v2460 = vunpack.c.l.b16 %v2444
      %v2461 = vunpack.c.l.b16 %v2445
      %v2462 = vunpack.c.l.b16 %v2446
      %v2463 = vunpack.c.l.b16 %v2447
      %v2464 = vpack.c.b16 %v2461, %v2460
      %v2465 = vpack.c.b16 %v2463, %v2462
      %2468 = vmatprep.subr.bf16.mxu0 0
      %2469 = vmatpush1.bf16.msra.mxu0 0
      %2470 = vmatprep.subr.bf16.mxu0 0
      %2471 = vmatpush1.bf16.msra.mxu0 0
      %2472 = vmatprep.subr.bf16.mxu0 0
      %2473 = vmatpush1.bf16.msra.mxu0 0
      %2474 = vmatprep.subr.bf16.mxu0 0
      %2475 = vmatpush1.bf16.msra.mxu0 0
      %2476 = vmatprep.subr.bf16.mxu0 0
      %2477 = vmatpush1.bf16.msra.mxu0 0
      %2478 = vmatprep.subr.bf16.mxu0 0
      %2479 = vmatpush1.bf16.msra.mxu0 0
      %2480 = vmatprep.subr.bf16.mxu0 0
      %2481 = vmatpush1.bf16.msra.mxu0 %v2465
      %2482 = vmatprep.subr.bf16.mxu0 0
      %2483 = vmatpush1.bf16.msra.mxu0 %v2464
      %2484 = vmatprep.subr.bf16.mxu0 0
      %2485 = vmatpush2.bf16.msra.mxu0 0
      %2486 = vmatprep.subr.bf16.mxu0 0
      %2487 = vmatpush2.bf16.msra.mxu0 0
      %2488 = vmatprep.subr.bf16.mxu0 0
      %2489 = vmatpush2.bf16.msra.mxu0 0
      %2490 = vmatprep.subr.bf16.mxu0 0
      %2491 = vmatpush2.bf16.msra.mxu0 0
      %2492 = vmatprep.subr.bf16.mxu0 0
      %2493 = vmatpush2.bf16.msra.mxu0 0
      %2494 = vmatprep.subr.bf16.mxu0 0
      %2495 = vmatpush2.bf16.msra.mxu0 0
      %2496 = vmatprep.subr.bf16.mxu0 0
      %2497 = vmatpush2.bf16.msra.mxu0 0
      %2498 = vmatprep.subr.bf16.mxu0 0
      %2499 = vmatpush2.bf16.msra.mxu0 0
      %2500 = vmatprep.mubr.bf16.mxu0 0
      %2501 = vmatmul.mubr.bf16.gmra.mxu0 %v2401
      %v2502 = vpop.f32.mrf.mxu0
      %v2503 = vadd.f32 %v2454, %v2502
      %v2504 = vpop.f32.mrf.mxu0
      %v2505 = vpop.f32.mrf.mxu0
      %v2506 = vpop.f32.mrf.mxu0
      %2507 = vdwg.mxu0
      %s2508 = scalar_lea.vmem %s8, 64
      %v2509 = vld [vmem:[%s2508] sm:$0xf]
      %v2510 = vld [vmem:[%s2508 + $0x4] sm:$0xf]
      %v2511 = vld [vmem:[%s2508 + $0x8] sm:$0xf]
      %v2512 = vld [vmem:[%s2508 + $0xc] sm:$0xf]
      %s2513 = scalar_lea.vmem %s9, 4
      %v2514 = vld [vmem:[%s2513] sm:$0x1]
      %v2516 = vlaneseq
      %v2517 = vshrl.u32 %v2516, 7
      %v2518 = vsub.s32 0, %v2517
      %v2519 = vrot.slane %v2514, %v2518
      %v2525 = vunpack.c.l.b16 %v2509
      %v2526 = vunpack.c.l.b16 %v2510
      %v2527 = vunpack.c.l.b16 %v2511
      %v2528 = vunpack.c.l.b16 %v2512
      %v2529 = vpack.c.b16 %v2526, %v2525
      %v2530 = vpack.c.b16 %v2528, %v2527
      %2533 = vmatprep.subr.bf16.mxu0 0
      %2534 = vmatpush1.bf16.msra.mxu0 0
      %2535 = vmatprep.subr.bf16.mxu0 0
      %2536 = vmatpush1.bf16.msra.mxu0 0
      %2537 = vmatprep.subr.bf16.mxu0 0
      %2538 = vmatpush1.bf16.msra.mxu0 0
      %2539 = vmatprep.subr.bf16.mxu0 0
      %2540 = vmatpush1.bf16.msra.mxu0 0
      %2541 = vmatprep.subr.bf16.mxu0 0
      %2542 = vmatpush1.bf16.msra.mxu0 0
      %2543 = vmatprep.subr.bf16.mxu0 0
      %2544 = vmatpush1.bf16.msra.mxu0 0
      %2545 = vmatprep.subr.bf16.mxu0 0
      %2546 = vmatpush1.bf16.msra.mxu0 %v2530
      %2547 = vmatprep.subr.bf16.mxu0 0
      %2548 = vmatpush1.bf16.msra.mxu0 %v2529
      %2549 = vmatprep.subr.bf16.mxu0 0
      %2550 = vmatpush2.bf16.msra.mxu0 0
      %2551 = vmatprep.subr.bf16.mxu0 0
      %2552 = vmatpush2.bf16.msra.mxu0 0
      %2553 = vmatprep.subr.bf16.mxu0 0
      %2554 = vmatpush2.bf16.msra.mxu0 0
      %2555 = vmatprep.subr.bf16.mxu0 0
      %2556 = vmatpush2.bf16.msra.mxu0 0
      %2557 = vmatprep.subr.bf16.mxu0 0
      %2558 = vmatpush2.bf16.msra.mxu0 0
      %2559 = vmatprep.subr.bf16.mxu0 0
      %2560 = vmatpush2.bf16.msra.mxu0 0
      %2561 = vmatprep.subr.bf16.mxu0 0
      %2562 = vmatpush2.bf16.msra.mxu0 0
      %2563 = vmatprep.subr.bf16.mxu0 0
      %2564 = vmatpush2.bf16.msra.mxu0 0
      %2565 = vmatprep.mubr.bf16.mxu0 0
      %2566 = vmatmul.mubr.bf16.gmra.mxu0 %v2401
      %v2567 = vpop.f32.mrf.mxu0
      %v2568 = vadd.f32 %v2519, %v2567
      %v2569 = vpop.f32.mrf.mxu0
      %v2570 = vpop.f32.mrf.mxu0
      %v2571 = vpop.f32.mrf.mxu0
      %2572 = vdwg.mxu0
      %v2573 = vpack.c.bf16 %v2438, %v2438
      %v2574 = vpack.c.bf16 %v2503, %v2503
      %v2576 = vsel %vm922, %v2573, 0
      %v2579 = vsel %vm922, %v2574, 0
      %2581 = vmatprep.subr.bf16.mxu0 0
      %2582 = vmatpush1.bf16.xpose.msra.mxu0 0
      %2583 = vmatprep.subr.bf16.mxu0 0
      %2584 = vmatpush1.bf16.xpose.msra.mxu0 0
      %2585 = vmatprep.subr.bf16.mxu0 0
      %2586 = vmatpush1.bf16.xpose.msra.mxu0 0
      %2587 = vmatprep.subr.bf16.mxu0 0
      %2588 = vmatpush1.bf16.xpose.msra.mxu0 0
      %2589 = vmatprep.subr.bf16.mxu0 0
      %2590 = vmatpush1.bf16.xpose.msra.mxu0 0
      %2591 = vmatprep.subr.bf16.mxu0 0
      %2592 = vmatpush1.bf16.xpose.msra.mxu0 0
      %2593 = vmatprep.subr.bf16.mxu0 0
      %2594 = vmatpush1.bf16.xpose.msra.mxu0 0
      %2595 = vmatprep.subr.bf16.mxu0 0
      %2596 = vmatpush1.bf16.xpose.msra.mxu0 %v2579
      %2597 = vmatprep.subr.bf16.mxu0 0
      %2598 = vmatpush2.bf16.xpose.msra.mxu0 0
      %2599 = vmatprep.subr.bf16.mxu0 0
      %2600 = vmatpush2.bf16.xpose.msra.mxu0 0
      %2601 = vmatprep.subr.bf16.mxu0 0
      %2602 = vmatpush2.bf16.xpose.msra.mxu0 0
      %2603 = vmatprep.subr.bf16.mxu0 0
      %2604 = vmatpush2.bf16.xpose.msra.mxu0 0
      %2605 = vmatprep.subr.bf16.mxu0 0
      %2606 = vmatpush2.bf16.xpose.msra.mxu0 0
      %2607 = vmatprep.subr.bf16.mxu0 0
      %2608 = vmatpush2.bf16.xpose.msra.mxu0 0
      %2609 = vmatprep.subr.bf16.mxu0 0
      %2610 = vmatpush2.bf16.xpose.msra.mxu0 0
      %2611 = vmatprep.subr.bf16.mxu0 0
      %2612 = vmatpush2.bf16.xpose.msra.mxu0 0
      %2613 = vmatprep.mubr.bf16.mxu0 0
      %2614 = vmatmul.mubr.bf16.gmra.mxu0 %v2576
      %v2615 = vpop.f32.mrf.mxu0
      %v2616 = vadd.f32 0.0, %v2615
      %v2617 = vpop.f32.mrf.mxu0
      %v2618 = vpop.f32.mrf.mxu0
      %v2619 = vpop.f32.mrf.mxu0
      %2620 = vdwg.mxu0
      %v2621 = vmul.f32 %v2616, 0.35355338
      %v2622 = vadd.f32 %v2621, %v974
      %v2623 = vsel %vm922, %v2622, -inf
      %2624 = vmax.xlane.f32.xlu0 %v2623
      %v2625 = vpop.xlane.xlu0 %2624
      %v2626 = vsub.f32 %v2622, %v2625
      %v2627 = vmul.f32 %v2626, 1.442695
      %v2628 = vpow.pop %v2627
      %v2629 = vsel %vm922, %v2628, 0.0
      %2630 = vadd.xlane.f32.xlu0 %v2629
      %v2631 = vpop.xlane.xlu0 %2630
      %v2632 = vrcp.pop %v2631
      %v2633 = vmul.f32 %v2628, %v2632
      %v2634 = vpack.c.bf16 %v2633, %v2633
      %v2635 = vpack.c.bf16 %v2568, %v2568
      %v2637 = vsel %vm922, %v2634, 0
      %v2640 = vsel %vm993, %v2635, 0
      %2642 = vmatprep.subr.bf16.mxu0 0
      %2643 = vmatpush1.bf16.msra.mxu0 0
      %2644 = vmatprep.subr.bf16.mxu0 0
      %2645 = vmatpush1.bf16.msra.mxu0 0
      %2646 = vmatprep.subr.bf16.mxu0 0
      %2647 = vmatpush1.bf16.msra.mxu0 0
      %2648 = vmatprep.subr.bf16.mxu0 0
      %2649 = vmatpush1.bf16.msra.mxu0 0
      %2650 = vmatprep.subr.bf16.mxu0 0
      %2651 = vmatpush1.bf16.msra.mxu0 0
      %2652 = vmatprep.subr.bf16.mxu0 0
      %2653 = vmatpush1.bf16.msra.mxu0 0
      %2654 = vmatprep.subr.bf16.mxu0 0
      %2655 = vmatpush1.bf16.msra.mxu0 0
      %2656 = vmatprep.subr.bf16.mxu0 0
      %2657 = vmatpush1.bf16.msra.mxu0 %v2640
      %2658 = vmatprep.subr.bf16.mxu0 0
      %2659 = vmatpush2.bf16.msra.mxu0 0
      %2660 = vmatprep.subr.bf16.mxu0 0
      %2661 = vmatpush2.bf16.msra.mxu0 0
      %2662 = vmatprep.subr.bf16.mxu0 0
      %2663 = vmatpush2.bf16.msra.mxu0 0
      %2664 = vmatprep.subr.bf16.mxu0 0
      %2665 = vmatpush2.bf16.msra.mxu0 0
      %2666 = vmatprep.subr.bf16.mxu0 0
      %2667 = vmatpush2.bf16.msra.mxu0 0
      %2668 = vmatprep.subr.bf16.mxu0 0
      %2669 = vmatpush2.bf16.msra.mxu0 0
      %2670 = vmatprep.subr.bf16.mxu0 0
      %2671 = vmatpush2.bf16.msra.mxu0 0
      %2672 = vmatprep.subr.bf16.mxu0 0
      %2673 = vmatpush2.bf16.msra.mxu0 0
      %2674 = vmatprep.mubr.bf16.mxu0 0
      %2675 = vmatmul.mubr.bf16.gmra.mxu0 %v2637
      %v2676 = vpop.f32.mrf.mxu0
      %v2677 = vadd.f32 0.0, %v2676
      %v2678 = vpop.f32.mrf.mxu0
      %v2679 = vpop.f32.mrf.mxu0
      %v2680 = vpop.f32.mrf.mxu0
      %2681 = vdwg.mxu0
      %v2682 = vpack.c.bf16 %v2677, %v2677
      %s2683 = scalar_lea.vmem %s10, 16
      %v2684 = vld [vmem:[%s2683] sm:$0xf]
      %s2685 = scalar_lea.vmem %s4, 80
      %v2686 = vld [vmem:[%s2685] sm:$0xf]
      %v2687 = vld [vmem:[%s2685 + $0x4] sm:$0xf]
      %v2688 = vld [vmem:[%s2685 + $0x8] sm:$0xf]
      %v2689 = vld [vmem:[%s2685 + $0xc] sm:$0xf]
      %s2690 = scalar_lea.vmem %s5, 5
      %v2691 = vld [vmem:[%s2690] sm:$0x1]
      %v2693 = vlaneseq
      %v2694 = vshrl.u32 %v2693, 7
      %v2695 = vsub.s32 0, %v2694
      %v2696 = vrot.slane %v2691, %v2695
      %v2702 = vunpack.c.l.b16 %v2686
      %v2703 = vunpack.c.l.b16 %v2687
      %v2704 = vunpack.c.l.b16 %v2688
      %v2705 = vunpack.c.l.b16 %v2689
      %v2706 = vpack.c.b16 %v2703, %v2702
      %v2707 = vpack.c.b16 %v2705, %v2704
      %2710 = vmatprep.subr.bf16.mxu0 0
      %2711 = vmatpush1.bf16.msra.mxu0 0
      %2712 = vmatprep.subr.bf16.mxu0 0
      %2713 = vmatpush1.bf16.msra.mxu0 0
      %2714 = vmatprep.subr.bf16.mxu0 0
      %2715 = vmatpush1.bf16.msra.mxu0 0
      %2716 = vmatprep.subr.bf16.mxu0 0
      %2717 = vmatpush1.bf16.msra.mxu0 0
      %2718 = vmatprep.subr.bf16.mxu0 0
      %2719 = vmatpush1.bf16.msra.mxu0 0
      %2720 = vmatprep.subr.bf16.mxu0 0
      %2721 = vmatpush1.bf16.msra.mxu0 0
      %2722 = vmatprep.subr.bf16.mxu0 0
      %2723 = vmatpush1.bf16.msra.mxu0 %v2707
      %2724 = vmatprep.subr.bf16.mxu0 0
      %2725 = vmatpush1.bf16.msra.mxu0 %v2706
      %2726 = vmatprep.subr.bf16.mxu0 0
      %2727 = vmatpush2.bf16.msra.mxu0 0
      %2728 = vmatprep.subr.bf16.mxu0 0
      %2729 = vmatpush2.bf16.msra.mxu0 0
      %2730 = vmatprep.subr.bf16.mxu0 0
      %2731 = vmatpush2.bf16.msra.mxu0 0
      %2732 = vmatprep.subr.bf16.mxu0 0
      %2733 = vmatpush2.bf16.msra.mxu0 0
      %2734 = vmatprep.subr.bf16.mxu0 0
      %2735 = vmatpush2.bf16.msra.mxu0 0
      %2736 = vmatprep.subr.bf16.mxu0 0
      %2737 = vmatpush2.bf16.msra.mxu0 0
      %2738 = vmatprep.subr.bf16.mxu0 0
      %2739 = vmatpush2.bf16.msra.mxu0 0
      %2740 = vmatprep.subr.bf16.mxu0 0
      %2741 = vmatpush2.bf16.msra.mxu0 0
      %2742 = vmatprep.mubr.bf16.mxu0 0
      %2743 = vmatmul.mubr.bf16.gmra.mxu0 %v2401
      %v2744 = vpop.f32.mrf.mxu0
      %v2745 = vadd.f32 %v2696, %v2744
      %v2746 = vpop.f32.mrf.mxu0
      %v2747 = vpop.f32.mrf.mxu0
      %v2748 = vpop.f32.mrf.mxu0
      %2749 = vdwg.mxu0
      %s2750 = scalar_lea.vmem %s6, 80
      %v2751 = vld [vmem:[%s2750] sm:$0xf]
      %v2752 = vld [vmem:[%s2750 + $0x4] sm:$0xf]
      %v2753 = vld [vmem:[%s2750 + $0x8] sm:$0xf]
      %v2754 = vld [vmem:[%s2750 + $0xc] sm:$0xf]
      %s2755 = scalar_lea.vmem %s7, 5
      %v2756 = vld [vmem:[%s2755] sm:$0x1]
      %v2758 = vlaneseq
      %v2759 = vshrl.u32 %v2758, 7
      %v2760 = vsub.s32 0, %v2759
      %v2761 = vrot.slane %v2756, %v2760
      %v2767 = vunpack.c.l.b16 %v2751
      %v2768 = vunpack.c.l.b16 %v2752
      %v2769 = vunpack.c.l.b16 %v2753
      %v2770 = vunpack.c.l.b16 %v2754
      %v2771 = vpack.c.b16 %v2768, %v2767
      %v2772 = vpack.c.b16 %v2770, %v2769
      %2775 = vmatprep.subr.bf16.mxu0 0
      %2776 = vmatpush1.bf16.msra.mxu0 0
      %2777 = vmatprep.subr.bf16.mxu0 0
      %2778 = vmatpush1.bf16.msra.mxu0 0
      %2779 = vmatprep.subr.bf16.mxu0 0
      %2780 = vmatpush1.bf16.msra.mxu0 0
      %2781 = vmatprep.subr.bf16.mxu0 0
      %2782 = vmatpush1.bf16.msra.mxu0 0
      %2783 = vmatprep.subr.bf16.mxu0 0
      %2784 = vmatpush1.bf16.msra.mxu0 0
      %2785 = vmatprep.subr.bf16.mxu0 0
      %2786 = vmatpush1.bf16.msra.mxu0 0
      %2787 = vmatprep.subr.bf16.mxu0 0
      %2788 = vmatpush1.bf16.msra.mxu0 %v2772
      %2789 = vmatprep.subr.bf16.mxu0 0
      %2790 = vmatpush1.bf16.msra.mxu0 %v2771
      %2791 = vmatprep.subr.bf16.mxu0 0
      %2792 = vmatpush2.bf16.msra.mxu0 0
      %2793 = vmatprep.subr.bf16.mxu0 0
      %2794 = vmatpush2.bf16.msra.mxu0 0
      %2795 = vmatprep.subr.bf16.mxu0 0
      %2796 = vmatpush2.bf16.msra.mxu0 0
      %2797 = vmatprep.subr.bf16.mxu0 0
      %2798 = vmatpush2.bf16.msra.mxu0 0
      %2799 = vmatprep.subr.bf16.mxu0 0
      %2800 = vmatpush2.bf16.msra.mxu0 0
      %2801 = vmatprep.subr.bf16.mxu0 0
      %2802 = vmatpush2.bf16.msra.mxu0 0
      %2803 = vmatprep.subr.bf16.mxu0 0
      %2804 = vmatpush2.bf16.msra.mxu0 0
      %2805 = vmatprep.subr.bf16.mxu0 0
      %2806 = vmatpush2.bf16.msra.mxu0 0
      %2807 = vmatprep.mubr.bf16.mxu0 0
      %2808 = vmatmul.mubr.bf16.gmra.mxu0 %v2401
      %v2809 = vpop.f32.mrf.mxu0
      %v2810 = vadd.f32 %v2761, %v2809
      %v2811 = vpop.f32.mrf.mxu0
      %v2812 = vpop.f32.mrf.mxu0
      %v2813 = vpop.f32.mrf.mxu0
      %2814 = vdwg.mxu0
      %s2815 = scalar_lea.vmem %s8, 80
      %v2816 = vld [vmem:[%s2815] sm:$0xf]
      %v2817 = vld [vmem:[%s2815 + $0x4] sm:$0xf]
      %v2818 = vld [vmem:[%s2815 + $0x8] sm:$0xf]
      %v2819 = vld [vmem:[%s2815 + $0xc] sm:$0xf]
      %s2820 = scalar_lea.vmem %s9, 5
      %v2821 = vld [vmem:[%s2820] sm:$0x1]
      %v2823 = vlaneseq
      %v2824 = vshrl.u32 %v2823, 7
      %v2825 = vsub.s32 0, %v2824
      %v2826 = vrot.slane %v2821, %v2825
      %v2832 = vunpack.c.l.b16 %v2816
      %v2833 = vunpack.c.l.b16 %v2817
      %v2834 = vunpack.c.l.b16 %v2818
      %v2835 = vunpack.c.l.b16 %v2819
      %v2836 = vpack.c.b16 %v2833, %v2832
      %v2837 = vpack.c.b16 %v2835, %v2834
      %2840 = vmatprep.subr.bf16.mxu0 0
      %2841 = vmatpush1.bf16.msra.mxu0 0
      %2842 = vmatprep.subr.bf16.mxu0 0
      %2843 = vmatpush1.bf16.msra.mxu0 0
      %2844 = vmatprep.subr.bf16.mxu0 0
      %2845 = vmatpush1.bf16.msra.mxu0 0
      %2846 = vmatprep.subr.bf16.mxu0 0
      %2847 = vmatpush1.bf16.msra.mxu0 0
      %2848 = vmatprep.subr.bf16.mxu0 0
      %2849 = vmatpush1.bf16.msra.mxu0 0
      %2850 = vmatprep.subr.bf16.mxu0 0
      %2851 = vmatpush1.bf16.msra.mxu0 0
      %2852 = vmatprep.subr.bf16.mxu0 0
      %2853 = vmatpush1.bf16.msra.mxu0 %v2837
      %2854 = vmatprep.subr.bf16.mxu0 0
      %2855 = vmatpush1.bf16.msra.mxu0 %v2836
      %2856 = vmatprep.subr.bf16.mxu0 0
      %2857 = vmatpush2.bf16.msra.mxu0 0
      %2858 = vmatprep.subr.bf16.mxu0 0
      %2859 = vmatpush2.bf16.msra.mxu0 0
      %2860 = vmatprep.subr.bf16.mxu0 0
      %2861 = vmatpush2.bf16.msra.mxu0 0
      %2862 = vmatprep.subr.bf16.mxu0 0
      %2863 = vmatpush2.bf16.msra.mxu0 0
      %2864 = vmatprep.subr.bf16.mxu0 0
      %2865 = vmatpush2.bf16.msra.mxu0 0
      %2866 = vmatprep.subr.bf16.mxu0 0
      %2867 = vmatpush2.bf16.msra.mxu0 0
      %2868 = vmatprep.subr.bf16.mxu0 0
      %2869 = vmatpush2.bf16.msra.mxu0 0
      %2870 = vmatprep.subr.bf16.mxu0 0
      %2871 = vmatpush2.bf16.msra.mxu0 0
      %2872 = vmatprep.mubr.bf16.mxu0 0
      %2873 = vmatmul.mubr.bf16.gmra.mxu0 %v2401
      %v2874 = vpop.f32.mrf.mxu0
      %v2875 = vadd.f32 %v2826, %v2874
      %v2876 = vpop.f32.mrf.mxu0
      %v2877 = vpop.f32.mrf.mxu0
      %v2878 = vpop.f32.mrf.mxu0
      %2879 = vdwg.mxu0
      %v2880 = vpack.c.bf16 %v2745, %v2745
      %v2881 = vpack.c.bf16 %v2810, %v2810
      %v2883 = vsel %vm922, %v2880, 0
      %v2886 = vsel %vm922, %v2881, 0
      %2888 = vmatprep.subr.bf16.mxu0 0
      %2889 = vmatpush1.bf16.xpose.msra.mxu0 0
      %2890 = vmatprep.subr.bf16.mxu0 0
      %2891 = vmatpush1.bf16.xpose.msra.mxu0 0
      %2892 = vmatprep.subr.bf16.mxu0 0
      %2893 = vmatpush1.bf16.xpose.msra.mxu0 0
      %2894 = vmatprep.subr.bf16.mxu0 0
      %2895 = vmatpush1.bf16.xpose.msra.mxu0 0
      %2896 = vmatprep.subr.bf16.mxu0 0
      %2897 = vmatpush1.bf16.xpose.msra.mxu0 0
      %2898 = vmatprep.subr.bf16.mxu0 0
      %2899 = vmatpush1.bf16.xpose.msra.mxu0 0
      %2900 = vmatprep.subr.bf16.mxu0 0
      %2901 = vmatpush1.bf16.xpose.msra.mxu0 0
      %2902 = vmatprep.subr.bf16.mxu0 0
      %2903 = vmatpush1.bf16.xpose.msra.mxu0 %v2886
      %2904 = vmatprep.subr.bf16.mxu0 0
      %2905 = vmatpush2.bf16.xpose.msra.mxu0 0
      %2906 = vmatprep.subr.bf16.mxu0 0
      %2907 = vmatpush2.bf16.xpose.msra.mxu0 0
      %2908 = vmatprep.subr.bf16.mxu0 0
      %2909 = vmatpush2.bf16.xpose.msra.mxu0 0
      %2910 = vmatprep.subr.bf16.mxu0 0
      %2911 = vmatpush2.bf16.xpose.msra.mxu0 0
      %2912 = vmatprep.subr.bf16.mxu0 0
      %2913 = vmatpush2.bf16.xpose.msra.mxu0 0
      %2914 = vmatprep.subr.bf16.mxu0 0
      %2915 = vmatpush2.bf16.xpose.msra.mxu0 0
      %2916 = vmatprep.subr.bf16.mxu0 0
      %2917 = vmatpush2.bf16.xpose.msra.mxu0 0
      %2918 = vmatprep.subr.bf16.mxu0 0
      %2919 = vmatpush2.bf16.xpose.msra.mxu0 0
      %2920 = vmatprep.mubr.bf16.mxu0 0
      %2921 = vmatmul.mubr.bf16.gmra.mxu0 %v2883
      %v2922 = vpop.f32.mrf.mxu0
      %v2923 = vadd.f32 0.0, %v2922
      %v2924 = vpop.f32.mrf.mxu0
      %v2925 = vpop.f32.mrf.mxu0
      %v2926 = vpop.f32.mrf.mxu0
      %2927 = vdwg.mxu0
      %v2928 = vmul.f32 %v2923, 0.35355338
      %v2929 = vadd.f32 %v2928, %v974
      %v2930 = vsel %vm922, %v2929, -inf
      %2931 = vmax.xlane.f32.xlu0 %v2930
      %v2932 = vpop.xlane.xlu0 %2931
      %v2933 = vsub.f32 %v2929, %v2932
      %v2934 = vmul.f32 %v2933, 1.442695
      %v2935 = vpow.pop %v2934
      %v2936 = vsel %vm922, %v2935, 0.0
      %2937 = vadd.xlane.f32.xlu0 %v2936
      %v2938 = vpop.xlane.xlu0 %2937
      %v2939 = vrcp.pop %v2938
      %v2940 = vmul.f32 %v2935, %v2939
      %v2941 = vpack.c.bf16 %v2940, %v2940
      %v2942 = vpack.c.bf16 %v2875, %v2875
      %v2944 = vsel %vm922, %v2941, 0
      %v2947 = vsel %vm993, %v2942, 0
      %2949 = vmatprep.subr.bf16.mxu0 0
      %2950 = vmatpush1.bf16.msra.mxu0 0
      %2951 = vmatprep.subr.bf16.mxu0 0
      %2952 = vmatpush1.bf16.msra.mxu0 0
      %2953 = vmatprep.subr.bf16.mxu0 0
      %2954 = vmatpush1.bf16.msra.mxu0 0
      %2955 = vmatprep.subr.bf16.mxu0 0
      %2956 = vmatpush1.bf16.msra.mxu0 0
      %2957 = vmatprep.subr.bf16.mxu0 0
      %2958 = vmatpush1.bf16.msra.mxu0 0
      %2959 = vmatprep.subr.bf16.mxu0 0
      %2960 = vmatpush1.bf16.msra.mxu0 0
      %2961 = vmatprep.subr.bf16.mxu0 0
      %2962 = vmatpush1.bf16.msra.mxu0 0
      %2963 = vmatprep.subr.bf16.mxu0 0
      %2964 = vmatpush1.bf16.msra.mxu0 %v2947
      %2965 = vmatprep.subr.bf16.mxu0 0
      %2966 = vmatpush2.bf16.msra.mxu0 0
      %2967 = vmatprep.subr.bf16.mxu0 0
      %2968 = vmatpush2.bf16.msra.mxu0 0
      %2969 = vmatprep.subr.bf16.mxu0 0
      %2970 = vmatpush2.bf16.msra.mxu0 0
      %2971 = vmatprep.subr.bf16.mxu0 0
      %2972 = vmatpush2.bf16.msra.mxu0 0
      %2973 = vmatprep.subr.bf16.mxu0 0
      %2974 = vmatpush2.bf16.msra.mxu0 0
      %2975 = vmatprep.subr.bf16.mxu0 0
      %2976 = vmatpush2.bf16.msra.mxu0 0
      %2977 = vmatprep.subr.bf16.mxu0 0
      %2978 = vmatpush2.bf16.msra.mxu0 0
      %2979 = vmatprep.subr.bf16.mxu0 0
      %2980 = vmatpush2.bf16.msra.mxu0 0
      %2981 = vmatprep.mubr.bf16.mxu0 0
      %2982 = vmatmul.mubr.bf16.gmra.mxu0 %v2944
      %v2983 = vpop.f32.mrf.mxu0
      %v2984 = vadd.f32 0.0, %v2983
      %v2985 = vpop.f32.mrf.mxu0
      %v2986 = vpop.f32.mrf.mxu0
      %v2987 = vpop.f32.mrf.mxu0
      %2988 = vdwg.mxu0
      %v2989 = vpack.c.bf16 %v2984, %v2984
      %s2990 = scalar_lea.vmem %s10, 20
      %v2991 = vld [vmem:[%s2990] sm:$0xf]
      %v2993 = vsel %vm922, %v2989, 0
      %v2996 = vsel %vm993, %v2991, 0
      %2998 = vmatprep.subr.bf16.mxu0 0
      %2999 = vmatpush1.bf16.msra.mxu0 0
      %3000 = vmatprep.subr.bf16.mxu0 0
      %3001 = vmatpush1.bf16.msra.mxu0 0
      %3002 = vmatprep.subr.bf16.mxu0 0
      %3003 = vmatpush1.bf16.msra.mxu0 0
      %3004 = vmatprep.subr.bf16.mxu0 0
      %3005 = vmatpush1.bf16.msra.mxu0 0
      %3006 = vmatprep.subr.bf16.mxu0 0
      %3007 = vmatpush1.bf16.msra.mxu0 0
      %3008 = vmatprep.subr.bf16.mxu0 0
      %3009 = vmatpush1.bf16.msra.mxu0 0
      %3010 = vmatprep.subr.bf16.mxu0 0
      %3011 = vmatpush1.bf16.msra.mxu0 0
      %3012 = vmatprep.subr.bf16.mxu0 0
      %3013 = vmatpush1.bf16.msra.mxu0 %v2996
      %3014 = vmatprep.subr.bf16.mxu0 0
      %3015 = vmatpush2.bf16.msra.mxu0 0
      %3016 = vmatprep.subr.bf16.mxu0 0
      %3017 = vmatpush2.bf16.msra.mxu0 0
      %3018 = vmatprep.subr.bf16.mxu0 0
      %3019 = vmatpush2.bf16.msra.mxu0 0
      %3020 = vmatprep.subr.bf16.mxu0 0
      %3021 = vmatpush2.bf16.msra.mxu0 0
      %3022 = vmatprep.subr.bf16.mxu0 0
      %3023 = vmatpush2.bf16.msra.mxu0 0
      %3024 = vmatprep.subr.bf16.mxu0 0
      %3025 = vmatpush2.bf16.msra.mxu0 0
      %3026 = vmatprep.subr.bf16.mxu0 0
      %3027 = vmatpush2.bf16.msra.mxu0 0
      %3028 = vmatprep.subr.bf16.mxu0 0
      %3029 = vmatpush2.bf16.msra.mxu0 0
      %3030 = vmatprep.mubr.bf16.mxu0 0
      %3031 = vmatmul.mubr.bf16.gmra.mxu0 %v2993
      %v3032 = vpop.f32.mrf.mxu0
      %v3033 = vadd.f32 0.0, %v3032
      %v3034 = vpop.f32.mrf.mxu0
      %v3035 = vpop.f32.mrf.mxu0
      %v3036 = vpop.f32.mrf.mxu0
      %3037 = vdwg.mxu0
      %v3039 = vsel %vm922, %v2682, 0
      %v3042 = vsel %vm993, %v2684, 0
      %3044 = vmatprep.subr.bf16.mxu0 0
      %3045 = vmatpush1.bf16.msra.mxu0 0
      %3046 = vmatprep.subr.bf16.mxu0 0
      %3047 = vmatpush1.bf16.msra.mxu0 0
      %3048 = vmatprep.subr.bf16.mxu0 0
      %3049 = vmatpush1.bf16.msra.mxu0 0
      %3050 = vmatprep.subr.bf16.mxu0 0
      %3051 = vmatpush1.bf16.msra.mxu0 0
      %3052 = vmatprep.subr.bf16.mxu0 0
      %3053 = vmatpush1.bf16.msra.mxu0 0
      %3054 = vmatprep.subr.bf16.mxu0 0
      %3055 = vmatpush1.bf16.msra.mxu0 0
      %3056 = vmatprep.subr.bf16.mxu0 0
      %3057 = vmatpush1.bf16.msra.mxu0 0
      %3058 = vmatprep.subr.bf16.mxu0 0
      %3059 = vmatpush1.bf16.msra.mxu0 %v3042
      %3060 = vmatprep.subr.bf16.mxu0 0
      %3061 = vmatpush2.bf16.msra.mxu0 0
      %3062 = vmatprep.subr.bf16.mxu0 0
      %3063 = vmatpush2.bf16.msra.mxu0 0
      %3064 = vmatprep.subr.bf16.mxu0 0
      %3065 = vmatpush2.bf16.msra.mxu0 0
      %3066 = vmatprep.subr.bf16.mxu0 0
      %3067 = vmatpush2.bf16.msra.mxu0 0
      %3068 = vmatprep.subr.bf16.mxu0 0
      %3069 = vmatpush2.bf16.msra.mxu0 0
      %3070 = vmatprep.subr.bf16.mxu0 0
      %3071 = vmatpush2.bf16.msra.mxu0 0
      %3072 = vmatprep.subr.bf16.mxu0 0
      %3073 = vmatpush2.bf16.msra.mxu0 0
      %3074 = vmatprep.subr.bf16.mxu0 0
      %3075 = vmatpush2.bf16.msra.mxu0 0
      %3076 = vmatprep.mubr.bf16.mxu0 0
      %3077 = vmatmul.mubr.bf16.gmra.mxu0 %v3039
      %v3078 = vpop.f32.mrf.mxu0
      %v3079 = vadd.f32 %v3033, %v3078
      %v3080 = vpop.f32.mrf.mxu0
      %v3081 = vpop.f32.mrf.mxu0
      %v3082 = vpop.f32.mrf.mxu0
      %3083 = vdwg.mxu0
      %s3084 = scalar_lea.vmem %s4, 96
      %v3085 = vld [vmem:[%s3084] sm:$0xf]
      %v3086 = vld [vmem:[%s3084 + $0x4] sm:$0xf]
      %v3087 = vld [vmem:[%s3084 + $0x8] sm:$0xf]
      %v3088 = vld [vmem:[%s3084 + $0xc] sm:$0xf]
      %s3089 = scalar_lea.vmem %s5, 6
      %v3090 = vld [vmem:[%s3089] sm:$0x1]
      %v3092 = vlaneseq
      %v3093 = vshrl.u32 %v3092, 7
      %v3094 = vsub.s32 0, %v3093
      %v3095 = vrot.slane %v3090, %v3094
      %v3101 = vunpack.c.l.b16 %v3085
      %v3102 = vunpack.c.l.b16 %v3086
      %v3103 = vunpack.c.l.b16 %v3087
      %v3104 = vunpack.c.l.b16 %v3088
      %v3105 = vpack.c.b16 %v3102, %v3101
      %v3106 = vpack.c.b16 %v3104, %v3103
      %3109 = vmatprep.subr.bf16.mxu0 0
      %3110 = vmatpush1.bf16.msra.mxu0 0
      %3111 = vmatprep.subr.bf16.mxu0 0
      %3112 = vmatpush1.bf16.msra.mxu0 0
      %3113 = vmatprep.subr.bf16.mxu0 0
      %3114 = vmatpush1.bf16.msra.mxu0 0
      %3115 = vmatprep.subr.bf16.mxu0 0
      %3116 = vmatpush1.bf16.msra.mxu0 0
      %3117 = vmatprep.subr.bf16.mxu0 0
      %3118 = vmatpush1.bf16.msra.mxu0 0
      %3119 = vmatprep.subr.bf16.mxu0 0
      %3120 = vmatpush1.bf16.msra.mxu0 0
      %3121 = vmatprep.subr.bf16.mxu0 0
      %3122 = vmatpush1.bf16.msra.mxu0 %v3106
      %3123 = vmatprep.subr.bf16.mxu0 0
      %3124 = vmatpush1.bf16.msra.mxu0 %v3105
      %3125 = vmatprep.subr.bf16.mxu0 0
      %3126 = vmatpush2.bf16.msra.mxu0 0
      %3127 = vmatprep.subr.bf16.mxu0 0
      %3128 = vmatpush2.bf16.msra.mxu0 0
      %3129 = vmatprep.subr.bf16.mxu0 0
      %3130 = vmatpush2.bf16.msra.mxu0 0
      %3131 = vmatprep.subr.bf16.mxu0 0
      %3132 = vmatpush2.bf16.msra.mxu0 0
      %3133 = vmatprep.subr.bf16.mxu0 0
      %3134 = vmatpush2.bf16.msra.mxu0 0
      %3135 = vmatprep.subr.bf16.mxu0 0
      %3136 = vmatpush2.bf16.msra.mxu0 0
      %3137 = vmatprep.subr.bf16.mxu0 0
      %3138 = vmatpush2.bf16.msra.mxu0 0
      %3139 = vmatprep.subr.bf16.mxu0 0
      %3140 = vmatpush2.bf16.msra.mxu0 0
      %3141 = vmatprep.mubr.bf16.mxu0 0
      %3142 = vmatmul.mubr.bf16.gmra.mxu0 %v2401
      %v3143 = vpop.f32.mrf.mxu0
      %v3144 = vadd.f32 %v3095, %v3143
      %v3145 = vpop.f32.mrf.mxu0
      %v3146 = vpop.f32.mrf.mxu0
      %v3147 = vpop.f32.mrf.mxu0
      %3148 = vdwg.mxu0
      %s3149 = scalar_lea.vmem %s6, 96
      %v3150 = vld [vmem:[%s3149] sm:$0xf]
      %v3151 = vld [vmem:[%s3149 + $0x4] sm:$0xf]
      %v3152 = vld [vmem:[%s3149 + $0x8] sm:$0xf]
      %v3153 = vld [vmem:[%s3149 + $0xc] sm:$0xf]
      %s3154 = scalar_lea.vmem %s7, 6
      %v3155 = vld [vmem:[%s3154] sm:$0x1]
      %v3157 = vlaneseq
      %v3158 = vshrl.u32 %v3157, 7
      %v3159 = vsub.s32 0, %v3158
      %v3160 = vrot.slane %v3155, %v3159
      %v3166 = vunpack.c.l.b16 %v3150
      %v3167 = vunpack.c.l.b16 %v3151
      %v3168 = vunpack.c.l.b16 %v3152
      %v3169 = vunpack.c.l.b16 %v3153
      %v3170 = vpack.c.b16 %v3167, %v3166
      %v3171 = vpack.c.b16 %v3169, %v3168
      %3174 = vmatprep.subr.bf16.mxu0 0
      %3175 = vmatpush1.bf16.msra.mxu0 0
      %3176 = vmatprep.subr.bf16.mxu0 0
      %3177 = vmatpush1.bf16.msra.mxu0 0
      %3178 = vmatprep.subr.bf16.mxu0 0
      %3179 = vmatpush1.bf16.msra.mxu0 0
      %3180 = vmatprep.subr.bf16.mxu0 0
      %3181 = vmatpush1.bf16.msra.mxu0 0
      %3182 = vmatprep.subr.bf16.mxu0 0
      %3183 = vmatpush1.bf16.msra.mxu0 0
      %3184 = vmatprep.subr.bf16.mxu0 0
      %3185 = vmatpush1.bf16.msra.mxu0 0
      %3186 = vmatprep.subr.bf16.mxu0 0
      %3187 = vmatpush1.bf16.msra.mxu0 %v3171
      %3188 = vmatprep.subr.bf16.mxu0 0
      %3189 = vmatpush1.bf16.msra.mxu0 %v3170
      %3190 = vmatprep.subr.bf16.mxu0 0
      %3191 = vmatpush2.bf16.msra.mxu0 0
      %3192 = vmatprep.subr.bf16.mxu0 0
      %3193 = vmatpush2.bf16.msra.mxu0 0
      %3194 = vmatprep.subr.bf16.mxu0 0
      %3195 = vmatpush2.bf16.msra.mxu0 0
      %3196 = vmatprep.subr.bf16.mxu0 0
      %3197 = vmatpush2.bf16.msra.mxu0 0
      %3198 = vmatprep.subr.bf16.mxu0 0
      %3199 = vmatpush2.bf16.msra.mxu0 0
      %3200 = vmatprep.subr.bf16.mxu0 0
      %3201 = vmatpush2.bf16.msra.mxu0 0
      %3202 = vmatprep.subr.bf16.mxu0 0
      %3203 = vmatpush2.bf16.msra.mxu0 0
      %3204 = vmatprep.subr.bf16.mxu0 0
      %3205 = vmatpush2.bf16.msra.mxu0 0
      %3206 = vmatprep.mubr.bf16.mxu0 0
      %3207 = vmatmul.mubr.bf16.gmra.mxu0 %v2401
      %v3208 = vpop.f32.mrf.mxu0
      %v3209 = vadd.f32 %v3160, %v3208
      %v3210 = vpop.f32.mrf.mxu0
      %v3211 = vpop.f32.mrf.mxu0
      %v3212 = vpop.f32.mrf.mxu0
      %3213 = vdwg.mxu0
      %s3214 = scalar_lea.vmem %s8, 96
      %v3215 = vld [vmem:[%s3214] sm:$0xf]
      %v3216 = vld [vmem:[%s3214 + $0x4] sm:$0xf]
      %v3217 = vld [vmem:[%s3214 + $0x8] sm:$0xf]
      %v3218 = vld [vmem:[%s3214 + $0xc] sm:$0xf]
      %s3219 = scalar_lea.vmem %s9, 6
      %v3220 = vld [vmem:[%s3219] sm:$0x1]
      %v3222 = vlaneseq
      %v3223 = vshrl.u32 %v3222, 7
      %v3224 = vsub.s32 0, %v3223
      %v3225 = vrot.slane %v3220, %v3224
      %v3231 = vunpack.c.l.b16 %v3215
      %v3232 = vunpack.c.l.b16 %v3216
      %v3233 = vunpack.c.l.b16 %v3217
      %v3234 = vunpack.c.l.b16 %v3218
      %v3235 = vpack.c.b16 %v3232, %v3231
      %v3236 = vpack.c.b16 %v3234, %v3233
      %3239 = vmatprep.subr.bf16.mxu0 0
      %3240 = vmatpush1.bf16.msra.mxu0 0
      %3241 = vmatprep.subr.bf16.mxu0 0
      %3242 = vmatpush1.bf16.msra.mxu0 0
      %3243 = vmatprep.subr.bf16.mxu0 0
      %3244 = vmatpush1.bf16.msra.mxu0 0
      %3245 = vmatprep.subr.bf16.mxu0 0
      %3246 = vmatpush1.bf16.msra.mxu0 0
      %3247 = vmatprep.subr.bf16.mxu0 0
      %3248 = vmatpush1.bf16.msra.mxu0 0
      %3249 = vmatprep.subr.bf16.mxu0 0
      %3250 = vmatpush1.bf16.msra.mxu0 0
      %3251 = vmatprep.subr.bf16.mxu0 0
      %3252 = vmatpush1.bf16.msra.mxu0 %v3236
      %3253 = vmatprep.subr.bf16.mxu0 0
      %3254 = vmatpush1.bf16.msra.mxu0 %v3235
      %3255 = vmatprep.subr.bf16.mxu0 0
      %3256 = vmatpush2.bf16.msra.mxu0 0
      %3257 = vmatprep.subr.bf16.mxu0 0
      %3258 = vmatpush2.bf16.msra.mxu0 0
      %3259 = vmatprep.subr.bf16.mxu0 0
      %3260 = vmatpush2.bf16.msra.mxu0 0
      %3261 = vmatprep.subr.bf16.mxu0 0
      %3262 = vmatpush2.bf16.msra.mxu0 0
      %3263 = vmatprep.subr.bf16.mxu0 0
      %3264 = vmatpush2.bf16.msra.mxu0 0
      %3265 = vmatprep.subr.bf16.mxu0 0
      %3266 = vmatpush2.bf16.msra.mxu0 0
      %3267 = vmatprep.subr.bf16.mxu0 0
      %3268 = vmatpush2.bf16.msra.mxu0 0
      %3269 = vmatprep.subr.bf16.mxu0 0
      %3270 = vmatpush2.bf16.msra.mxu0 0
      %3271 = vmatprep.mubr.bf16.mxu0 0
      %3272 = vmatmul.mubr.bf16.gmra.mxu0 %v2401
      %v3273 = vpop.f32.mrf.mxu0
      %v3274 = vadd.f32 %v3225, %v3273
      %v3275 = vpop.f32.mrf.mxu0
      %v3276 = vpop.f32.mrf.mxu0
      %v3277 = vpop.f32.mrf.mxu0
      %3278 = vdwg.mxu0
      %v3279 = vpack.c.bf16 %v3144, %v3144
      %v3280 = vpack.c.bf16 %v3209, %v3209
      %v3282 = vsel %vm922, %v3279, 0
      %v3285 = vsel %vm922, %v3280, 0
      %3287 = vmatprep.subr.bf16.mxu0 0
      %3288 = vmatpush1.bf16.xpose.msra.mxu0 0
      %3289 = vmatprep.subr.bf16.mxu0 0
      %3290 = vmatpush1.bf16.xpose.msra.mxu0 0
      %3291 = vmatprep.subr.bf16.mxu0 0
      %3292 = vmatpush1.bf16.xpose.msra.mxu0 0
      %3293 = vmatprep.subr.bf16.mxu0 0
      %3294 = vmatpush1.bf16.xpose.msra.mxu0 0
      %3295 = vmatprep.subr.bf16.mxu0 0
      %3296 = vmatpush1.bf16.xpose.msra.mxu0 0
      %3297 = vmatprep.subr.bf16.mxu0 0
      %3298 = vmatpush1.bf16.xpose.msra.mxu0 0
      %3299 = vmatprep.subr.bf16.mxu0 0
      %3300 = vmatpush1.bf16.xpose.msra.mxu0 0
      %3301 = vmatprep.subr.bf16.mxu0 0
      %3302 = vmatpush1.bf16.xpose.msra.mxu0 %v3285
      %3303 = vmatprep.subr.bf16.mxu0 0
      %3304 = vmatpush2.bf16.xpose.msra.mxu0 0
      %3305 = vmatprep.subr.bf16.mxu0 0
      %3306 = vmatpush2.bf16.xpose.msra.mxu0 0
      %3307 = vmatprep.subr.bf16.mxu0 0
      %3308 = vmatpush2.bf16.xpose.msra.mxu0 0
      %3309 = vmatprep.subr.bf16.mxu0 0
      %3310 = vmatpush2.bf16.xpose.msra.mxu0 0
      %3311 = vmatprep.subr.bf16.mxu0 0
      %3312 = vmatpush2.bf16.xpose.msra.mxu0 0
      %3313 = vmatprep.subr.bf16.mxu0 0
      %3314 = vmatpush2.bf16.xpose.msra.mxu0 0
      %3315 = vmatprep.subr.bf16.mxu0 0
      %3316 = vmatpush2.bf16.xpose.msra.mxu0 0
      %3317 = vmatprep.subr.bf16.mxu0 0
      %3318 = vmatpush2.bf16.xpose.msra.mxu0 0
      %3319 = vmatprep.mubr.bf16.mxu0 0
      %3320 = vmatmul.mubr.bf16.gmra.mxu0 %v3282
      %v3321 = vpop.f32.mrf.mxu0
      %v3322 = vadd.f32 0.0, %v3321
      %v3323 = vpop.f32.mrf.mxu0
      %v3324 = vpop.f32.mrf.mxu0
      %v3325 = vpop.f32.mrf.mxu0
      %3326 = vdwg.mxu0
      %v3327 = vmul.f32 %v3322, 0.35355338
      %v3328 = vadd.f32 %v3327, %v974
      %v3329 = vsel %vm922, %v3328, -inf
      %3330 = vmax.xlane.f32.xlu0 %v3329
      %v3331 = vpop.xlane.xlu0 %3330
      %v3332 = vsub.f32 %v3328, %v3331
      %v3333 = vmul.f32 %v3332, 1.442695
      %v3334 = vpow.pop %v3333
      %v3335 = vsel %vm922, %v3334, 0.0
      %3336 = vadd.xlane.f32.xlu0 %v3335
      %v3337 = vpop.xlane.xlu0 %3336
      %v3338 = vrcp.pop %v3337
      %v3339 = vmul.f32 %v3334, %v3338
      %v3340 = vpack.c.bf16 %v3339, %v3339
      %v3341 = vpack.c.bf16 %v3274, %v3274
      %v3343 = vsel %vm922, %v3340, 0
      %v3346 = vsel %vm993, %v3341, 0
      %3348 = vmatprep.subr.bf16.mxu0 0
      %3349 = vmatpush1.bf16.msra.mxu0 0
      %3350 = vmatprep.subr.bf16.mxu0 0
      %3351 = vmatpush1.bf16.msra.mxu0 0
      %3352 = vmatprep.subr.bf16.mxu0 0
      %3353 = vmatpush1.bf16.msra.mxu0 0
      %3354 = vmatprep.subr.bf16.mxu0 0
      %3355 = vmatpush1.bf16.msra.mxu0 0
      %3356 = vmatprep.subr.bf16.mxu0 0
      %3357 = vmatpush1.bf16.msra.mxu0 0
      %3358 = vmatprep.subr.bf16.mxu0 0
      %3359 = vmatpush1.bf16.msra.mxu0 0
      %3360 = vmatprep.subr.bf16.mxu0 0
      %3361 = vmatpush1.bf16.msra.mxu0 0
      %3362 = vmatprep.subr.bf16.mxu0 0
      %3363 = vmatpush1.bf16.msra.mxu0 %v3346
      %3364 = vmatprep.subr.bf16.mxu0 0
      %3365 = vmatpush2.bf16.msra.mxu0 0
      %3366 = vmatprep.subr.bf16.mxu0 0
      %3367 = vmatpush2.bf16.msra.mxu0 0
      %3368 = vmatprep.subr.bf16.mxu0 0
      %3369 = vmatpush2.bf16.msra.mxu0 0
      %3370 = vmatprep.subr.bf16.mxu0 0
      %3371 = vmatpush2.bf16.msra.mxu0 0
      %3372 = vmatprep.subr.bf16.mxu0 0
      %3373 = vmatpush2.bf16.msra.mxu0 0
      %3374 = vmatprep.subr.bf16.mxu0 0
      %3375 = vmatpush2.bf16.msra.mxu0 0
      %3376 = vmatprep.subr.bf16.mxu0 0
      %3377 = vmatpush2.bf16.msra.mxu0 0
      %3378 = vmatprep.subr.bf16.mxu0 0
      %3379 = vmatpush2.bf16.msra.mxu0 0
      %3380 = vmatprep.mubr.bf16.mxu0 0
      %3381 = vmatmul.mubr.bf16.gmra.mxu0 %v3343
      %v3382 = vpop.f32.mrf.mxu0
      %v3383 = vadd.f32 0.0, %v3382
      %v3384 = vpop.f32.mrf.mxu0
      %v3385 = vpop.f32.mrf.mxu0
      %v3386 = vpop.f32.mrf.mxu0
      %3387 = vdwg.mxu0
      %v3388 = vpack.c.bf16 %v3383, %v3383
      %s3389 = scalar_lea.vmem %s10, 24
      %v3390 = vld [vmem:[%s3389] sm:$0xf]
      %v3392 = vsel %vm922, %v3388, 0
      %v3395 = vsel %vm993, %v3390, 0
      %3397 = vmatprep.subr.bf16.mxu0 0
      %3398 = vmatpush1.bf16.msra.mxu0 0
      %3399 = vmatprep.subr.bf16.mxu0 0
      %3400 = vmatpush1.bf16.msra.mxu0 0
      %3401 = vmatprep.subr.bf16.mxu0 0
      %3402 = vmatpush1.bf16.msra.mxu0 0
      %3403 = vmatprep.subr.bf16.mxu0 0
      %3404 = vmatpush1.bf16.msra.mxu0 0
      %3405 = vmatprep.subr.bf16.mxu0 0
      %3406 = vmatpush1.bf16.msra.mxu0 0
      %3407 = vmatprep.subr.bf16.mxu0 0
      %3408 = vmatpush1.bf16.msra.mxu0 0
      %3409 = vmatprep.subr.bf16.mxu0 0
      %3410 = vmatpush1.bf16.msra.mxu0 0
      %3411 = vmatprep.subr.bf16.mxu0 0
      %3412 = vmatpush1.bf16.msra.mxu0 %v3395
      %3413 = vmatprep.subr.bf16.mxu0 0
      %3414 = vmatpush2.bf16.msra.mxu0 0
      %3415 = vmatprep.subr.bf16.mxu0 0
      %3416 = vmatpush2.bf16.msra.mxu0 0
      %3417 = vmatprep.subr.bf16.mxu0 0
      %3418 = vmatpush2.bf16.msra.mxu0 0
      %3419 = vmatprep.subr.bf16.mxu0 0
      %3420 = vmatpush2.bf16.msra.mxu0 0
      %3421 = vmatprep.subr.bf16.mxu0 0
      %3422 = vmatpush2.bf16.msra.mxu0 0
      %3423 = vmatprep.subr.bf16.mxu0 0
      %3424 = vmatpush2.bf16.msra.mxu0 0
      %3425 = vmatprep.subr.bf16.mxu0 0
      %3426 = vmatpush2.bf16.msra.mxu0 0
      %3427 = vmatprep.subr.bf16.mxu0 0
      %3428 = vmatpush2.bf16.msra.mxu0 0
      %3429 = vmatprep.mubr.bf16.mxu0 0
      %3430 = vmatmul.mubr.bf16.gmra.mxu0 %v3392
      %v3431 = vpop.f32.mrf.mxu0
      %v3432 = vadd.f32 0.0, %v3431
      %v3433 = vpop.f32.mrf.mxu0
      %v3434 = vpop.f32.mrf.mxu0
      %v3435 = vpop.f32.mrf.mxu0
      %3436 = vdwg.mxu0
      %v3437 = vadd.f32 %v3079, %v3432
      %s3438 = scalar_lea.vmem %s4, 112
      %v3439 = vld [vmem:[%s3438] sm:$0xf]
      %v3440 = vld [vmem:[%s3438 + $0x4] sm:$0xf]
      %v3441 = vld [vmem:[%s3438 + $0x8] sm:$0xf]
      %v3442 = vld [vmem:[%s3438 + $0xc] sm:$0xf]
      %s3443 = scalar_lea.vmem %s5, 7
      %v3444 = vld [vmem:[%s3443] sm:$0x1]
      %v3446 = vlaneseq
      %v3447 = vshrl.u32 %v3446, 7
      %v3448 = vsub.s32 0, %v3447
      %v3449 = vrot.slane %v3444, %v3448
      %v3455 = vunpack.c.l.b16 %v3439
      %v3456 = vunpack.c.l.b16 %v3440
      %v3457 = vunpack.c.l.b16 %v3441
      %v3458 = vunpack.c.l.b16 %v3442
      %v3459 = vpack.c.b16 %v3456, %v3455
      %v3460 = vpack.c.b16 %v3458, %v3457
      %3463 = vmatprep.subr.bf16.mxu0 0
      %3464 = vmatpush1.bf16.msra.mxu0 0
      %3465 = vmatprep.subr.bf16.mxu0 0
      %3466 = vmatpush1.bf16.msra.mxu0 0
      %3467 = vmatprep.subr.bf16.mxu0 0
      %3468 = vmatpush1.bf16.msra.mxu0 0
      %3469 = vmatprep.subr.bf16.mxu0 0
      %3470 = vmatpush1.bf16.msra.mxu0 0
      %3471 = vmatprep.subr.bf16.mxu0 0
      %3472 = vmatpush1.bf16.msra.mxu0 0
      %3473 = vmatprep.subr.bf16.mxu0 0
      %3474 = vmatpush1.bf16.msra.mxu0 0
      %3475 = vmatprep.subr.bf16.mxu0 0
      %3476 = vmatpush1.bf16.msra.mxu0 %v3460
      %3477 = vmatprep.subr.bf16.mxu0 0
      %3478 = vmatpush1.bf16.msra.mxu0 %v3459
      %3479 = vmatprep.subr.bf16.mxu0 0
      %3480 = vmatpush2.bf16.msra.mxu0 0
      %3481 = vmatprep.subr.bf16.mxu0 0
      %3482 = vmatpush2.bf16.msra.mxu0 0
      %3483 = vmatprep.subr.bf16.mxu0 0
      %3484 = vmatpush2.bf16.msra.mxu0 0
      %3485 = vmatprep.subr.bf16.mxu0 0
      %3486 = vmatpush2.bf16.msra.mxu0 0
      %3487 = vmatprep.subr.bf16.mxu0 0
      %3488 = vmatpush2.bf16.msra.mxu0 0
      %3489 = vmatprep.subr.bf16.mxu0 0
      %3490 = vmatpush2.bf16.msra.mxu0 0
      %3491 = vmatprep.subr.bf16.mxu0 0
      %3492 = vmatpush2.bf16.msra.mxu0 0
      %3493 = vmatprep.subr.bf16.mxu0 0
      %3494 = vmatpush2.bf16.msra.mxu0 0
      %3495 = vmatprep.mubr.bf16.mxu0 0
      %3496 = vmatmul.mubr.bf16.gmra.mxu0 %v2401
      %v3497 = vpop.f32.mrf.mxu0
      %v3498 = vadd.f32 %v3449, %v3497
      %v3499 = vpop.f32.mrf.mxu0
      %v3500 = vpop.f32.mrf.mxu0
      %v3501 = vpop.f32.mrf.mxu0
      %3502 = vdwg.mxu0
      %s3503 = scalar_lea.vmem %s6, 112
      %v3504 = vld [vmem:[%s3503] sm:$0xf]
      %v3505 = vld [vmem:[%s3503 + $0x4] sm:$0xf]
      %v3506 = vld [vmem:[%s3503 + $0x8] sm:$0xf]
      %v3507 = vld [vmem:[%s3503 + $0xc] sm:$0xf]
      %s3508 = scalar_lea.vmem %s7, 7
      %v3509 = vld [vmem:[%s3508] sm:$0x1]
      %v3511 = vlaneseq
      %v3512 = vshrl.u32 %v3511, 7
      %v3513 = vsub.s32 0, %v3512
      %v3514 = vrot.slane %v3509, %v3513
      %v3520 = vunpack.c.l.b16 %v3504
      %v3521 = vunpack.c.l.b16 %v3505
      %v3522 = vunpack.c.l.b16 %v3506
      %v3523 = vunpack.c.l.b16 %v3507
      %v3524 = vpack.c.b16 %v3521, %v3520
      %v3525 = vpack.c.b16 %v3523, %v3522
      %3528 = vmatprep.subr.bf16.mxu0 0
      %3529 = vmatpush1.bf16.msra.mxu0 0
      %3530 = vmatprep.subr.bf16.mxu0 0
      %3531 = vmatpush1.bf16.msra.mxu0 0
      %3532 = vmatprep.subr.bf16.mxu0 0
      %3533 = vmatpush1.bf16.msra.mxu0 0
      %3534 = vmatprep.subr.bf16.mxu0 0
      %3535 = vmatpush1.bf16.msra.mxu0 0
      %3536 = vmatprep.subr.bf16.mxu0 0
      %3537 = vmatpush1.bf16.msra.mxu0 0
      %3538 = vmatprep.subr.bf16.mxu0 0
      %3539 = vmatpush1.bf16.msra.mxu0 0
      %3540 = vmatprep.subr.bf16.mxu0 0
      %3541 = vmatpush1.bf16.msra.mxu0 %v3525
      %3542 = vmatprep.subr.bf16.mxu0 0
      %3543 = vmatpush1.bf16.msra.mxu0 %v3524
      %3544 = vmatprep.subr.bf16.mxu0 0
      %3545 = vmatpush2.bf16.msra.mxu0 0
      %3546 = vmatprep.subr.bf16.mxu0 0
      %3547 = vmatpush2.bf16.msra.mxu0 0
      %3548 = vmatprep.subr.bf16.mxu0 0
      %3549 = vmatpush2.bf16.msra.mxu0 0
      %3550 = vmatprep.subr.bf16.mxu0 0
      %3551 = vmatpush2.bf16.msra.mxu0 0
      %3552 = vmatprep.subr.bf16.mxu0 0
      %3553 = vmatpush2.bf16.msra.mxu0 0
      %3554 = vmatprep.subr.bf16.mxu0 0
      %3555 = vmatpush2.bf16.msra.mxu0 0
      %3556 = vmatprep.subr.bf16.mxu0 0
      %3557 = vmatpush2.bf16.msra.mxu0 0
      %3558 = vmatprep.subr.bf16.mxu0 0
      %3559 = vmatpush2.bf16.msra.mxu0 0
      %3560 = vmatprep.mubr.bf16.mxu0 0
      %3561 = vmatmul.mubr.bf16.gmra.mxu0 %v2401
      %v3562 = vpop.f32.mrf.mxu0
      %v3563 = vadd.f32 %v3514, %v3562
      %v3564 = vpop.f32.mrf.mxu0
      %v3565 = vpop.f32.mrf.mxu0
      %v3566 = vpop.f32.mrf.mxu0
      %3567 = vdwg.mxu0
      %s3568 = scalar_lea.vmem %s8, 112
      %v3569 = vld [vmem:[%s3568] sm:$0xf]
      %v3570 = vld [vmem:[%s3568 + $0x4] sm:$0xf]
      %v3571 = vld [vmem:[%s3568 + $0x8] sm:$0xf]
      %v3572 = vld [vmem:[%s3568 + $0xc] sm:$0xf]
      %s3573 = scalar_lea.vmem %s9, 7
      %v3574 = vld [vmem:[%s3573] sm:$0x1]
      %v3576 = vlaneseq
      %v3577 = vshrl.u32 %v3576, 7
      %v3578 = vsub.s32 0, %v3577
      %v3579 = vrot.slane %v3574, %v3578
      %v3585 = vunpack.c.l.b16 %v3569
      %v3586 = vunpack.c.l.b16 %v3570
      %v3587 = vunpack.c.l.b16 %v3571
      %v3588 = vunpack.c.l.b16 %v3572
      %v3589 = vpack.c.b16 %v3586, %v3585
      %v3590 = vpack.c.b16 %v3588, %v3587
      %3593 = vmatprep.subr.bf16.mxu0 0
      %3594 = vmatpush1.bf16.msra.mxu0 0
      %3595 = vmatprep.subr.bf16.mxu0 0
      %3596 = vmatpush1.bf16.msra.mxu0 0
      %3597 = vmatprep.subr.bf16.mxu0 0
      %3598 = vmatpush1.bf16.msra.mxu0 0
      %3599 = vmatprep.subr.bf16.mxu0 0
      %3600 = vmatpush1.bf16.msra.mxu0 0
      %3601 = vmatprep.subr.bf16.mxu0 0
      %3602 = vmatpush1.bf16.msra.mxu0 0
      %3603 = vmatprep.subr.bf16.mxu0 0
      %3604 = vmatpush1.bf16.msra.mxu0 0
      %3605 = vmatprep.subr.bf16.mxu0 0
      %3606 = vmatpush1.bf16.msra.mxu0 %v3590
      %3607 = vmatprep.subr.bf16.mxu0 0
      %3608 = vmatpush1.bf16.msra.mxu0 %v3589
      %3609 = vmatprep.subr.bf16.mxu0 0
      %3610 = vmatpush2.bf16.msra.mxu0 0
      %3611 = vmatprep.subr.bf16.mxu0 0
      %3612 = vmatpush2.bf16.msra.mxu0 0
      %3613 = vmatprep.subr.bf16.mxu0 0
      %3614 = vmatpush2.bf16.msra.mxu0 0
      %3615 = vmatprep.subr.bf16.mxu0 0
      %3616 = vmatpush2.bf16.msra.mxu0 0
      %3617 = vmatprep.subr.bf16.mxu0 0
      %3618 = vmatpush2.bf16.msra.mxu0 0
      %3619 = vmatprep.subr.bf16.mxu0 0
      %3620 = vmatpush2.bf16.msra.mxu0 0
      %3621 = vmatprep.subr.bf16.mxu0 0
      %3622 = vmatpush2.bf16.msra.mxu0 0
      %3623 = vmatprep.subr.bf16.mxu0 0
      %3624 = vmatpush2.bf16.msra.mxu0 0
      %3625 = vmatprep.mubr.bf16.mxu0 0
      %3626 = vmatmul.mubr.bf16.gmra.mxu0 %v2401
      %v3627 = vpop.f32.mrf.mxu0
      %v3628 = vadd.f32 %v3579, %v3627
      %v3629 = vpop.f32.mrf.mxu0
      %v3630 = vpop.f32.mrf.mxu0
      %v3631 = vpop.f32.mrf.mxu0
      %3632 = vdwg.mxu0
      %v3633 = vpack.c.bf16 %v3498, %v3498
      %v3634 = vpack.c.bf16 %v3563, %v3563
      %v3636 = vsel %vm922, %v3633, 0
      %v3639 = vsel %vm922, %v3634, 0
      %3641 = vmatprep.subr.bf16.mxu0 0
      %3642 = vmatpush1.bf16.xpose.msra.mxu0 0
      %3643 = vmatprep.subr.bf16.mxu0 0
      %3644 = vmatpush1.bf16.xpose.msra.mxu0 0
      %3645 = vmatprep.subr.bf16.mxu0 0
      %3646 = vmatpush1.bf16.xpose.msra.mxu0 0
      %3647 = vmatprep.subr.bf16.mxu0 0
      %3648 = vmatpush1.bf16.xpose.msra.mxu0 0
      %3649 = vmatprep.subr.bf16.mxu0 0
      %3650 = vmatpush1.bf16.xpose.msra.mxu0 0
      %3651 = vmatprep.subr.bf16.mxu0 0
      %3652 = vmatpush1.bf16.xpose.msra.mxu0 0
      %3653 = vmatprep.subr.bf16.mxu0 0
      %3654 = vmatpush1.bf16.xpose.msra.mxu0 0
      %3655 = vmatprep.subr.bf16.mxu0 0
      %3656 = vmatpush1.bf16.xpose.msra.mxu0 %v3639
      %3657 = vmatprep.subr.bf16.mxu0 0
      %3658 = vmatpush2.bf16.xpose.msra.mxu0 0
      %3659 = vmatprep.subr.bf16.mxu0 0
      %3660 = vmatpush2.bf16.xpose.msra.mxu0 0
      %3661 = vmatprep.subr.bf16.mxu0 0
      %3662 = vmatpush2.bf16.xpose.msra.mxu0 0
      %3663 = vmatprep.subr.bf16.mxu0 0
      %3664 = vmatpush2.bf16.xpose.msra.mxu0 0
      %3665 = vmatprep.subr.bf16.mxu0 0
      %3666 = vmatpush2.bf16.xpose.msra.mxu0 0
      %3667 = vmatprep.subr.bf16.mxu0 0
      %3668 = vmatpush2.bf16.xpose.msra.mxu0 0
      %3669 = vmatprep.subr.bf16.mxu0 0
      %3670 = vmatpush2.bf16.xpose.msra.mxu0 0
      %3671 = vmatprep.subr.bf16.mxu0 0
      %3672 = vmatpush2.bf16.xpose.msra.mxu0 0
      %3673 = vmatprep.mubr.bf16.mxu0 0
      %3674 = vmatmul.mubr.bf16.gmra.mxu0 %v3636
      %v3675 = vpop.f32.mrf.mxu0
      %v3676 = vadd.f32 0.0, %v3675
      %v3677 = vpop.f32.mrf.mxu0
      %v3678 = vpop.f32.mrf.mxu0
      %v3679 = vpop.f32.mrf.mxu0
      %3680 = vdwg.mxu0
      %v3681 = vmul.f32 %v3676, 0.35355338
      %v3682 = vadd.f32 %v3681, %v974
      %v3683 = vsel %vm922, %v3682, -inf
      %3684 = vmax.xlane.f32.xlu0 %v3683
      %v3685 = vpop.xlane.xlu0 %3684
      %v3686 = vsub.f32 %v3682, %v3685
      %v3687 = vmul.f32 %v3686, 1.442695
      %v3688 = vpow.pop %v3687
      %v3689 = vsel %vm922, %v3688, 0.0
      %3690 = vadd.xlane.f32.xlu0 %v3689
      %v3691 = vpop.xlane.xlu0 %3690
      %v3692 = vrcp.pop %v3691
      %v3693 = vmul.f32 %v3688, %v3692
      %v3694 = vpack.c.bf16 %v3693, %v3693
      %v3695 = vpack.c.bf16 %v3628, %v3628
      %v3697 = vsel %vm922, %v3694, 0
      %v3700 = vsel %vm993, %v3695, 0
      %3702 = vmatprep.subr.bf16.mxu0 0
      %3703 = vmatpush1.bf16.msra.mxu0 0
      %3704 = vmatprep.subr.bf16.mxu0 0
      %3705 = vmatpush1.bf16.msra.mxu0 0
      %3706 = vmatprep.subr.bf16.mxu0 0
      %3707 = vmatpush1.bf16.msra.mxu0 0
      %3708 = vmatprep.subr.bf16.mxu0 0
      %3709 = vmatpush1.bf16.msra.mxu0 0
      %3710 = vmatprep.subr.bf16.mxu0 0
      %3711 = vmatpush1.bf16.msra.mxu0 0
      %3712 = vmatprep.subr.bf16.mxu0 0
      %3713 = vmatpush1.bf16.msra.mxu0 0
      %3714 = vmatprep.subr.bf16.mxu0 0
      %3715 = vmatpush1.bf16.msra.mxu0 0
      %3716 = vmatprep.subr.bf16.mxu0 0
      %3717 = vmatpush1.bf16.msra.mxu0 %v3700
      %3718 = vmatprep.subr.bf16.mxu0 0
      %3719 = vmatpush2.bf16.msra.mxu0 0
      %3720 = vmatprep.subr.bf16.mxu0 0
      %3721 = vmatpush2.bf16.msra.mxu0 0
      %3722 = vmatprep.subr.bf16.mxu0 0
      %3723 = vmatpush2.bf16.msra.mxu0 0
      %3724 = vmatprep.subr.bf16.mxu0 0
      %3725 = vmatpush2.bf16.msra.mxu0 0
      %3726 = vmatprep.subr.bf16.mxu0 0
      %3727 = vmatpush2.bf16.msra.mxu0 0
      %3728 = vmatprep.subr.bf16.mxu0 0
      %3729 = vmatpush2.bf16.msra.mxu0 0
      %3730 = vmatprep.subr.bf16.mxu0 0
      %3731 = vmatpush2.bf16.msra.mxu0 0
      %3732 = vmatprep.subr.bf16.mxu0 0
      %3733 = vmatpush2.bf16.msra.mxu0 0
      %3734 = vmatprep.mubr.bf16.mxu0 0
      %3735 = vmatmul.mubr.bf16.gmra.mxu0 %v3697
      %v3736 = vpop.f32.mrf.mxu0
      %v3737 = vadd.f32 0.0, %v3736
      %v3738 = vpop.f32.mrf.mxu0
      %v3739 = vpop.f32.mrf.mxu0
      %v3740 = vpop.f32.mrf.mxu0
      %3741 = vdwg.mxu0
      %v3742 = vpack.c.bf16 %v3737, %v3737
      %s3743 = scalar_lea.vmem %s10, 28
      %v3744 = vld [vmem:[%s3743] sm:$0xf]
      %v3746 = vsel %vm922, %v3742, 0
      %v3749 = vsel %vm993, %v3744, 0
      %3751 = vmatprep.subr.bf16.mxu0 0
      %3752 = vmatpush1.bf16.msra.mxu0 0
      %3753 = vmatprep.subr.bf16.mxu0 0
      %3754 = vmatpush1.bf16.msra.mxu0 0
      %3755 = vmatprep.subr.bf16.mxu0 0
      %3756 = vmatpush1.bf16.msra.mxu0 0
      %3757 = vmatprep.subr.bf16.mxu0 0
      %3758 = vmatpush1.bf16.msra.mxu0 0
      %3759 = vmatprep.subr.bf16.mxu0 0
      %3760 = vmatpush1.bf16.msra.mxu0 0
      %3761 = vmatprep.subr.bf16.mxu0 0
      %3762 = vmatpush1.bf16.msra.mxu0 0
      %3763 = vmatprep.subr.bf16.mxu0 0
      %3764 = vmatpush1.bf16.msra.mxu0 0
      %3765 = vmatprep.subr.bf16.mxu0 0
      %3766 = vmatpush1.bf16.msra.mxu0 %v3749
      %3767 = vmatprep.subr.bf16.mxu0 0
      %3768 = vmatpush2.bf16.msra.mxu0 0
      %3769 = vmatprep.subr.bf16.mxu0 0
      %3770 = vmatpush2.bf16.msra.mxu0 0
      %3771 = vmatprep.subr.bf16.mxu0 0
      %3772 = vmatpush2.bf16.msra.mxu0 0
      %3773 = vmatprep.subr.bf16.mxu0 0
      %3774 = vmatpush2.bf16.msra.mxu0 0
      %3775 = vmatprep.subr.bf16.mxu0 0
      %3776 = vmatpush2.bf16.msra.mxu0 0
      %3777 = vmatprep.subr.bf16.mxu0 0
      %3778 = vmatpush2.bf16.msra.mxu0 0
      %3779 = vmatprep.subr.bf16.mxu0 0
      %3780 = vmatpush2.bf16.msra.mxu0 0
      %3781 = vmatprep.subr.bf16.mxu0 0
      %3782 = vmatpush2.bf16.msra.mxu0 0
      %3783 = vmatprep.mubr.bf16.mxu0 0
      %3784 = vmatmul.mubr.bf16.gmra.mxu0 %v3746
      %v3785 = vpop.f32.mrf.mxu0
      %v3786 = vadd.f32 0.0, %v3785
      %v3787 = vpop.f32.mrf.mxu0
      %v3788 = vpop.f32.mrf.mxu0
      %v3789 = vpop.f32.mrf.mxu0
      %3790 = vdwg.mxu0
      %v3791 = vadd.f32 %v3437, %v3786
      %s3792 = scalar_lea.vmem %s11, 1
      %v3793 = vld [vmem:[%s3792] sm:$0x1]
      %v3795 = vlaneseq
      %v3796 = vshrl.u32 %v3795, 7
      %v3797 = vsub.s32 0, %v3796
      %v3798 = vrot.slane %v3793, %v3797
      %v3800 = vadd.f32 %v3791, %v3798
      %v3801 = vadd.f32 %v2373, %v3800
      %s3802 = scalar_lea.vmem %s12, 1
      %v3803 = vld [vmem:[%s3802] sm:$0x1]
      %s3804 = scalar_lea.vmem %s13, 1
      %v3805 = vld [vmem:[%s3804] sm:$0x1]
      %v3806 = vsel %vm697, %v3801, 0.0
      %3807 = vadd.xlane.f32.xlu0 %v3806
      %v3808 = vpop.xlane.xlu0 %3807
      %v3809 = vmul.f32 %v3808, %v701
      %v3810 = vsub.f32 %v3801, %v3809
      %v3811 = vmul.f32 %v3810, %v3810
      %v3812 = vsel %vm697, %v3811, 0.0
      %3813 = vadd.xlane.f32.xlu0 %v3812
      %v3814 = vpop.xlane.xlu0 %3813
      %v3815 = vmul.f32 %v3814, %v701
      %v3816 = vadd.f32 %v3815, 1e-12
      %v3817 = vrsqrt.pop %v3816
      %v3818 = vmul.f32 %v3810, %v3817
      %v3820 = vlaneseq
      %v3821 = vshrl.u32 %v3820, 7
      %v3822 = vsub.s32 0, %v3821
      %v3823 = vrot.slane %v3803, %v3822
      %v3825 = vmul.f32 %v3818, %v3823
      %v3827 = vlaneseq
      %v3828 = vshrl.u32 %v3827, 7
      %v3829 = vsub.s32 0, %v3828
      %v3830 = vrot.slane %v3805, %v3829
      %v3832 = vadd.f32 %v3825, %v3830
      %v3833 = vpack.c.bf16 %v3832, %v3832
      %s3834 = scalar_lea.vmem %s14, 16
      %v3835 = vld [vmem:[%s3834] sm:$0xf]
      %v3836 = vld [vmem:[%s3834 + $0x4] sm:$0xf]
      %v3837 = vld [vmem:[%s3834 + $0x8] sm:$0xf]
      %v3838 = vld [vmem:[%s3834 + $0xc] sm:$0xf]
      %s3839 = scalar_lea.vmem %s15, 1
      %v3840 = vld [vmem:[%s3839] sm:$0x1]
      %v3842 = vlaneseq
      %v3843 = vshrl.u32 %v3842, 7
      %v3844 = vsub.s32 0, %v3843
      %v3845 = vrot.slane %v3840, %v3844
      %v3851 = vunpack.c.l.b16 %v3835
      %v3852 = vunpack.c.l.b16 %v3836
      %v3853 = vunpack.c.l.b16 %v3837
      %v3854 = vunpack.c.l.b16 %v3838
      %v3855 = vpack.c.b16 %v3852, %v3851
      %v3856 = vpack.c.b16 %v3854, %v3853
      %v3860 = vsel %vm697, %v3833, 0
      %3862 = vmatprep.subr.bf16.mxu0 0
      %3863 = vmatpush1.bf16.msra.mxu0 0
      %3864 = vmatprep.subr.bf16.mxu0 0
      %3865 = vmatpush1.bf16.msra.mxu0 0
      %3866 = vmatprep.subr.bf16.mxu0 0
      %3867 = vmatpush1.bf16.msra.mxu0 0
      %3868 = vmatprep.subr.bf16.mxu0 0
      %3869 = vmatpush1.bf16.msra.mxu0 0
      %3870 = vmatprep.subr.bf16.mxu0 0
      %3871 = vmatpush1.bf16.msra.mxu0 0
      %3872 = vmatprep.subr.bf16.mxu0 0
      %3873 = vmatpush1.bf16.msra.mxu0 0
      %3874 = vmatprep.subr.bf16.mxu0 0
      %3875 = vmatpush1.bf16.msra.mxu0 %v3856
      %3876 = vmatprep.subr.bf16.mxu0 0
      %3877 = vmatpush1.bf16.msra.mxu0 %v3855
      %3878 = vmatprep.subr.bf16.mxu0 0
      %3879 = vmatpush2.bf16.msra.mxu0 0
      %3880 = vmatprep.subr.bf16.mxu0 0
      %3881 = vmatpush2.bf16.msra.mxu0 0
      %3882 = vmatprep.subr.bf16.mxu0 0
      %3883 = vmatpush2.bf16.msra.mxu0 0
      %3884 = vmatprep.subr.bf16.mxu0 0
      %3885 = vmatpush2.bf16.msra.mxu0 0
      %3886 = vmatprep.subr.bf16.mxu0 0
      %3887 = vmatpush2.bf16.msra.mxu0 0
      %3888 = vmatprep.subr.bf16.mxu0 0
      %3889 = vmatpush2.bf16.msra.mxu0 0
      %3890 = vmatprep.subr.bf16.mxu0 0
      %3891 = vmatpush2.bf16.msra.mxu0 0
      %3892 = vmatprep.subr.bf16.mxu0 0
      %3893 = vmatpush2.bf16.msra.mxu0 0
      %3894 = vmatprep.mubr.bf16.mxu0 0
      %3895 = vmatmul.mubr.bf16.gmra.mxu0 %v3860
      %v3896 = vpop.f32.mrf.mxu0
      %v3897 = vadd.f32 %v3845, %v3896
      %v3898 = vpop.f32.mrf.mxu0
      %v3899 = vpop.f32.mrf.mxu0
      %v3900 = vpop.f32.mrf.mxu0
      %3901 = vdwg.mxu0
      %v3902 = vmul.f32 %v3897, 0.5
      %v3903 = vmul.f32 %v3897, 0.044715
      %v3904 = vmul.f32 %v3903, %v3897
      %v3905 = vmul.f32 %v3904, %v3897
      %v3906 = vadd.f32 %v3897, %v3905
      %v3907 = vmul.f32 %v3906, 0.7978846
      %v3908 = vtanh.pop %v3907
      %v3909 = vadd.f32 %v3908, 1.0
      %v3910 = vmul.f32 %v3902, %v3909
      %v3911 = vpack.c.bf16 %v3910, %v3910
      %s3912 = scalar_lea.vmem %s16, 32
      %v3913 = vld [vmem:[%s3912] sm:$0xf]
      %v3914 = vld [vmem:[%s3912 + $0x4] sm:$0xf]
      %v3915 = vld [vmem:[%s3912 + $0x8] sm:$0xf]
      %v3916 = vld [vmem:[%s3912 + $0xc] sm:$0xf]
      %v3917 = vld [vmem:[%s3912 + $0x10] sm:$0xf]
      %v3918 = vld [vmem:[%s3912 + $0x14] sm:$0xf]
      %v3919 = vld [vmem:[%s3912 + $0x18] sm:$0xf]
      %v3920 = vld [vmem:[%s3912 + $0x1c] sm:$0xf]
      %s3921 = scalar_lea.vmem %s17, 1
      %v3922 = vld [vmem:[%s3921] sm:$0x1]
      %v3924 = vlaneseq
      %v3925 = vshrl.u32 %v3924, 7
      %v3926 = vsub.s32 0, %v3925
      %v3927 = vrot.slane %v3922, %v3926
      %v3937 = vunpack.c.l.b16 %v3913
      %v3938 = vunpack.c.l.b16 %v3914
      %v3939 = vunpack.c.l.b16 %v3915
      %v3940 = vunpack.c.l.b16 %v3916
      %v3941 = vunpack.c.l.b16 %v3917
      %v3942 = vunpack.c.l.b16 %v3918
      %v3943 = vunpack.c.l.b16 %v3919
      %v3944 = vunpack.c.l.b16 %v3920
      %v3945 = vpack.c.b16 %v3938, %v3937
      %v3946 = vpack.c.b16 %v3940, %v3939
      %v3947 = vpack.c.b16 %v3942, %v3941
      %v3948 = vpack.c.b16 %v3944, %v3943
      %v3954 = vsel %vm2300, %v3911, 0
      %3956 = vmatprep.subr.bf16.mxu0 0
      %3957 = vmatpush1.bf16.msra.mxu0 0
      %3958 = vmatprep.subr.bf16.mxu0 0
      %3959 = vmatpush1.bf16.msra.mxu0 0
      %3960 = vmatprep.subr.bf16.mxu0 0
      %3961 = vmatpush1.bf16.msra.mxu0 0
      %3962 = vmatprep.subr.bf16.mxu0 0
      %3963 = vmatpush1.bf16.msra.mxu0 0
      %3964 = vmatprep.subr.bf16.mxu0 0
      %3965 = vmatpush1.bf16.msra.mxu0 %v3948
      %3966 = vmatprep.subr.bf16.mxu0 0
      %3967 = vmatpush1.bf16.msra.mxu0 %v3947
      %3968 = vmatprep.subr.bf16.mxu0 0
      %3969 = vmatpush1.bf16.msra.mxu0 %v3946
      %3970 = vmatprep.subr.bf16.mxu0 0
      %3971 = vmatpush1.bf16.msra.mxu0 %v3945
      %3972 = vmatprep.subr.bf16.mxu0 0
      %3973 = vmatpush2.bf16.msra.mxu0 0
      %3974 = vmatprep.subr.bf16.mxu0 0
      %3975 = vmatpush2.bf16.msra.mxu0 0
      %3976 = vmatprep.subr.bf16.mxu0 0
      %3977 = vmatpush2.bf16.msra.mxu0 0
      %3978 = vmatprep.subr.bf16.mxu0 0
      %3979 = vmatpush2.bf16.msra.mxu0 0
      %3980 = vmatprep.subr.bf16.mxu0 0
      %3981 = vmatpush2.bf16.msra.mxu0 0
      %3982 = vmatprep.subr.bf16.mxu0 0
      %3983 = vmatpush2.bf16.msra.mxu0 0
      %3984 = vmatprep.subr.bf16.mxu0 0
      %3985 = vmatpush2.bf16.msra.mxu0 0
      %3986 = vmatprep.subr.bf16.mxu0 0
      %3987 = vmatpush2.bf16.msra.mxu0 0
      %3988 = vmatprep.mubr.bf16.mxu0 0
      %3989 = vmatmul.mubr.bf16.gmra.mxu0 %v3954
      %v3990 = vpop.f32.mrf.mxu0
      %v3991 = vadd.f32 %v3927, %v3990
      %v3992 = vpop.f32.mrf.mxu0
      %v3993 = vpop.f32.mrf.mxu0
      %v3994 = vpop.f32.mrf.mxu0
      %3995 = vdwg.mxu0
      %v3996 = vadd.f32 %v3832, %v3991
      %s3997 = scalar_lea.vmem %s18, 1
      %v3998 = vld [vmem:[%s3997] sm:$0x1]
      %s3999 = scalar_lea.vmem %s19, 1
      %v4000 = vld [vmem:[%s3999] sm:$0x1]
      %v4001 = vsel %vm697, %v3996, 0.0
      %4002 = vadd.xlane.f32.xlu0 %v4001
      %v4003 = vpop.xlane.xlu0 %4002
      %v4004 = vmul.f32 %v4003, %v701
      %v4005 = vsub.f32 %v3996, %v4004
      %v4006 = vmul.f32 %v4005, %v4005
      %v4007 = vsel %vm697, %v4006, 0.0
      %4008 = vadd.xlane.f32.xlu0 %v4007
      %v4009 = vpop.xlane.xlu0 %4008
      %v4010 = vmul.f32 %v4009, %v701
      %v4011 = vadd.f32 %v4010, 1e-12
      %v4012 = vrsqrt.pop %v4011
      %v4013 = vmul.f32 %v4005, %v4012
      %v4015 = vlaneseq
      %v4016 = vshrl.u32 %v4015, 7
      %v4017 = vsub.s32 0, %v4016
      %v4018 = vrot.slane %v3998, %v4017
      %v4020 = vmul.f32 %v4013, %v4018
      %v4022 = vlaneseq
      %v4023 = vshrl.u32 %v4022, 7
      %v4024 = vsub.s32 0, %v4023
      %v4025 = vrot.slane %v4000, %v4024
      %v4027 = vadd.f32 %v4020, %v4025
      %v4028 = vld [vmem:[%s20] sm:$0x1]
      %v4029 = vmul.f32 %v4027, %v4028
      %vm4030 = vcmask 253952
      %v4031 = vsel %vm4030, %v4029, 0.0
      %4032 = vadd.xlane.f32.xlu0 %v4031
      %v4033 = vpop.xlane.xlu0 %4032
      %v4034 = vld [vmem:[#allocation2] sm:$0x1]
      %v4035 = vadd.f32 %v4033, %v4034
      %vm4036 = vcmask 0
      %4037 = vst.msk [vmem:[%s692] sm:$0x1] %vm4036, %v4035
      %p4038 = scmp.lt.s32.totalorder %s35, 1
      %s4039 = scalar_select %p4038, %s35, 1
      %s4040 = scalar_lea.vmem %s22, %s4039
      // Predicated region
      $region109: #{tpu_custom_call.1} parent=107 // pred_check
        %p4041 = pneg %p525
      $region110: #{tpu_custom_call.1} parent=107 // pred_check_branch
        %4043 = sbr.rel (%p4041) target = $region112
      $region111: #{tpu_custom_call.1} parent=107 // pred_region
        _
      $region112: #{tpu_custom_call.1} parent=107 // pred_fallthru
        _
    $region108: #{tpu_custom_call.1} parent=5 // pred_fallthru
      _
    %p4044 = scmp.le.s32.totalorder 2, %s30
    // Predicated region
    $region113: #{tpu_custom_call.1} parent=5 // pred_check
      %p4045 = pneg %p4044
    $region114: #{tpu_custom_call.1} parent=5 // pred_check_branch
      %4047 = sbr.rel (%p4045) target = $region116
    $region115: #{tpu_custom_call.1} parent=5 // pred_region
      %s4048 = ssub.s32 %s30, 2
      // Predicated region
      $region117: #{tpu_custom_call.1} parent=115 // pred_check
        %p4049 = pneg %p531
      $region118: #{tpu_custom_call.1} parent=115 // pred_check_branch
        %4051 = sbr.rel (%p4049) target = $region120
      $region119: #{tpu_custom_call.1} parent=115 // pred_region
        %p4052 = scmp.lt.s32.totalorder %s36, 1
        %s4053 = scalar_select %p4052, %s36, 1
        %s4054 = scalar_lea.vmem %s22, %s4053
      $region120: #{tpu_custom_call.1} parent=115 // pred_fallthru
        _
    $region116: #{tpu_custom_call.1} parent=5 // pred_fallthru
      _
  $region6: #{tpu_custom_call.1} parent=0 // loop_footer
    %s34 = sadd.s32 1, %s30
  $region7: #{tpu_custom_call.1} parent=0 // loop_footer_branch
    %29 = sbr.rel target = $region3
  $region8: #{tpu_custom_call.1} parent=0 // loop_exit
    _

</llo_original>
